<compile_context>
chip_gen: v7x
topology: tpu7x:2x2x1
jax: 0.10.0
libtpu: 0.0.40
codegen_flags: <defaults>
</compile_context>

<pallas_src>
import jax
import jax.numpy as jnp
from jax.experimental import pallas as pl
from jax.experimental.pallas import tpu as pltpu


# ---------------------------------------------------------------------------
# Pallas kernel: whole sequence in one invocation.
# ---------------------------------------------------------------------------
def _generator_kernel(x_ref,      # (B, T, D_in)
                      wih0_ref,   # (D_in, 4H)  layer-0 W_ih^T
                      whh0_ref,   # (H, 4H)     layer-0 W_hh^T
                      b0_ref,     # (1, 4H)     layer-0 b_ih + b_hh
                      wih1_ref,   # (H, 4H)     layer-1 W_ih^T
                      whh1_ref,   # (H, 4H)     layer-1 W_hh^T
                      b1_ref,     # (1, 4H)     layer-1 b_ih + b_hh
                      wl_ref,     # (H, O)      linear W^T
                      bl_ref,     # (1, O)      linear bias
                      out_ref,    # (B, T, O)
                      h1_scr):    # VMEM scratch (B, T, H) f32
    B, T, D_in = x_ref.shape
    H = whh0_ref.shape[0]
    O = wl_ref.shape[1]

    # --- layer-0 input projection for ALL timesteps (time-independent) -----
    x_all = x_ref[...].reshape(B * T, D_in)
    xp0 = (jnp.dot(x_all, wih0_ref[...], preferred_element_type=jnp.float32)
           + b0_ref[...])                      # (B*T, 4H)
    xp0 = xp0.reshape(B, T, 4 * H)

    whh0 = whh0_ref[...]
    wih1 = wih1_ref[...]
    whh1 = whh1_ref[...]
    b1 = b1_ref[...]

    def lstm_update(gates, c_prev):
        # PyTorch gate order in the stacked weights: [i, f, g, o]
        i_g = jax.nn.sigmoid(gates[:, 0 * H:1 * H])
        f_g = jax.nn.sigmoid(gates[:, 1 * H:2 * H])
        g_g = jnp.tanh(gates[:, 2 * H:3 * H])
        o_g = jax.nn.sigmoid(gates[:, 3 * H:4 * H])
        c_new = f_g * c_prev + i_g * g_g
        h_new = o_g * jnp.tanh(c_new)
        return h_new, c_new

    zeros = jnp.zeros((B, H), jnp.float32)
    h0, c0 = zeros, zeros
    h1, c1 = zeros, zeros

    # Fully unrolled recurrence over time (static trip count, static slices).
    for t in range(T):
        # layer 0: input contribution precomputed above
        g0 = xp0[:, t, :] + jnp.dot(h0, whh0,
                                    preferred_element_type=jnp.float32)
        h0, c0 = lstm_update(g0, c0)
        # layer 1
        g1 = (jnp.dot(h0, wih1, preferred_element_type=jnp.float32)
              + jnp.dot(h1, whh1, preferred_element_type=jnp.float32)
              + b1)
        h1, c1 = lstm_update(g1, c1)
        h1_scr[:, t, :] = h1

    # --- batched output projection + sigmoid, single store -----------------
    h1_all = h1_scr[...].reshape(B * T, H)
    out = jax.nn.sigmoid(
        jnp.dot(h1_all, wl_ref[...], preferred_element_type=jnp.float32)
        + bl_ref[...])                         # (B*T, O)
    out_ref[...] = out.reshape(B, T, O).astype(out_ref.dtype)


# ---------------------------------------------------------------------------
# Wrapper: parameter plumbing + pallas_call (no grid, whole arrays in VMEM).
# ---------------------------------------------------------------------------
@jax.jit
def generator_forward(x, params):
    """x: (B, T, D_in) float32  ->  (B, T, O) float32 (sigmoid output)."""
    B, T, D_in = x.shape
    H = params['whh0'].shape[0]
    O = params['wl'].shape[1]

    vmem_spec = pl.BlockSpec(memory_space=pltpu.MemorySpace.VMEM)

    return pl.pallas_call(
        _generator_kernel,
        out_shape=jax.ShapeDtypeStruct((B, T, O), jnp.float32),
        in_specs=[vmem_spec] * 9,
        out_specs=vmem_spec,
        scratch_shapes=[pltpu.VMEM((B, T, H), jnp.float32)],
    )(x,
      params['wih0'], params['whh0'], params['b0'],
      params['wih1'], params['whh1'], params['b1'],
      params['wl'], params['bl'])


# ---------------------------------------------------------------------------
# Pure-JAX reference (correctness check).
# ---------------------------------------------------------------------------
def generator_reference(x, params):
    B, T, D_in = x.shape
    H = params['whh0'].shape[0]

    def cell(carry, x_t, wih, whh, b):
        h, c = carry
        gates = x_t @ wih + h @ whh + b
        i = jax.nn.sigmoid(gates[:, 0 * H:1 * H])
        f = jax.nn.sigmoid(gates[:, 1 * H:2 * H])
        g = jnp.tanh(gates[:, 2 * H:3 * H])
        o = jax.nn.sigmoid(gates[:, 3 * H:4 * H])
        c = f * c + i * g
        h = o * jnp.tanh(c)
        return (h, c), h

    def run_layer(xs, wih, whh, b):
        init = (jnp.zeros((B, H), jnp.float32), jnp.zeros((B, H), jnp.float32))
        _, hs = jax.lax.scan(
            lambda carry, x_t: cell(carry, x_t, wih, whh, b), init, xs)
        return hs  # (T, B, H)

    xs = jnp.transpose(x, (1, 0, 2))
    h0s = run_layer(xs, params['wih0'], params['whh0'], params['b0'])
    h1s = run_layer(h0s, params['wih1'], params['whh1'], params['b1'])
    out = jax.nn.sigmoid(h1s @ params['wl'] + params['bl'])
    return jnp.transpose(out, (1, 0, 2))


# ---------------------------------------------------------------------------
# Deterministic parameter init (PyTorch-style U(-1/sqrt(H), 1/sqrt(H))).
# Stored pre-transposed as (in_dim, 4H) with summed biases, matching what the
# kernel expects for real checkpoints too.
# ---------------------------------------------------------------------------
def init_params(key, input_dim, hidden_dim, output_dim):
    H = hidden_dim
    k = 1.0 / jnp.sqrt(jnp.float32(H))
    keys = jax.random.split(key, 10)
    u = lambda kk, shape: jax.random.uniform(kk, shape, jnp.float32, -k, k)

    return {
        'wih0': u(keys[0], (input_dim, 4 * H)),
        'whh0': u(keys[1], (H, 4 * H)),
        'b0':   u(keys[2], (1, 4 * H)) + u(keys[3], (1, 4 * H)),  # b_ih + b_hh
        'wih1': u(keys[4], (H, 4 * H)),
        'whh1': u(keys[5], (H, 4 * H)),
        'b1':   u(keys[6], (1, 4 * H)) + u(keys[7], (1, 4 * H)),
        'wl':   u(keys[8], (H, output_dim)),
        'bl':   u(keys[9], (1, output_dim)),
    }


if __name__ == "__main__":
    # Small shapes consistent with the module's forward: x (batch, seq, in_dim)
    B, T, D_in, H, O = 2, 8, 16, 32, 16

    key = jax.random.PRNGKey(0)
    k_x, k_p = jax.random.split(key)
    x = jax.random.normal(k_x, (B, T, D_in), jnp.float32)
    params = init_params(k_p, D_in, H, O)

    out = generator_forward(x, params)
    out = jax.block_until_ready(out)

    ref = generator_reference(x, params)
    assert out.shape == (B, T, O), out.shape
    assert jnp.allclose(out, ref, atol=1e-5, rtol=1e-5), \
        float(jnp.max(jnp.abs(out - ref)))

    print("KERNEL_OK")
</pallas_src>

<mosaic_0001>
module attributes {stable_mosaic.version = 11 : i64} {
  func.func @_generator_kernel(%arg0: memref<2x8x16xf32, #tpu.memory_space<vmem>>, %arg1: memref<16x128xf32, #tpu.memory_space<vmem>>, %arg2: memref<32x128xf32, #tpu.memory_space<vmem>>, %arg3: memref<1x128xf32, #tpu.memory_space<vmem>>, %arg4: memref<32x128xf32, #tpu.memory_space<vmem>>, %arg5: memref<32x128xf32, #tpu.memory_space<vmem>>, %arg6: memref<1x128xf32, #tpu.memory_space<vmem>>, %arg7: memref<32x16xf32, #tpu.memory_space<vmem>>, %arg8: memref<1x16xf32, #tpu.memory_space<vmem>>, %arg9: memref<2x8x16xf32, #tpu.memory_space<vmem>>, %arg10: memref<2x8x32xf32, #tpu.memory_space<vmem>>) attributes {dimension_semantics = [], scalar_prefetch = 0 : i64, scratch_operands = 1 : i64, tpu.core_type = #tpu.core_type<tc>} {
    %c0 = arith.constant 0 : index
    %c0_0 = arith.constant 0 : index
    %c0_1 = arith.constant 0 : index
    %0 = vector.load %arg0[%c0, %c0_0, %c0_1] : memref<2x8x16xf32, #tpu.memory_space<vmem>>, vector<2x8x16xf32>
    %1 = vector.shape_cast %0 : vector<2x8x16xf32> to vector<16x16xf32>
    %c0_2 = arith.constant 0 : index
    %c0_3 = arith.constant 0 : index
    %2 = vector.load %arg1[%c0_2, %c0_3] : memref<16x128xf32, #tpu.memory_space<vmem>>, vector<16x128xf32>
    %cst = arith.constant dense<0.000000e+00> : vector<16x128xf32>
    %3 = tpu.matmul %1, %2, %cst {dimension_numbers = #tpu.dot_dimension_numbers<[1], [0], [0], [1], [0, 0, 1, 1], [], []>} : vector<16x16xf32>, vector<16x128xf32>, vector<16x128xf32> -> vector<16x128xf32>
    %c0_4 = arith.constant 0 : index
    %c0_5 = arith.constant 0 : index
    %4 = vector.load %arg3[%c0_4, %c0_5] : memref<1x128xf32, #tpu.memory_space<vmem>>, vector<1x128xf32>
    %5 = vector.broadcast %4 : vector<1x128xf32> to vector<16x128xf32>
    %6 = arith.addf %3, %5 : vector<16x128xf32>
    %7 = vector.shape_cast %6 : vector<16x128xf32> to vector<2x8x128xf32>
    %c0_6 = arith.constant 0 : index
    %c0_7 = arith.constant 0 : index
    %8 = vector.load %arg2[%c0_6, %c0_7] : memref<32x128xf32, #tpu.memory_space<vmem>>, vector<32x128xf32>
    %c0_8 = arith.constant 0 : index
    %c0_9 = arith.constant 0 : index
    %9 = vector.load %arg4[%c0_8, %c0_9] : memref<32x128xf32, #tpu.memory_space<vmem>>, vector<32x128xf32>
    %c0_10 = arith.constant 0 : index
    %c0_11 = arith.constant 0 : index
    %10 = vector.load %arg5[%c0_10, %c0_11] : memref<32x128xf32, #tpu.memory_space<vmem>>, vector<32x128xf32>
    %c0_12 = arith.constant 0 : index
    %c0_13 = arith.constant 0 : index
    %11 = vector.load %arg6[%c0_12, %c0_13] : memref<1x128xf32, #tpu.memory_space<vmem>>, vector<1x128xf32>
    %cst_14 = arith.constant 0.000000e+00 : f32
    %12 = vector.broadcast %cst_14 : f32 to vector<2x32xf32>
    %13 = vector.extract_strided_slice %7 {offsets = [0, 0, 0], sizes = [2, 1, 128], strides = [1, 1, 1]} : vector<2x8x128xf32> to vector<2x1x128xf32>
    %14 = vector.shape_cast %13 : vector<2x1x128xf32> to vector<2x128xf32>
    %cst_15 = arith.constant dense<0.000000e+00> : vector<2x128xf32>
    %15 = tpu.matmul %12, %8, %cst_15 {dimension_numbers = #tpu.dot_dimension_numbers<[1], [0], [0], [1], [0, 0, 1, 1], [], []>} : vector<2x32xf32>, vector<32x128xf32>, vector<2x128xf32> -> vector<2x128xf32>
    %16 = arith.addf %14, %15 : vector<2x128xf32>
    %17 = vector.extract_strided_slice %16 {offsets = [0, 0], sizes = [2, 32], strides = [1, 1]} : vector<2x128xf32> to vector<2x32xf32>
    %18 = arith.negf %17 : vector<2x32xf32>
    %19 = math.exp %18 : vector<2x32xf32>
    %cst_16 = arith.constant 1.000000e+00 : f32
    %20 = vector.broadcast %cst_16 : f32 to vector<2x32xf32>
    %21 = arith.addf %20, %19 : vector<2x32xf32>
    %22 = arith.divf %20, %21 : vector<2x32xf32>
    %23 = vector.extract_strided_slice %16 {offsets = [0, 32], sizes = [2, 32], strides = [1, 1]} : vector<2x128xf32> to vector<2x32xf32>
    %24 = arith.negf %23 : vector<2x32xf32>
    %25 = math.exp %24 : vector<2x32xf32>
    %cst_17 = arith.constant 1.000000e+00 : f32
    %26 = vector.broadcast %cst_17 : f32 to vector<2x32xf32>
    %27 = arith.addf %26, %25 : vector<2x32xf32>
    %28 = arith.divf %26, %27 : vector<2x32xf32>
    %29 = vector.extract_strided_slice %16 {offsets = [0, 64], sizes = [2, 32], strides = [1, 1]} : vector<2x128xf32> to vector<2x32xf32>
    %30 = math.tanh %29 : vector<2x32xf32>
    %31 = vector.extract_strided_slice %16 {offsets = [0, 96], sizes = [2, 32], strides = [1, 1]} : vector<2x128xf32> to vector<2x32xf32>
    %32 = arith.negf %31 : vector<2x32xf32>
    %33 = math.exp %32 : vector<2x32xf32>
    %cst_18 = arith.constant 1.000000e+00 : f32
    %34 = vector.broadcast %cst_18 : f32 to vector<2x32xf32>
    %35 = arith.addf %34, %33 : vector<2x32xf32>
    %36 = arith.divf %34, %35 : vector<2x32xf32>
    %37 = arith.mulf %28, %12 : vector<2x32xf32>
    %38 = arith.mulf %22, %30 : vector<2x32xf32>
    %39 = arith.addf %37, %38 : vector<2x32xf32>
    %40 = math.tanh %39 : vector<2x32xf32>
    %41 = arith.mulf %36, %40 : vector<2x32xf32>
    %cst_19 = arith.constant dense<0.000000e+00> : vector<2x128xf32>
    %42 = tpu.matmul %41, %9, %cst_19 {dimension_numbers = #tpu.dot_dimension_numbers<[1], [0], [0], [1], [0, 0, 1, 1], [], []>} : vector<2x32xf32>, vector<32x128xf32>, vector<2x128xf32> -> vector<2x128xf32>
    %cst_20 = arith.constant dense<0.000000e+00> : vector<2x128xf32>
    %43 = tpu.matmul %12, %10, %cst_20 {dimension_numbers = #tpu.dot_dimension_numbers<[1], [0], [0], [1], [0, 0, 1, 1], [], []>} : vector<2x32xf32>, vector<32x128xf32>, vector<2x128xf32> -> vector<2x128xf32>
    %44 = arith.addf %42, %43 : vector<2x128xf32>
    %45 = vector.broadcast %11 : vector<1x128xf32> to vector<2x128xf32>
    %46 = arith.addf %44, %45 : vector<2x128xf32>
    %47 = vector.extract_strided_slice %46 {offsets = [0, 0], sizes = [2, 32], strides = [1, 1]} : vector<2x128xf32> to vector<2x32xf32>
    %48 = arith.negf %47 : vector<2x32xf32>
    %49 = math.exp %48 : vector<2x32xf32>
    %cst_21 = arith.constant 1.000000e+00 : f32
    %50 = vector.broadcast %cst_21 : f32 to vector<2x32xf32>
    %51 = arith.addf %50, %49 : vector<2x32xf32>
    %52 = arith.divf %50, %51 : vector<2x32xf32>
    %53 = vector.extract_strided_slice %46 {offsets = [0, 32], sizes = [2, 32], strides = [1, 1]} : vector<2x128xf32> to vector<2x32xf32>
    %54 = arith.negf %53 : vector<2x32xf32>
    %55 = math.exp %54 : vector<2x32xf32>
    %cst_22 = arith.constant 1.000000e+00 : f32
    %56 = vector.broadcast %cst_22 : f32 to vector<2x32xf32>
    %57 = arith.addf %56, %55 : vector<2x32xf32>
    %58 = arith.divf %56, %57 : vector<2x32xf32>
    %59 = vector.extract_strided_slice %46 {offsets = [0, 64], sizes = [2, 32], strides = [1, 1]} : vector<2x128xf32> to vector<2x32xf32>
    %60 = math.tanh %59 : vector<2x32xf32>
    %61 = vector.extract_strided_slice %46 {offsets = [0, 96], sizes = [2, 32], strides = [1, 1]} : vector<2x128xf32> to vector<2x32xf32>
    %62 = arith.negf %61 : vector<2x32xf32>
    %63 = math.exp %62 : vector<2x32xf32>
    %cst_23 = arith.constant 1.000000e+00 : f32
    %64 = vector.broadcast %cst_23 : f32 to vector<2x32xf32>
    %65 = arith.addf %64, %63 : vector<2x32xf32>
    %66 = arith.divf %64, %65 : vector<2x32xf32>
    %67 = arith.mulf %58, %12 : vector<2x32xf32>
    %68 = arith.mulf %52, %60 : vector<2x32xf32>
    %69 = arith.addf %67, %68 : vector<2x32xf32>
    %70 = math.tanh %69 : vector<2x32xf32>
    %71 = arith.mulf %66, %70 : vector<2x32xf32>
    %c0_24 = arith.constant 0 : index
    %c0_25 = arith.constant 0 : index
    %c0_26 = arith.constant 0 : index
    %72 = vector.load %arg10[%c0_24, %c0_25, %c0_26] : memref<2x8x32xf32, #tpu.memory_space<vmem>>, vector<2x1x32xf32>
    %73 = vector.shape_cast %72 : vector<2x1x32xf32> to vector<2x32xf32>
    %74 = vector.shape_cast %71 : vector<2x32xf32> to vector<2x1x32xf32>
    tpu.vector_store %arg10[%c0_24, %c0_25, %c0_26], %74 {strides = array<i32>} : memref<2x8x32xf32, #tpu.memory_space<vmem>>, vector<2x1x32xf32>,
    %75 = vector.extract_strided_slice %7 {offsets = [0, 1, 0], sizes = [2, 1, 128], strides = [1, 1, 1]} : vector<2x8x128xf32> to vector<2x1x128xf32>
    %76 = vector.shape_cast %75 : vector<2x1x128xf32> to vector<2x128xf32>
    %cst_27 = arith.constant dense<0.000000e+00> : vector<2x128xf32>
    %77 = tpu.matmul %41, %8, %cst_27 {dimension_numbers = #tpu.dot_dimension_numbers<[1], [0], [0], [1], [0, 0, 1, 1], [], []>} : vector<2x32xf32>, vector<32x128xf32>, vector<2x128xf32> -> vector<2x128xf32>
    %78 = arith.addf %76, %77 : vector<2x128xf32>
    %79 = vector.extract_strided_slice %78 {offsets = [0, 0], sizes = [2, 32], strides = [1, 1]} : vector<2x128xf32> to vector<2x32xf32>
    %80 = arith.negf %79 : vector<2x32xf32>
    %81 = math.exp %80 : vector<2x32xf32>
    %cst_28 = arith.constant 1.000000e+00 : f32
    %82 = vector.broadcast %cst_28 : f32 to vector<2x32xf32>
    %83 = arith.addf %82, %81 : vector<2x32xf32>
    %84 = arith.divf %82, %83 : vector<2x32xf32>
    %85 = vector.extract_strided_slice %78 {offsets = [0, 32], sizes = [2, 32], strides = [1, 1]} : vector<2x128xf32> to vector<2x32xf32>
    %86 = arith.negf %85 : vector<2x32xf32>
    %87 = math.exp %86 : vector<2x32xf32>
    %cst_29 = arith.constant 1.000000e+00 : f32
    %88 = vector.broadcast %cst_29 : f32 to vector<2x32xf32>
    %89 = arith.addf %88, %87 : vector<2x32xf32>
    %90 = arith.divf %88, %89 : vector<2x32xf32>
    %91 = vector.extract_strided_slice %78 {offsets = [0, 64], sizes = [2, 32], strides = [1, 1]} : vector<2x128xf32> to vector<2x32xf32>
    %92 = math.tanh %91 : vector<2x32xf32>
    %93 = vector.extract_strided_slice %78 {offsets = [0, 96], sizes = [2, 32], strides = [1, 1]} : vector<2x128xf32> to vector<2x32xf32>
    %94 = arith.negf %93 : vector<2x32xf32>
    %95 = math.exp %94 : vector<2x32xf32>
    %cst_30 = arith.constant 1.000000e+00 : f32
    %96 = vector.broadcast %cst_30 : f32 to vector<2x32xf32>
    %97 = arith.addf %96, %95 : vector<2x32xf32>
    %98 = arith.divf %96, %97 : vector<2x32xf32>
    %99 = arith.mulf %90, %39 : vector<2x32xf32>
    %100 = arith.mulf %84, %92 : vector<2x32xf32>
    %101 = arith.addf %99, %100 : vector<2x32xf32>
    %102 = math.tanh %101 : vector<2x32xf32>
    %103 = arith.mulf %98, %102 : vector<2x32xf32>
    %cst_31 = arith.constant dense<0.000000e+00> : vector<2x128xf32>
    %104 = tpu.matmul %103, %9, %cst_31 {dimension_numbers = #tpu.dot_dimension_numbers<[1], [0], [0], [1], [0, 0, 1, 1], [], []>} : vector<2x32xf32>, vector<32x128xf32>, vector<2x128xf32> -> vector<2x128xf32>
    %cst_32 = arith.constant dense<0.000000e+00> : vector<2x128xf32>
    %105 = tpu.matmul %71, %10, %cst_32 {dimension_numbers = #tpu.dot_dimension_numbers<[1], [0], [0], [1], [0, 0, 1, 1], [], []>} : vector<2x32xf32>, vector<32x128xf32>, vector<2x128xf32> -> vector<2x128xf32>
    %106 = arith.addf %104, %105 : vector<2x128xf32>
    %107 = vector.broadcast %11 : vector<1x128xf32> to vector<2x128xf32>
    %108 = arith.addf %106, %107 : vector<2x128xf32>
    %109 = vector.extract_strided_slice %108 {offsets = [0, 0], sizes = [2, 32], strides = [1, 1]} : vector<2x128xf32> to vector<2x32xf32>
    %110 = arith.negf %109 : vector<2x32xf32>
    %111 = math.exp %110 : vector<2x32xf32>
    %cst_33 = arith.constant 1.000000e+00 : f32
    %112 = vector.broadcast %cst_33 : f32 to vector<2x32xf32>
    %113 = arith.addf %112, %111 : vector<2x32xf32>
    %114 = arith.divf %112, %113 : vector<2x32xf32>
    %115 = vector.extract_strided_slice %108 {offsets = [0, 32], sizes = [2, 32], strides = [1, 1]} : vector<2x128xf32> to vector<2x32xf32>
    %116 = arith.negf %115 : vector<2x32xf32>
    %117 = math.exp %116 : vector<2x32xf32>
    %cst_34 = arith.constant 1.000000e+00 : f32
    %118 = vector.broadcast %cst_34 : f32 to vector<2x32xf32>
    %119 = arith.addf %118, %117 : vector<2x32xf32>
    %120 = arith.divf %118, %119 : vector<2x32xf32>
    %121 = vector.extract_strided_slice %108 {offsets = [0, 64], sizes = [2, 32], strides = [1, 1]} : vector<2x128xf32> to vector<2x32xf32>
    %122 = math.tanh %121 : vector<2x32xf32>
    %123 = vector.extract_strided_slice %108 {offsets = [0, 96], sizes = [2, 32], strides = [1, 1]} : vector<2x128xf32> to vector<2x32xf32>
    %124 = arith.negf %123 : vector<2x32xf32>
    %125 = math.exp %124 : vector<2x32xf32>
    %cst_35 = arith.constant 1.000000e+00 : f32
    %126 = vector.broadcast %cst_35 : f32 to vector<2x32xf32>
    %127 = arith.addf %126, %125 : vector<2x32xf32>
    %128 = arith.divf %126, %127 : vector<2x32xf32>
    %129 = arith.mulf %120, %69 : vector<2x32xf32>
    %130 = arith.mulf %114, %122 : vector<2x32xf32>
    %131 = arith.addf %129, %130 : vector<2x32xf32>
    %132 = math.tanh %131 : vector<2x32xf32>
    %133 = arith.mulf %128, %132 : vector<2x32xf32>
    %c0_36 = arith.constant 0 : index
    %c1 = arith.constant 1 : index
    %c0_37 = arith.constant 0 : index
    %134 = vector.load %arg10[%c0_36, %c1, %c0_37] : memref<2x8x32xf32, #tpu.memory_space<vmem>>, vector<2x1x32xf32>
    %135 = vector.shape_cast %134 : vector<2x1x32xf32> to vector<2x32xf32>
    %136 = vector.shape_cast %133 : vector<2x32xf32> to vector<2x1x32xf32>
    tpu.vector_store %arg10[%c0_36, %c1, %c0_37], %136 {strides = array<i32>} : memref<2x8x32xf32, #tpu.memory_space<vmem>>, vector<2x1x32xf32>,
    %137 = vector.extract_strided_slice %7 {offsets = [0, 2, 0], sizes = [2, 1, 128], strides = [1, 1, 1]} : vector<2x8x128xf32> to vector<2x1x128xf32>
    %138 = vector.shape_cast %137 : vector<2x1x128xf32> to vector<2x128xf32>
    %cst_38 = arith.constant dense<0.000000e+00> : vector<2x128xf32>
    %139 = tpu.matmul %103, %8, %cst_38 {dimension_numbers = #tpu.dot_dimension_numbers<[1], [0], [0], [1], [0, 0, 1, 1], [], []>} : vector<2x32xf32>, vector<32x128xf32>, vector<2x128xf32> -> vector<2x128xf32>
    %140 = arith.addf %138, %139 : vector<2x128xf32>
    %141 = vector.extract_strided_slice %140 {offsets = [0, 0], sizes = [2, 32], strides = [1, 1]} : vector<2x128xf32> to vector<2x32xf32>
    %142 = arith.negf %141 : vector<2x32xf32>
    %143 = math.exp %142 : vector<2x32xf32>
    %cst_39 = arith.constant 1.000000e+00 : f32
    %144 = vector.broadcast %cst_39 : f32 to vector<2x32xf32>
    %145 = arith.addf %144, %143 : vector<2x32xf32>
    %146 = arith.divf %144, %145 : vector<2x32xf32>
    %147 = vector.extract_strided_slice %140 {offsets = [0, 32], sizes = [2, 32], strides = [1, 1]} : vector<2x128xf32> to vector<2x32xf32>
    %148 = arith.negf %147 : vector<2x32xf32>
    %149 = math.exp %148 : vector<2x32xf32>
    %cst_40 = arith.constant 1.000000e+00 : f32
    %150 = vector.broadcast %cst_40 : f32 to vector<2x32xf32>
    %151 = arith.addf %150, %149 : vector<2x32xf32>
    %152 = arith.divf %150, %151 : vector<2x32xf32>
    %153 = vector.extract_strided_slice %140 {offsets = [0, 64], sizes = [2, 32], strides = [1, 1]} : vector<2x128xf32> to vector<2x32xf32>
    %154 = math.tanh %153 : vector<2x32xf32>
    %155 = vector.extract_strided_slice %140 {offsets = [0, 96], sizes = [2, 32], strides = [1, 1]} : vector<2x128xf32> to vector<2x32xf32>
    %156 = arith.negf %155 : vector<2x32xf32>
    %157 = math.exp %156 : vector<2x32xf32>
    %cst_41 = arith.constant 1.000000e+00 : f32
    %158 = vector.broadcast %cst_41 : f32 to vector<2x32xf32>
    %159 = arith.addf %158, %157 : vector<2x32xf32>
    %160 = arith.divf %158, %159 : vector<2x32xf32>
    %161 = arith.mulf %152, %101 : vector<2x32xf32>
    %162 = arith.mulf %146, %154 : vector<2x32xf32>
    %163 = arith.addf %161, %162 : vector<2x32xf32>
    %164 = math.tanh %163 : vector<2x32xf32>
    %165 = arith.mulf %160, %164 : vector<2x32xf32>
    %cst_42 = arith.constant dense<0.000000e+00> : vector<2x128xf32>
    %166 = tpu.matmul %165, %9, %cst_42 {dimension_numbers = #tpu.dot_dimension_numbers<[1], [0], [0], [1], [0, 0, 1, 1], [], []>} : vector<2x32xf32>, vector<32x128xf32>, vector<2x128xf32> -> vector<2x128xf32>
    %cst_43 = arith.constant dense<0.000000e+00> : vector<2x128xf32>
    %167 = tpu.matmul %133, %10, %cst_43 {dimension_numbers = #tpu.dot_dimension_numbers<[1], [0], [0], [1], [0, 0, 1, 1], [], []>} : vector<2x32xf32>, vector<32x128xf32>, vector<2x128xf32> -> vector<2x128xf32>
    %168 = arith.addf %166, %167 : vector<2x128xf32>
    %169 = vector.broadcast %11 : vector<1x128xf32> to vector<2x128xf32>
    %170 = arith.addf %168, %169 : vector<2x128xf32>
    %171 = vector.extract_strided_slice %170 {offsets = [0, 0], sizes = [2, 32], strides = [1, 1]} : vector<2x128xf32> to vector<2x32xf32>
    %172 = arith.negf %171 : vector<2x32xf32>
    %173 = math.exp %172 : vector<2x32xf32>
    %cst_44 = arith.constant 1.000000e+00 : f32
    %174 = vector.broadcast %cst_44 : f32 to vector<2x32xf32>
    %175 = arith.addf %174, %173 : vector<2x32xf32>
    %176 = arith.divf %174, %175 : vector<2x32xf32>
    %177 = vector.extract_strided_slice %170 {offsets = [0, 32], sizes = [2, 32], strides = [1, 1]} : vector<2x128xf32> to vector<2x32xf32>
    %178 = arith.negf %177 : vector<2x32xf32>
    %179 = math.exp %178 : vector<2x32xf32>
    %cst_45 = arith.constant 1.000000e+00 : f32
    %180 = vector.broadcast %cst_45 : f32 to vector<2x32xf32>
    %181 = arith.addf %180, %179 : vector<2x32xf32>
    %182 = arith.divf %180, %181 : vector<2x32xf32>
    %183 = vector.extract_strided_slice %170 {offsets = [0, 64], sizes = [2, 32], strides = [1, 1]} : vector<2x128xf32> to vector<2x32xf32>
    %184 = math.tanh %183 : vector<2x32xf32>
    %185 = vector.extract_strided_slice %170 {offsets = [0, 96], sizes = [2, 32], strides = [1, 1]} : vector<2x128xf32> to vector<2x32xf32>
    %186 = arith.negf %185 : vector<2x32xf32>
    %187 = math.exp %186 : vector<2x32xf32>
    %cst_46 = arith.constant 1.000000e+00 : f32
    %188 = vector.broadcast %cst_46 : f32 to vector<2x32xf32>
    %189 = arith.addf %188, %187 : vector<2x32xf32>
    %190 = arith.divf %188, %189 : vector<2x32xf32>
    %191 = arith.mulf %182, %131 : vector<2x32xf32>
    %192 = arith.mulf %176, %184 : vector<2x32xf32>
    %193 = arith.addf %191, %192 : vector<2x32xf32>
    %194 = math.tanh %193 : vector<2x32xf32>
    %195 = arith.mulf %190, %194 : vector<2x32xf32>
    %c0_47 = arith.constant 0 : index
    %c2 = arith.constant 2 : index
    %c0_48 = arith.constant 0 : index
    %196 = vector.load %arg10[%c0_47, %c2, %c0_48] : memref<2x8x32xf32, #tpu.memory_space<vmem>>, vector<2x1x32xf32>
    %197 = vector.shape_cast %196 : vector<2x1x32xf32> to vector<2x32xf32>
    %198 = vector.shape_cast %195 : vector<2x32xf32> to vector<2x1x32xf32>
    tpu.vector_store %arg10[%c0_47, %c2, %c0_48], %198 {strides = array<i32>} : memref<2x8x32xf32, #tpu.memory_space<vmem>>, vector<2x1x32xf32>,
    %199 = vector.extract_strided_slice %7 {offsets = [0, 3, 0], sizes = [2, 1, 128], strides = [1, 1, 1]} : vector<2x8x128xf32> to vector<2x1x128xf32>
    %200 = vector.shape_cast %199 : vector<2x1x128xf32> to vector<2x128xf32>
    %cst_49 = arith.constant dense<0.000000e+00> : vector<2x128xf32>
    %201 = tpu.matmul %165, %8, %cst_49 {dimension_numbers = #tpu.dot_dimension_numbers<[1], [0], [0], [1], [0, 0, 1, 1], [], []>} : vector<2x32xf32>, vector<32x128xf32>, vector<2x128xf32> -> vector<2x128xf32>
    %202 = arith.addf %200, %201 : vector<2x128xf32>
    %203 = vector.extract_strided_slice %202 {offsets = [0, 0], sizes = [2, 32], strides = [1, 1]} : vector<2x128xf32> to vector<2x32xf32>
    %204 = arith.negf %203 : vector<2x32xf32>
    %205 = math.exp %204 : vector<2x32xf32>
    %cst_50 = arith.constant 1.000000e+00 : f32
    %206 = vector.broadcast %cst_50 : f32 to vector<2x32xf32>
    %207 = arith.addf %206, %205 : vector<2x32xf32>
    %208 = arith.divf %206, %207 : vector<2x32xf32>
    %209 = vector.extract_strided_slice %202 {offsets = [0, 32], sizes = [2, 32], strides = [1, 1]} : vector<2x128xf32> to vector<2x32xf32>
    %210 = arith.negf %209 : vector<2x32xf32>
    %211 = math.exp %210 : vector<2x32xf32>
    %cst_51 = arith.constant 1.000000e+00 : f32
    %212 = vector.broadcast %cst_51 : f32 to vector<2x32xf32>
    %213 = arith.addf %212, %211 : vector<2x32xf32>
    %214 = arith.divf %212, %213 : vector<2x32xf32>
    %215 = vector.extract_strided_slice %202 {offsets = [0, 64], sizes = [2, 32], strides = [1, 1]} : vector<2x128xf32> to vector<2x32xf32>
    %216 = math.tanh %215 : vector<2x32xf32>
    %217 = vector.extract_strided_slice %202 {offsets = [0, 96], sizes = [2, 32], strides = [1, 1]} : vector<2x128xf32> to vector<2x32xf32>
    %218 = arith.negf %217 : vector<2x32xf32>
    %219 = math.exp %218 : vector<2x32xf32>
    %cst_52 = arith.constant 1.000000e+00 : f32
    %220 = vector.broadcast %cst_52 : f32 to vector<2x32xf32>
    %221 = arith.addf %220, %219 : vector<2x32xf32>
    %222 = arith.divf %220, %221 : vector<2x32xf32>
    %223 = arith.mulf %214, %163 : vector<2x32xf32>
    %224 = arith.mulf %208, %216 : vector<2x32xf32>
    %225 = arith.addf %223, %224 : vector<2x32xf32>
    %226 = math.tanh %225 : vector<2x32xf32>
    %227 = arith.mulf %222, %226 : vector<2x32xf32>
    %cst_53 = arith.constant dense<0.000000e+00> : vector<2x128xf32>
    %228 = tpu.matmul %227, %9, %cst_53 {dimension_numbers = #tpu.dot_dimension_numbers<[1], [0], [0], [1], [0, 0, 1, 1], [], []>} : vector<2x32xf32>, vector<32x128xf32>, vector<2x128xf32> -> vector<2x128xf32>
    %cst_54 = arith.constant dense<0.000000e+00> : vector<2x128xf32>
    %229 = tpu.matmul %195, %10, %cst_54 {dimension_numbers = #tpu.dot_dimension_numbers<[1], [0], [0], [1], [0, 0, 1, 1], [], []>} : vector<2x32xf32>, vector<32x128xf32>, vector<2x128xf32> -> vector<2x128xf32>
    %230 = arith.addf %228, %229 : vector<2x128xf32>
    %231 = vector.broadcast %11 : vector<1x128xf32> to vector<2x128xf32>
    %232 = arith.addf %230, %231 : vector<2x128xf32>
    %233 = vector.extract_strided_slice %232 {offsets = [0, 0], sizes = [2, 32], strides = [1, 1]} : vector<2x128xf32> to vector<2x32xf32>
    %234 = arith.negf %233 : vector<2x32xf32>
    %235 = math.exp %234 : vector<2x32xf32>
    %cst_55 = arith.constant 1.000000e+00 : f32
    %236 = vector.broadcast %cst_55 : f32 to vector<2x32xf32>
    %237 = arith.addf %236, %235 : vector<2x32xf32>
    %238 = arith.divf %236, %237 : vector<2x32xf32>
    %239 = vector.extract_strided_slice %232 {offsets = [0, 32], sizes = [2, 32], strides = [1, 1]} : vector<2x128xf32> to vector<2x32xf32>
    %240 = arith.negf %239 : vector<2x32xf32>
    %241 = math.exp %240 : vector<2x32xf32>
    %cst_56 = arith.constant 1.000000e+00 : f32
    %242 = vector.broadcast %cst_56 : f32 to vector<2x32xf32>
    %243 = arith.addf %242, %241 : vector<2x32xf32>
    %244 = arith.divf %242, %243 : vector<2x32xf32>
    %245 = vector.extract_strided_slice %232 {offsets = [0, 64], sizes = [2, 32], strides = [1, 1]} : vector<2x128xf32> to vector<2x32xf32>
    %246 = math.tanh %245 : vector<2x32xf32>
    %247 = vector.extract_strided_slice %232 {offsets = [0, 96], sizes = [2, 32], strides = [1, 1]} : vector<2x128xf32> to vector<2x32xf32>
    %248 = arith.negf %247 : vector<2x32xf32>
    %249 = math.exp %248 : vector<2x32xf32>
    %cst_57 = arith.constant 1.000000e+00 : f32
    %250 = vector.broadcast %cst_57 : f32 to vector<2x32xf32>
    %251 = arith.addf %250, %249 : vector<2x32xf32>
    %252 = arith.divf %250, %251 : vector<2x32xf32>
    %253 = arith.mulf %244, %193 : vector<2x32xf32>
    %254 = arith.mulf %238, %246 : vector<2x32xf32>
    %255 = arith.addf %253, %254 : vector<2x32xf32>
    %256 = math.tanh %255 : vector<2x32xf32>
    %257 = arith.mulf %252, %256 : vector<2x32xf32>
    %c0_58 = arith.constant 0 : index
    %c3 = arith.constant 3 : index
    %c0_59 = arith.constant 0 : index
    %258 = vector.load %arg10[%c0_58, %c3, %c0_59] : memref<2x8x32xf32, #tpu.memory_space<vmem>>, vector<2x1x32xf32>
    %259 = vector.shape_cast %258 : vector<2x1x32xf32> to vector<2x32xf32>
    %260 = vector.shape_cast %257 : vector<2x32xf32> to vector<2x1x32xf32>
    tpu.vector_store %arg10[%c0_58, %c3, %c0_59], %260 {strides = array<i32>} : memref<2x8x32xf32, #tpu.memory_space<vmem>>, vector<2x1x32xf32>,
    %261 = vector.extract_strided_slice %7 {offsets = [0, 4, 0], sizes = [2, 1, 128], strides = [1, 1, 1]} : vector<2x8x128xf32> to vector<2x1x128xf32>
    %262 = vector.shape_cast %261 : vector<2x1x128xf32> to vector<2x128xf32>
    %cst_60 = arith.constant dense<0.000000e+00> : vector<2x128xf32>
    %263 = tpu.matmul %227, %8, %cst_60 {dimension_numbers = #tpu.dot_dimension_numbers<[1], [0], [0], [1], [0, 0, 1, 1], [], []>} : vector<2x32xf32>, vector<32x128xf32>, vector<2x128xf32> -> vector<2x128xf32>
    %264 = arith.addf %262, %263 : vector<2x128xf32>
    %265 = vector.extract_strided_slice %264 {offsets = [0, 0], sizes = [2, 32], strides = [1, 1]} : vector<2x128xf32> to vector<2x32xf32>
    %266 = arith.negf %265 : vector<2x32xf32>
    %267 = math.exp %266 : vector<2x32xf32>
    %cst_61 = arith.constant 1.000000e+00 : f32
    %268 = vector.broadcast %cst_61 : f32 to vector<2x32xf32>
    %269 = arith.addf %268, %267 : vector<2x32xf32>
    %270 = arith.divf %268, %269 : vector<2x32xf32>
    %271 = vector.extract_strided_slice %264 {offsets = [0, 32], sizes = [2, 32], strides = [1, 1]} : vector<2x128xf32> to vector<2x32xf32>
    %272 = arith.negf %271 : vector<2x32xf32>
    %273 = math.exp %272 : vector<2x32xf32>
    %cst_62 = arith.constant 1.000000e+00 : f32
    %274 = vector.broadcast %cst_62 : f32 to vector<2x32xf32>
    %275 = arith.addf %274, %273 : vector<2x32xf32>
    %276 = arith.divf %274, %275 : vector<2x32xf32>
    %277 = vector.extract_strided_slice %264 {offsets = [0, 64], sizes = [2, 32], strides = [1, 1]} : vector<2x128xf32> to vector<2x32xf32>
    %278 = math.tanh %277 : vector<2x32xf32>
    %279 = vector.extract_strided_slice %264 {offsets = [0, 96], sizes = [2, 32], strides = [1, 1]} : vector<2x128xf32> to vector<2x32xf32>
    %280 = arith.negf %279 : vector<2x32xf32>
    %281 = math.exp %280 : vector<2x32xf32>
    %cst_63 = arith.constant 1.000000e+00 : f32
    %282 = vector.broadcast %cst_63 : f32 to vector<2x32xf32>
    %283 = arith.addf %282, %281 : vector<2x32xf32>
    %284 = arith.divf %282, %283 : vector<2x32xf32>
    %285 = arith.mulf %276, %225 : vector<2x32xf32>
    %286 = arith.mulf %270, %278 : vector<2x32xf32>
    %287 = arith.addf %285, %286 : vector<2x32xf32>
    %288 = math.tanh %287 : vector<2x32xf32>
    %289 = arith.mulf %284, %288 : vector<2x32xf32>
    %cst_64 = arith.constant dense<0.000000e+00> : vector<2x128xf32>
    %290 = tpu.matmul %289, %9, %cst_64 {dimension_numbers = #tpu.dot_dimension_numbers<[1], [0], [0], [1], [0, 0, 1, 1], [], []>} : vector<2x32xf32>, vector<32x128xf32>, vector<2x128xf32> -> vector<2x128xf32>
    %cst_65 = arith.constant dense<0.000000e+00> : vector<2x128xf32>
    %291 = tpu.matmul %257, %10, %cst_65 {dimension_numbers = #tpu.dot_dimension_numbers<[1], [0], [0], [1], [0, 0, 1, 1], [], []>} : vector<2x32xf32>, vector<32x128xf32>, vector<2x128xf32> -> vector<2x128xf32>
    %292 = arith.addf %290, %291 : vector<2x128xf32>
    %293 = vector.broadcast %11 : vector<1x128xf32> to vector<2x128xf32>
    %294 = arith.addf %292, %293 : vector<2x128xf32>
    %295 = vector.extract_strided_slice %294 {offsets = [0, 0], sizes = [2, 32], strides = [1, 1]} : vector<2x128xf32> to vector<2x32xf32>
    %296 = arith.negf %295 : vector<2x32xf32>
    %297 = math.exp %296 : vector<2x32xf32>
    %cst_66 = arith.constant 1.000000e+00 : f32
    %298 = vector.broadcast %cst_66 : f32 to vector<2x32xf32>
    %299 = arith.addf %298, %297 : vector<2x32xf32>
    %300 = arith.divf %298, %299 : vector<2x32xf32>
    %301 = vector.extract_strided_slice %294 {offsets = [0, 32], sizes = [2, 32], strides = [1, 1]} : vector<2x128xf32> to vector<2x32xf32>
    %302 = arith.negf %301 : vector<2x32xf32>
    %303 = math.exp %302 : vector<2x32xf32>
    %cst_67 = arith.constant 1.000000e+00 : f32
    %304 = vector.broadcast %cst_67 : f32 to vector<2x32xf32>
    %305 = arith.addf %304, %303 : vector<2x32xf32>
    %306 = arith.divf %304, %305 : vector<2x32xf32>
    %307 = vector.extract_strided_slice %294 {offsets = [0, 64], sizes = [2, 32], strides = [1, 1]} : vector<2x128xf32> to vector<2x32xf32>
    %308 = math.tanh %307 : vector<2x32xf32>
    %309 = vector.extract_strided_slice %294 {offsets = [0, 96], sizes = [2, 32], strides = [1, 1]} : vector<2x128xf32> to vector<2x32xf32>
    %310 = arith.negf %309 : vector<2x32xf32>
    %311 = math.exp %310 : vector<2x32xf32>
    %cst_68 = arith.constant 1.000000e+00 : f32
    %312 = vector.broadcast %cst_68 : f32 to vector<2x32xf32>
    %313 = arith.addf %312, %311 : vector<2x32xf32>
    %314 = arith.divf %312, %313 : vector<2x32xf32>
    %315 = arith.mulf %306, %255 : vector<2x32xf32>
    %316 = arith.mulf %300, %308 : vector<2x32xf32>
    %317 = arith.addf %315, %316 : vector<2x32xf32>
    %318 = math.tanh %317 : vector<2x32xf32>
    %319 = arith.mulf %314, %318 : vector<2x32xf32>
    %c0_69 = arith.constant 0 : index
    %c4 = arith.constant 4 : index
    %c0_70 = arith.constant 0 : index
    %320 = vector.load %arg10[%c0_69, %c4, %c0_70] : memref<2x8x32xf32, #tpu.memory_space<vmem>>, vector<2x1x32xf32>
    %321 = vector.shape_cast %320 : vector<2x1x32xf32> to vector<2x32xf32>
    %322 = vector.shape_cast %319 : vector<2x32xf32> to vector<2x1x32xf32>
    tpu.vector_store %arg10[%c0_69, %c4, %c0_70], %322 {strides = array<i32>} : memref<2x8x32xf32, #tpu.memory_space<vmem>>, vector<2x1x32xf32>,
    %323 = vector.extract_strided_slice %7 {offsets = [0, 5, 0], sizes = [2, 1, 128], strides = [1, 1, 1]} : vector<2x8x128xf32> to vector<2x1x128xf32>
    %324 = vector.shape_cast %323 : vector<2x1x128xf32> to vector<2x128xf32>
    %cst_71 = arith.constant dense<0.000000e+00> : vector<2x128xf32>
    %325 = tpu.matmul %289, %8, %cst_71 {dimension_numbers = #tpu.dot_dimension_numbers<[1], [0], [0], [1], [0, 0, 1, 1], [], []>} : vector<2x32xf32>, vector<32x128xf32>, vector<2x128xf32> -> vector<2x128xf32>
    %326 = arith.addf %324, %325 : vector<2x128xf32>
    %327 = vector.extract_strided_slice %326 {offsets = [0, 0], sizes = [2, 32], strides = [1, 1]} : vector<2x128xf32> to vector<2x32xf32>
    %328 = arith.negf %327 : vector<2x32xf32>
    %329 = math.exp %328 : vector<2x32xf32>
    %cst_72 = arith.constant 1.000000e+00 : f32
    %330 = vector.broadcast %cst_72 : f32 to vector<2x32xf32>
    %331 = arith.addf %330, %329 : vector<2x32xf32>
    %332 = arith.divf %330, %331 : vector<2x32xf32>
    %333 = vector.extract_strided_slice %326 {offsets = [0, 32], sizes = [2, 32], strides = [1, 1]} : vector<2x128xf32> to vector<2x32xf32>
    %334 = arith.negf %333 : vector<2x32xf32>
    %335 = math.exp %334 : vector<2x32xf32>
    %cst_73 = arith.constant 1.000000e+00 : f32
    %336 = vector.broadcast %cst_73 : f32 to vector<2x32xf32>
    %337 = arith.addf %336, %335 : vector<2x32xf32>
    %338 = arith.divf %336, %337 : vector<2x32xf32>
    %339 = vector.extract_strided_slice %326 {offsets = [0, 64], sizes = [2, 32], strides = [1, 1]} : vector<2x128xf32> to vector<2x32xf32>
    %340 = math.tanh %339 : vector<2x32xf32>
    %341 = vector.extract_strided_slice %326 {offsets = [0, 96], sizes = [2, 32], strides = [1, 1]} : vector<2x128xf32> to vector<2x32xf32>
    %342 = arith.negf %341 : vector<2x32xf32>
    %343 = math.exp %342 : vector<2x32xf32>
    %cst_74 = arith.constant 1.000000e+00 : f32
    %344 = vector.broadcast %cst_74 : f32 to vector<2x32xf32>
    %345 = arith.addf %344, %343 : vector<2x32xf32>
    %346 = arith.divf %344, %345 : vector<2x32xf32>
    %347 = arith.mulf %338, %287 : vector<2x32xf32>
    %348 = arith.mulf %332, %340 : vector<2x32xf32>
    %349 = arith.addf %347, %348 : vector<2x32xf32>
    %350 = math.tanh %349 : vector<2x32xf32>
    %351 = arith.mulf %346, %350 : vector<2x32xf32>
    %cst_75 = arith.constant dense<0.000000e+00> : vector<2x128xf32>
    %352 = tpu.matmul %351, %9, %cst_75 {dimension_numbers = #tpu.dot_dimension_numbers<[1], [0], [0], [1], [0, 0, 1, 1], [], []>} : vector<2x32xf32>, vector<32x128xf32>, vector<2x128xf32> -> vector<2x128xf32>
    %cst_76 = arith.constant dense<0.000000e+00> : vector<2x128xf32>
    %353 = tpu.matmul %319, %10, %cst_76 {dimension_numbers = #tpu.dot_dimension_numbers<[1], [0], [0], [1], [0, 0, 1, 1], [], []>} : vector<2x32xf32>, vector<32x128xf32>, vector<2x128xf32> -> vector<2x128xf32>
    %354 = arith.addf %352, %353 : vector<2x128xf32>
    %355 = vector.broadcast %11 : vector<1x128xf32> to vector<2x128xf32>
    %356 = arith.addf %354, %355 : vector<2x128xf32>
    %357 = vector.extract_strided_slice %356 {offsets = [0, 0], sizes = [2, 32], strides = [1, 1]} : vector<2x128xf32> to vector<2x32xf32>
    %358 = arith.negf %357 : vector<2x32xf32>
    %359 = math.exp %358 : vector<2x32xf32>
    %cst_77 = arith.constant 1.000000e+00 : f32
    %360 = vector.broadcast %cst_77 : f32 to vector<2x32xf32>
    %361 = arith.addf %360, %359 : vector<2x32xf32>
    %362 = arith.divf %360, %361 : vector<2x32xf32>
    %363 = vector.extract_strided_slice %356 {offsets = [0, 32], sizes = [2, 32], strides = [1, 1]} : vector<2x128xf32> to vector<2x32xf32>
    %364 = arith.negf %363 : vector<2x32xf32>
    %365 = math.exp %364 : vector<2x32xf32>
    %cst_78 = arith.constant 1.000000e+00 : f32
    %366 = vector.broadcast %cst_78 : f32 to vector<2x32xf32>
    %367 = arith.addf %366, %365 : vector<2x32xf32>
    %368 = arith.divf %366, %367 : vector<2x32xf32>
    %369 = vector.extract_strided_slice %356 {offsets = [0, 64], sizes = [2, 32], strides = [1, 1]} : vector<2x128xf32> to vector<2x32xf32>
    %370 = math.tanh %369 : vector<2x32xf32>
    %371 = vector.extract_strided_slice %356 {offsets = [0, 96], sizes = [2, 32], strides = [1, 1]} : vector<2x128xf32> to vector<2x32xf32>
    %372 = arith.negf %371 : vector<2x32xf32>
    %373 = math.exp %372 : vector<2x32xf32>
    %cst_79 = arith.constant 1.000000e+00 : f32
    %374 = vector.broadcast %cst_79 : f32 to vector<2x32xf32>
    %375 = arith.addf %374, %373 : vector<2x32xf32>
    %376 = arith.divf %374, %375 : vector<2x32xf32>
    %377 = arith.mulf %368, %317 : vector<2x32xf32>
    %378 = arith.mulf %362, %370 : vector<2x32xf32>
    %379 = arith.addf %377, %378 : vector<2x32xf32>
    %380 = math.tanh %379 : vector<2x32xf32>
    %381 = arith.mulf %376, %380 : vector<2x32xf32>
    %c0_80 = arith.constant 0 : index
    %c5 = arith.constant 5 : index
    %c0_81 = arith.constant 0 : index
    %382 = vector.load %arg10[%c0_80, %c5, %c0_81] : memref<2x8x32xf32, #tpu.memory_space<vmem>>, vector<2x1x32xf32>
    %383 = vector.shape_cast %382 : vector<2x1x32xf32> to vector<2x32xf32>
    %384 = vector.shape_cast %381 : vector<2x32xf32> to vector<2x1x32xf32>
    tpu.vector_store %arg10[%c0_80, %c5, %c0_81], %384 {strides = array<i32>} : memref<2x8x32xf32, #tpu.memory_space<vmem>>, vector<2x1x32xf32>,
    %385 = vector.extract_strided_slice %7 {offsets = [0, 6, 0], sizes = [2, 1, 128], strides = [1, 1, 1]} : vector<2x8x128xf32> to vector<2x1x128xf32>
    %386 = vector.shape_cast %385 : vector<2x1x128xf32> to vector<2x128xf32>
    %cst_82 = arith.constant dense<0.000000e+00> : vector<2x128xf32>
    %387 = tpu.matmul %351, %8, %cst_82 {dimension_numbers = #tpu.dot_dimension_numbers<[1], [0], [0], [1], [0, 0, 1, 1], [], []>} : vector<2x32xf32>, vector<32x128xf32>, vector<2x128xf32> -> vector<2x128xf32>
    %388 = arith.addf %386, %387 : vector<2x128xf32>
    %389 = vector.extract_strided_slice %388 {offsets = [0, 0], sizes = [2, 32], strides = [1, 1]} : vector<2x128xf32> to vector<2x32xf32>
    %390 = arith.negf %389 : vector<2x32xf32>
    %391 = math.exp %390 : vector<2x32xf32>
    %cst_83 = arith.constant 1.000000e+00 : f32
    %392 = vector.broadcast %cst_83 : f32 to vector<2x32xf32>
    %393 = arith.addf %392, %391 : vector<2x32xf32>
    %394 = arith.divf %392, %393 : vector<2x32xf32>
    %395 = vector.extract_strided_slice %388 {offsets = [0, 32], sizes = [2, 32], strides = [1, 1]} : vector<2x128xf32> to vector<2x32xf32>
    %396 = arith.negf %395 : vector<2x32xf32>
    %397 = math.exp %396 : vector<2x32xf32>
    %cst_84 = arith.constant 1.000000e+00 : f32
    %398 = vector.broadcast %cst_84 : f32 to vector<2x32xf32>
    %399 = arith.addf %398, %397 : vector<2x32xf32>
    %400 = arith.divf %398, %399 : vector<2x32xf32>
    %401 = vector.extract_strided_slice %388 {offsets = [0, 64], sizes = [2, 32], strides = [1, 1]} : vector<2x128xf32> to vector<2x32xf32>
    %402 = math.tanh %401 : vector<2x32xf32>
    %403 = vector.extract_strided_slice %388 {offsets = [0, 96], sizes = [2, 32], strides = [1, 1]} : vector<2x128xf32> to vector<2x32xf32>
    %404 = arith.negf %403 : vector<2x32xf32>
    %405 = math.exp %404 : vector<2x32xf32>
    %cst_85 = arith.constant 1.000000e+00 : f32
    %406 = vector.broadcast %cst_85 : f32 to vector<2x32xf32>
    %407 = arith.addf %406, %405 : vector<2x32xf32>
    %408 = arith.divf %406, %407 : vector<2x32xf32>
    %409 = arith.mulf %400, %349 : vector<2x32xf32>
    %410 = arith.mulf %394, %402 : vector<2x32xf32>
    %411 = arith.addf %409, %410 : vector<2x32xf32>
    %412 = math.tanh %411 : vector<2x32xf32>
    %413 = arith.mulf %408, %412 : vector<2x32xf32>
    %cst_86 = arith.constant dense<0.000000e+00> : vector<2x128xf32>
    %414 = tpu.matmul %413, %9, %cst_86 {dimension_numbers = #tpu.dot_dimension_numbers<[1], [0], [0], [1], [0, 0, 1, 1], [], []>} : vector<2x32xf32>, vector<32x128xf32>, vector<2x128xf32> -> vector<2x128xf32>
    %cst_87 = arith.constant dense<0.000000e+00> : vector<2x128xf32>
    %415 = tpu.matmul %381, %10, %cst_87 {dimension_numbers = #tpu.dot_dimension_numbers<[1], [0], [0], [1], [0, 0, 1, 1], [], []>} : vector<2x32xf32>, vector<32x128xf32>, vector<2x128xf32> -> vector<2x128xf32>
    %416 = arith.addf %414, %415 : vector<2x128xf32>
    %417 = vector.broadcast %11 : vector<1x128xf32> to vector<2x128xf32>
    %418 = arith.addf %416, %417 : vector<2x128xf32>
    %419 = vector.extract_strided_slice %418 {offsets = [0, 0], sizes = [2, 32], strides = [1, 1]} : vector<2x128xf32> to vector<2x32xf32>
    %420 = arith.negf %419 : vector<2x32xf32>
    %421 = math.exp %420 : vector<2x32xf32>
    %cst_88 = arith.constant 1.000000e+00 : f32
    %422 = vector.broadcast %cst_88 : f32 to vector<2x32xf32>
    %423 = arith.addf %422, %421 : vector<2x32xf32>
    %424 = arith.divf %422, %423 : vector<2x32xf32>
    %425 = vector.extract_strided_slice %418 {offsets = [0, 32], sizes = [2, 32], strides = [1, 1]} : vector<2x128xf32> to vector<2x32xf32>
    %426 = arith.negf %425 : vector<2x32xf32>
    %427 = math.exp %426 : vector<2x32xf32>
    %cst_89 = arith.constant 1.000000e+00 : f32
    %428 = vector.broadcast %cst_89 : f32 to vector<2x32xf32>
    %429 = arith.addf %428, %427 : vector<2x32xf32>
    %430 = arith.divf %428, %429 : vector<2x32xf32>
    %431 = vector.extract_strided_slice %418 {offsets = [0, 64], sizes = [2, 32], strides = [1, 1]} : vector<2x128xf32> to vector<2x32xf32>
    %432 = math.tanh %431 : vector<2x32xf32>
    %433 = vector.extract_strided_slice %418 {offsets = [0, 96], sizes = [2, 32], strides = [1, 1]} : vector<2x128xf32> to vector<2x32xf32>
    %434 = arith.negf %433 : vector<2x32xf32>
    %435 = math.exp %434 : vector<2x32xf32>
    %cst_90 = arith.constant 1.000000e+00 : f32
    %436 = vector.broadcast %cst_90 : f32 to vector<2x32xf32>
    %437 = arith.addf %436, %435 : vector<2x32xf32>
    %438 = arith.divf %436, %437 : vector<2x32xf32>
    %439 = arith.mulf %430, %379 : vector<2x32xf32>
    %440 = arith.mulf %424, %432 : vector<2x32xf32>
    %441 = arith.addf %439, %440 : vector<2x32xf32>
    %442 = math.tanh %441 : vector<2x32xf32>
    %443 = arith.mulf %438, %442 : vector<2x32xf32>
    %c0_91 = arith.constant 0 : index
    %c6 = arith.constant 6 : index
    %c0_92 = arith.constant 0 : index
    %444 = vector.load %arg10[%c0_91, %c6, %c0_92] : memref<2x8x32xf32, #tpu.memory_space<vmem>>, vector<2x1x32xf32>
    %445 = vector.shape_cast %444 : vector<2x1x32xf32> to vector<2x32xf32>
    %446 = vector.shape_cast %443 : vector<2x32xf32> to vector<2x1x32xf32>
    tpu.vector_store %arg10[%c0_91, %c6, %c0_92], %446 {strides = array<i32>} : memref<2x8x32xf32, #tpu.memory_space<vmem>>, vector<2x1x32xf32>,
    %447 = vector.extract_strided_slice %7 {offsets = [0, 7, 0], sizes = [2, 1, 128], strides = [1, 1, 1]} : vector<2x8x128xf32> to vector<2x1x128xf32>
    %448 = vector.shape_cast %447 : vector<2x1x128xf32> to vector<2x128xf32>
    %cst_93 = arith.constant dense<0.000000e+00> : vector<2x128xf32>
    %449 = tpu.matmul %413, %8, %cst_93 {dimension_numbers = #tpu.dot_dimension_numbers<[1], [0], [0], [1], [0, 0, 1, 1], [], []>} : vector<2x32xf32>, vector<32x128xf32>, vector<2x128xf32> -> vector<2x128xf32>
    %450 = arith.addf %448, %449 : vector<2x128xf32>
    %451 = vector.extract_strided_slice %450 {offsets = [0, 0], sizes = [2, 32], strides = [1, 1]} : vector<2x128xf32> to vector<2x32xf32>
    %452 = arith.negf %451 : vector<2x32xf32>
    %453 = math.exp %452 : vector<2x32xf32>
    %cst_94 = arith.constant 1.000000e+00 : f32
    %454 = vector.broadcast %cst_94 : f32 to vector<2x32xf32>
    %455 = arith.addf %454, %453 : vector<2x32xf32>
    %456 = arith.divf %454, %455 : vector<2x32xf32>
    %457 = vector.extract_strided_slice %450 {offsets = [0, 32], sizes = [2, 32], strides = [1, 1]} : vector<2x128xf32> to vector<2x32xf32>
    %458 = arith.negf %457 : vector<2x32xf32>
    %459 = math.exp %458 : vector<2x32xf32>
    %cst_95 = arith.constant 1.000000e+00 : f32
    %460 = vector.broadcast %cst_95 : f32 to vector<2x32xf32>
    %461 = arith.addf %460, %459 : vector<2x32xf32>
    %462 = arith.divf %460, %461 : vector<2x32xf32>
    %463 = vector.extract_strided_slice %450 {offsets = [0, 64], sizes = [2, 32], strides = [1, 1]} : vector<2x128xf32> to vector<2x32xf32>
    %464 = math.tanh %463 : vector<2x32xf32>
    %465 = vector.extract_strided_slice %450 {offsets = [0, 96], sizes = [2, 32], strides = [1, 1]} : vector<2x128xf32> to vector<2x32xf32>
    %466 = arith.negf %465 : vector<2x32xf32>
    %467 = math.exp %466 : vector<2x32xf32>
    %cst_96 = arith.constant 1.000000e+00 : f32
    %468 = vector.broadcast %cst_96 : f32 to vector<2x32xf32>
    %469 = arith.addf %468, %467 : vector<2x32xf32>
    %470 = arith.divf %468, %469 : vector<2x32xf32>
    %471 = arith.mulf %462, %411 : vector<2x32xf32>
    %472 = arith.mulf %456, %464 : vector<2x32xf32>
    %473 = arith.addf %471, %472 : vector<2x32xf32>
    %474 = math.tanh %473 : vector<2x32xf32>
    %475 = arith.mulf %470, %474 : vector<2x32xf32>
    %cst_97 = arith.constant dense<0.000000e+00> : vector<2x128xf32>
    %476 = tpu.matmul %475, %9, %cst_97 {dimension_numbers = #tpu.dot_dimension_numbers<[1], [0], [0], [1], [0, 0, 1, 1], [], []>} : vector<2x32xf32>, vector<32x128xf32>, vector<2x128xf32> -> vector<2x128xf32>
    %cst_98 = arith.constant dense<0.000000e+00> : vector<2x128xf32>
    %477 = tpu.matmul %443, %10, %cst_98 {dimension_numbers = #tpu.dot_dimension_numbers<[1], [0], [0], [1], [0, 0, 1, 1], [], []>} : vector<2x32xf32>, vector<32x128xf32>, vector<2x128xf32> -> vector<2x128xf32>
    %478 = arith.addf %476, %477 : vector<2x128xf32>
    %479 = vector.broadcast %11 : vector<1x128xf32> to vector<2x128xf32>
    %480 = arith.addf %478, %479 : vector<2x128xf32>
    %481 = vector.extract_strided_slice %480 {offsets = [0, 0], sizes = [2, 32], strides = [1, 1]} : vector<2x128xf32> to vector<2x32xf32>
    %482 = arith.negf %481 : vector<2x32xf32>
    %483 = math.exp %482 : vector<2x32xf32>
    %cst_99 = arith.constant 1.000000e+00 : f32
    %484 = vector.broadcast %cst_99 : f32 to vector<2x32xf32>
    %485 = arith.addf %484, %483 : vector<2x32xf32>
    %486 = arith.divf %484, %485 : vector<2x32xf32>
    %487 = vector.extract_strided_slice %480 {offsets = [0, 32], sizes = [2, 32], strides = [1, 1]} : vector<2x128xf32> to vector<2x32xf32>
    %488 = arith.negf %487 : vector<2x32xf32>
    %489 = math.exp %488 : vector<2x32xf32>
    %cst_100 = arith.constant 1.000000e+00 : f32
    %490 = vector.broadcast %cst_100 : f32 to vector<2x32xf32>
    %491 = arith.addf %490, %489 : vector<2x32xf32>
    %492 = arith.divf %490, %491 : vector<2x32xf32>
    %493 = vector.extract_strided_slice %480 {offsets = [0, 64], sizes = [2, 32], strides = [1, 1]} : vector<2x128xf32> to vector<2x32xf32>
    %494 = math.tanh %493 : vector<2x32xf32>
    %495 = vector.extract_strided_slice %480 {offsets = [0, 96], sizes = [2, 32], strides = [1, 1]} : vector<2x128xf32> to vector<2x32xf32>
    %496 = arith.negf %495 : vector<2x32xf32>
    %497 = math.exp %496 : vector<2x32xf32>
    %cst_101 = arith.constant 1.000000e+00 : f32
    %498 = vector.broadcast %cst_101 : f32 to vector<2x32xf32>
    %499 = arith.addf %498, %497 : vector<2x32xf32>
    %500 = arith.divf %498, %499 : vector<2x32xf32>
    %501 = arith.mulf %492, %441 : vector<2x32xf32>
    %502 = arith.mulf %486, %494 : vector<2x32xf32>
    %503 = arith.addf %501, %502 : vector<2x32xf32>
    %504 = math.tanh %503 : vector<2x32xf32>
    %505 = arith.mulf %500, %504 : vector<2x32xf32>
    %c0_102 = arith.constant 0 : index
    %c7 = arith.constant 7 : index
    %c0_103 = arith.constant 0 : index
    %506 = vector.load %arg10[%c0_102, %c7, %c0_103] : memref<2x8x32xf32, #tpu.memory_space<vmem>>, vector<2x1x32xf32>
    %507 = vector.shape_cast %506 : vector<2x1x32xf32> to vector<2x32xf32>
    %508 = vector.shape_cast %505 : vector<2x32xf32> to vector<2x1x32xf32>
    tpu.vector_store %arg10[%c0_102, %c7, %c0_103], %508 {strides = array<i32>} : memref<2x8x32xf32, #tpu.memory_space<vmem>>, vector<2x1x32xf32>,
    %c0_104 = arith.constant 0 : index
    %c0_105 = arith.constant 0 : index
    %c0_106 = arith.constant 0 : index
    %509 = vector.load %arg10[%c0_104, %c0_105, %c0_106] : memref<2x8x32xf32, #tpu.memory_space<vmem>>, vector<2x8x32xf32>
    %510 = vector.shape_cast %509 : vector<2x8x32xf32> to vector<16x32xf32>
    %c0_107 = arith.constant 0 : index
    %c0_108 = arith.constant 0 : index
    %511 = vector.load %arg7[%c0_107, %c0_108] : memref<32x16xf32, #tpu.memory_space<vmem>>, vector<32x16xf32>
    %cst_109 = arith.constant dense<0.000000e+00> : vector<16x16xf32>
    %512 = tpu.matmul %510, %511, %cst_109 {dimension_numbers = #tpu.dot_dimension_numbers<[1], [0], [0], [1], [0, 0, 1, 1], [], []>} : vector<16x32xf32>, vector<32x16xf32>, vector<16x16xf32> -> vector<16x16xf32>
    %c0_110 = arith.constant 0 : index
    %c0_111 = arith.constant 0 : index
    %513 = vector.load %arg8[%c0_110, %c0_111] : memref<1x16xf32, #tpu.memory_space<vmem>>, vector<1x16xf32>
    %514 = vector.broadcast %513 : vector<1x16xf32> to vector<16x16xf32>
    %515 = arith.addf %512, %514 : vector<16x16xf32>
    %516 = arith.negf %515 : vector<16x16xf32>
    %517 = math.exp %516 : vector<16x16xf32>
    %cst_112 = arith.constant 1.000000e+00 : f32
    %518 = vector.broadcast %cst_112 : f32 to vector<16x16xf32>
    %519 = arith.addf %518, %517 : vector<16x16xf32>
    %520 = arith.divf %518, %519 : vector<16x16xf32>
    %521 = vector.shape_cast %520 : vector<16x16xf32> to vector<2x8x16xf32>
    %c0_113 = arith.constant 0 : index
    %c0_114 = arith.constant 0 : index
    %c0_115 = arith.constant 0 : index
    %522 = vector.load %arg9[%c0_113, %c0_114, %c0_115] : memref<2x8x16xf32, #tpu.memory_space<vmem>>, vector<2x8x16xf32>
    tpu.vector_store %arg9[%c0_113, %c0_114, %c0_115], %521 {strides = array<i32>} : memref<2x8x16xf32, #tpu.memory_space<vmem>>, vector<2x8x16xf32>,
    return
  }
}

</mosaic_0001>

<llo_original>
// kernel: generator_forward.1
$region0: #{generator_forward.1}
  #allocation0 [shape = 'u32[]', space=smem, size = 0x4, offset = 0x4, fixed_abs, tag = 'smem constant byte address 0x4 - core index']
  #allocation1 [shape = 'u32[144,128]{1,0:T(1,128)}', space=vmem, size = 0x12000, scoped, tag = 'internal scratch']
  #allocation2 [shape = 'f32[2,8,32]{2,1,0:T(8,128)}', space=vmem, size = 0x2000, scoped, tag = 'scratch operand']
  %s0 = inlined_call_operand.hbm [shape: f32[2,8,16], index: 0, kind: input, shape index: {}]
  %s1 = inlined_call_operand.hbm [shape: f32[16,128], index: 1, kind: input, shape index: {}]
  %s2 = inlined_call_operand.vmem [shape: f32[32,128], index: 2, kind: input, shape index: {}]
  %s3 = inlined_call_operand.vmem [shape: f32[1,128], index: 3, kind: input, shape index: {}]
  %s4 = inlined_call_operand.vmem [shape: f32[32,128], index: 4, kind: input, shape index: {}]
  %s5 = inlined_call_operand.hbm [shape: f32[32,128], index: 5, kind: input, shape index: {}]
  %s6 = inlined_call_operand.vmem [shape: f32[1,128], index: 6, kind: input, shape index: {}]
  %s7 = inlined_call_operand.vmem [shape: f32[32,16], index: 7, kind: input, shape index: {}]
  %s8 = inlined_call_operand.hbm [shape: f32[1,16], index: 8, kind: input, shape index: {}]
  %s9 = inlined_call_operand.hbm [shape: f32[2,8,16], index: 9, kind: output, shape index: {}]
  %s10 = sld [smem:[#allocation0]]
  $region62: #{generator_forward.1} parent=0
    _
  %s12 = ssub.s32 1, %s10
  %s13 = scalar_select 0, %s12, %s10
  $region1: #{generator_forward.1} parent=0
    #allocation3 [shape = 'u8[8192]{0}', space=vmem, size = 0x2000, scoped, tag = 'input window, operand 0, single buffered']
    #allocation4 [shape = 's32[1]{0}', space=sflag, size = 0x4, scoped, tag = 'scoped memory for generator_forward.1']
    #allocation5 [shape = 's32[1]{0}', space=sflag, size = 0x4, scoped, tag = 'scoped memory for generator_forward.1']
    #allocation6 [shape = 'u8[8192]{0}', space=vmem, size = 0x2000, scoped, tag = 'input window, operand 1, single buffered']
    #allocation7 [shape = 's32[1]{0}', space=sflag, size = 0x4, scoped, tag = 'scoped memory for generator_forward.1']
    #allocation8 [shape = 'u8[16384]{0}', space=vmem, size = 0x4000, scoped, tag = 'input window, operand 5, single buffered']
    #allocation9 [shape = 'u8[512]{0}', space=vmem, size = 0x400, scoped, tag = 'input window, operand 8, single buffered']
    #allocation10 [shape = 's32[1]{0}', space=sflag, size = 0x4, scoped, tag = 'scoped memory for generator_forward.1']
    #allocation11 [shape = 'u8[8192]{0}', space=vmem, size = 0x2000, scoped, tag = 'output window, operand 0, single buffered']
    %14 = vsyncpa [#allocation4], 0
    %15 = vsyncpa [#allocation7], 0
    %16 = vsyncpa [#allocation10], 0
    %17 = vsyncpa [#allocation5], 0
    // Predicated region
    $region2: #{generator_forward.1} parent=1 // pred_check
      _
    $region3: #{generator_forward.1} parent=1 // pred_check_branch
      %19 = sbr.rel (0) target = $region5
    $region4: #{generator_forward.1} parent=1 // pred_region
      %s21 = ssub.s32 256, 256
      %22 = vsyncadd [#allocation4], %s21
      %s23 = sshll.u32 [#allocation3], 4
      %s24 = int_to_ptr.vmem [resolvable:$true] %s23
      %29 = dma.hbm_to_vmem [thread:$0]  %s0, 256, %s24, [#allocation4], 128, 128, 8
    $region5: #{generator_forward.1} parent=1 // pred_fallthru
      _
    // Predicated region
    $region6: #{generator_forward.1} parent=1 // pred_check
      _
    $region7: #{generator_forward.1} parent=1 // pred_check_branch
      %31 = sbr.rel (0) target = $region9
    $region8: #{generator_forward.1} parent=1 // pred_region
      %s33 = ssub.s32 256, 256
      %34 = vsyncadd [#allocation7], %s33
      %s35 = sshll.u32 [#allocation6], 4
      %s36 = int_to_ptr.vmem [resolvable:$true] %s35
      %41 = dma.hbm_to_vmem [thread:$0]  %s1, 256, %s36, [#allocation7], 128, 128, 8
    $region9: #{generator_forward.1} parent=1 // pred_fallthru
      _
    // Predicated region
    $region10: #{generator_forward.1} parent=1 // pred_check
      _
    $region11: #{generator_forward.1} parent=1 // pred_check_branch
      %43 = sbr.rel (0) target = $region13
    $region12: #{generator_forward.1} parent=1 // pred_region
      _
    $region13: #{generator_forward.1} parent=1 // pred_fallthru
      _
    // Predicated region
    $region14: #{generator_forward.1} parent=1 // pred_check
      _
    $region15: #{generator_forward.1} parent=1 // pred_check_branch
      %45 = sbr.rel (0) target = $region17
    $region16: #{generator_forward.1} parent=1 // pred_region
      _
    $region17: #{generator_forward.1} parent=1 // pred_fallthru
      _
    // Predicated region
    $region18: #{generator_forward.1} parent=1 // pred_check
      _
    $region19: #{generator_forward.1} parent=1 // pred_check_branch
      %47 = sbr.rel (0) target = $region21
    $region20: #{generator_forward.1} parent=1 // pred_region
      _
    $region21: #{generator_forward.1} parent=1 // pred_fallthru
      _
    // Predicated region
    $region22: #{generator_forward.1} parent=1 // pred_check
      _
    $region23: #{generator_forward.1} parent=1 // pred_check_branch
      %49 = sbr.rel (0) target = $region25
    $region24: #{generator_forward.1} parent=1 // pred_region
      %s51 = ssub.s32 512, 512
      %52 = vsyncadd [#allocation7], %s51
      %s53 = sshll.u32 [#allocation8], 4
      %s54 = int_to_ptr.vmem [resolvable:$true] %s53
      %59 = dma.hbm_to_vmem [thread:$0]  %s5, 512, %s54, [#allocation7], 128, 128, 8
    $region25: #{generator_forward.1} parent=1 // pred_fallthru
      _
    // Predicated region
    $region26: #{generator_forward.1} parent=1 // pred_check
      _
    $region27: #{generator_forward.1} parent=1 // pred_check_branch
      %61 = sbr.rel (0) target = $region29
    $region28: #{generator_forward.1} parent=1 // pred_region
      _
    $region29: #{generator_forward.1} parent=1 // pred_fallthru
      _
    // Predicated region
    $region30: #{generator_forward.1} parent=1 // pred_check
      _
    $region31: #{generator_forward.1} parent=1 // pred_check_branch
      %63 = sbr.rel (0) target = $region33
    $region32: #{generator_forward.1} parent=1 // pred_region
      _
    $region33: #{generator_forward.1} parent=1 // pred_fallthru
      _
    // Predicated region
    $region34: #{generator_forward.1} parent=1 // pred_check
      _
    $region35: #{generator_forward.1} parent=1 // pred_check_branch
      %65 = sbr.rel (0) target = $region37
    $region36: #{generator_forward.1} parent=1 // pred_region
      %s67 = ssub.s32 16, 16
      %68 = vsyncadd [#allocation10], %s67
      %s70 = sshll.u32 [#allocation9], 4
      %s71 = int_to_ptr.vmem [resolvable:$true] %s70
      %73 = dma.hbm_to_vmem [thread:$0]  %s8, 16, %s71, [#allocation10]
    $region37: #{generator_forward.1} parent=1 // pred_fallthru
      _
    // Predicated region
    $region38: #{generator_forward.1} parent=1 // pred_check
      _
    $region39: #{generator_forward.1} parent=1 // pred_check_branch
      %75 = sbr.rel (0) target = $region41
    $region40: #{generator_forward.1} parent=1 // pred_region
      %76 = dma.done [#allocation4], 256
    $region41: #{generator_forward.1} parent=1 // pred_fallthru
      _
    // Predicated region
    $region42: #{generator_forward.1} parent=1 // pred_check
      _
    $region43: #{generator_forward.1} parent=1 // pred_check_branch
      %78 = sbr.rel (0) target = $region45
    $region44: #{generator_forward.1} parent=1 // pred_region
      %79 = dma.done [#allocation7], 256
    $region45: #{generator_forward.1} parent=1 // pred_fallthru
      _
    // Predicated region
    $region46: #{generator_forward.1} parent=1 // pred_check
      _
    $region47: #{generator_forward.1} parent=1 // pred_check_branch
      %81 = sbr.rel (0) target = $region49
    $region48: #{generator_forward.1} parent=1 // pred_region
      %82 = dma.done [#allocation7], 512
    $region49: #{generator_forward.1} parent=1 // pred_fallthru
      _
    // Predicated region
    $region50: #{generator_forward.1} parent=1 // pred_check
      _
    $region51: #{generator_forward.1} parent=1 // pred_check_branch
      %84 = sbr.rel (0) target = $region53
    $region52: #{generator_forward.1} parent=1 // pred_region
      %85 = dma.done [#allocation10], 16
    $region53: #{generator_forward.1} parent=1 // pred_fallthru
      _
    %v86 = vld [vmem:[#allocation3] sm:$0xff]
    %v87 = vld [vmem:[#allocation3 + $0x8] sm:$0xff]
    %v88 = vld [vmem:[#allocation6] sm:$0xff]
    %v89 = vld [vmem:[#allocation6 + $0x8] sm:$0xff]
    %v90 = vld [vmem:[%s3] sm:$0x1]
    %v92 = vlaneseq
    %v93 = vshrl.u32 %v92, 7
    %v94 = vsub.s32 0, %v93
    %v95 = vrot.slane %v90, %v94
    %vm97 = vcmask 130048
    %v99 = vsel %vm97, %v86, 0
    %v102 = vsel %vm97, %v87, 0
    %104 = vmatprep.subr.mxu0 0.0
    %105 = vmatpush1.msra.mxu0 %v88
    %106 = vmatprep.subr.mxu0 0.0
    %107 = vmatpush1.msra.mxu0 %v89
    %108 = vmatprep.subr.mxu0 0.0
    %109 = vmatpush1.msra.mxu0 0.0
    %110 = vmatprep.subr.mxu0 0.0
    %111 = vmatpush1.msra.mxu0 0.0
    %112 = vmatprep.subr.mxu0 0.0
    %113 = vmatpush1.msra.mxu0 0.0
    %114 = vmatprep.subr.mxu0 0.0
    %115 = vmatpush1.msra.mxu0 0.0
    %116 = vmatprep.subr.mxu0 0.0
    %117 = vmatpush1.msra.mxu0 0.0
    %118 = vmatprep.subr.mxu0 0.0
    %119 = vmatpush1.msra.mxu0 0.0
    %120 = vmatprep.subr.mxu0 0.0
    %121 = vmatpush1.msra.mxu0 0.0
    %122 = vmatprep.subr.mxu0 0.0
    %123 = vmatpush1.msra.mxu0 0.0
    %124 = vmatprep.subr.mxu0 0.0
    %125 = vmatpush1.msra.mxu0 0.0
    %126 = vmatprep.subr.mxu0 0.0
    %127 = vmatpush1.msra.mxu0 0.0
    %128 = vmatprep.subr.mxu0 0.0
    %129 = vmatpush1.msra.mxu0 0.0
    %130 = vmatprep.subr.mxu0 0.0
    %131 = vmatpush1.msra.mxu0 0.0
    %132 = vmatprep.subr.mxu0 0.0
    %133 = vmatpush1.msra.mxu0 0.0
    %134 = vmatprep.subr.mxu0 0.0
    %135 = vmatpush1.msra.mxu0 0.0
    %136 = vmatprep.subr.mxu0 0.0
    %137 = vmatpush1.msra.mxu0 0.0
    %138 = vmatprep.subr.mxu0 0.0
    %139 = vmatpush1.msra.mxu0 0.0
    %140 = vmatprep.subr.mxu0 0.0
    %141 = vmatpush1.msra.mxu0 0.0
    %142 = vmatprep.subr.mxu0 0.0
    %143 = vmatpush1.msra.mxu0 0.0
    %144 = vmatprep.subr.mxu0 0.0
    %145 = vmatpush1.msra.mxu0 0.0
    %146 = vmatprep.subr.mxu0 0.0
    %147 = vmatpush1.msra.mxu0 0.0
    %148 = vmatprep.subr.mxu0 0.0
    %149 = vmatpush1.msra.mxu0 0.0
    %150 = vmatprep.subr.mxu0 0.0
    %151 = vmatpush1.msra.mxu0 0.0
    %152 = vmatprep.subr.mxu0 0.0
    %153 = vmatpush1.msra.mxu0 0.0
    %154 = vmatprep.subr.mxu0 0.0
    %155 = vmatpush1.msra.mxu0 0.0
    %156 = vmatprep.subr.mxu0 0.0
    %157 = vmatpush1.msra.mxu0 0.0
    %158 = vmatprep.subr.mxu0 0.0
    %159 = vmatpush1.msra.mxu0 0.0
    %160 = vmatprep.subr.mxu0 0.0
    %161 = vmatpush1.msra.mxu0 0.0
    %162 = vmatprep.subr.mxu0 0.0
    %163 = vmatpush1.msra.mxu0 0.0
    %164 = vmatprep.subr.mxu0 0.0
    %165 = vmatpush1.msra.mxu0 0.0
    %166 = vmatprep.subr.mxu0 0.0
    %167 = vmatpush1.msra.mxu0 0.0
    %168 = vmatprep.mubr.f32.mxu0 0.0
    %169 = vmatmul.mubr.f32.gmra.mrb[0].mxu0 %v99
    %v170 = vpop.f32.mrb[0].mxu0
    %v171 = vadd.f32 %v95, %v170
    %v172 = vpop.f32.mrb[0].mxu0
    %173 = vmatprep.mubr.f32.mxu0 0.0
    %174 = vmatmul.mubr.f32.gmra.mrb[0].mxu0 %v102
    %v175 = vpop.f32.mrb[0].mxu0
    %v176 = vadd.f32 %v95, %v175
    %v177 = vpop.f32.mrb[0].mxu0
    %178 = vdwg.mxu0
    %v179 = vld [vmem:[%s2] sm:$0xff]
    %v180 = vld [vmem:[%s2 + $0x8] sm:$0xff]
    %v181 = vld [vmem:[%s2 + $0x10] sm:$0xff]
    %v182 = vld [vmem:[%s2 + $0x18] sm:$0xff]
    %v183 = vld [vmem:[%s4] sm:$0xff]
    %v184 = vld [vmem:[%s4 + $0x8] sm:$0xff]
    %v185 = vld [vmem:[%s4 + $0x10] sm:$0xff]
    %v186 = vld [vmem:[%s4 + $0x18] sm:$0xff]
    %v187 = vld [vmem:[#allocation8] sm:$0xff]
    %v188 = vld [vmem:[#allocation8 + $0x8] sm:$0xff]
    %v189 = vld [vmem:[#allocation8 + $0x10] sm:$0xff]
    %v190 = vld [vmem:[#allocation8 + $0x18] sm:$0xff]
    %v191 = vld [vmem:[%s6] sm:$0x1]
    %vm192 = vcmask 261120
    %v194 = vsel %vm192, 0.0, 0
    %196 = vmatprep.subr.mxu0 0.0
    %197 = vmatpush1.msra.mxu0 %v179
    %198 = vmatprep.subr.mxu0 0.0
    %199 = vmatpush1.msra.mxu0 %v180
    %200 = vmatprep.subr.mxu0 0.0
    %201 = vmatpush1.msra.mxu0 %v181
    %202 = vmatprep.subr.mxu0 0.0
    %203 = vmatpush1.msra.mxu0 %v182
    %204 = vmatprep.subr.mxu0 0.0
    %205 = vmatpush1.msra.mxu0 0.0
    %206 = vmatprep.subr.mxu0 0.0
    %207 = vmatpush1.msra.mxu0 0.0
    %208 = vmatprep.subr.mxu0 0.0
    %209 = vmatpush1.msra.mxu0 0.0
    %210 = vmatprep.subr.mxu0 0.0
    %211 = vmatpush1.msra.mxu0 0.0
    %212 = vmatprep.subr.mxu0 0.0
    %213 = vmatpush1.msra.mxu0 0.0
    %214 = vmatprep.subr.mxu0 0.0
    %215 = vmatpush1.msra.mxu0 0.0
    %216 = vmatprep.subr.mxu0 0.0
    %217 = vmatpush1.msra.mxu0 0.0
    %218 = vmatprep.subr.mxu0 0.0
    %219 = vmatpush1.msra.mxu0 0.0
    %220 = vmatprep.subr.mxu0 0.0
    %221 = vmatpush1.msra.mxu0 0.0
    %222 = vmatprep.subr.mxu0 0.0
    %223 = vmatpush1.msra.mxu0 0.0
    %224 = vmatprep.subr.mxu0 0.0
    %225 = vmatpush1.msra.mxu0 0.0
    %226 = vmatprep.subr.mxu0 0.0
    %227 = vmatpush1.msra.mxu0 0.0
    %228 = vmatprep.subr.mxu0 0.0
    %229 = vmatpush1.msra.mxu0 0.0
    %230 = vmatprep.subr.mxu0 0.0
    %231 = vmatpush1.msra.mxu0 0.0
    %232 = vmatprep.subr.mxu0 0.0
    %233 = vmatpush1.msra.mxu0 0.0
    %234 = vmatprep.subr.mxu0 0.0
    %235 = vmatpush1.msra.mxu0 0.0
    %236 = vmatprep.subr.mxu0 0.0
    %237 = vmatpush1.msra.mxu0 0.0
    %238 = vmatprep.subr.mxu0 0.0
    %239 = vmatpush1.msra.mxu0 0.0
    %240 = vmatprep.subr.mxu0 0.0
    %241 = vmatpush1.msra.mxu0 0.0
    %242 = vmatprep.subr.mxu0 0.0
    %243 = vmatpush1.msra.mxu0 0.0
    %244 = vmatprep.subr.mxu0 0.0
    %245 = vmatpush1.msra.mxu0 0.0
    %246 = vmatprep.subr.mxu0 0.0
    %247 = vmatpush1.msra.mxu0 0.0
    %248 = vmatprep.subr.mxu0 0.0
    %249 = vmatpush1.msra.mxu0 0.0
    %250 = vmatprep.subr.mxu0 0.0
    %251 = vmatpush1.msra.mxu0 0.0
    %252 = vmatprep.subr.mxu0 0.0
    %253 = vmatpush1.msra.mxu0 0.0
    %254 = vmatprep.subr.mxu0 0.0
    %255 = vmatpush1.msra.mxu0 0.0
    %256 = vmatprep.subr.mxu0 0.0
    %257 = vmatpush1.msra.mxu0 0.0
    %258 = vmatprep.subr.mxu0 0.0
    %259 = vmatpush1.msra.mxu0 0.0
    %260 = vmatprep.mubr.f32.mxu0 0.0
    %261 = vmatmul.mubr.f32.gmra.mrb[0].mxu0 %v194
    %v262 = vpop.f32.mrb[0].mxu0
    %v263 = vadd.f32 0.0, %v262
    %v264 = vpop.f32.mrb[0].mxu0
    %265 = vdwg.mxu0
    %v267 = vrot.slane %v263, 1
    %v270 = vadd.f32 %v171, %v263
    %v271 = vadd.f32 %v176, %v267
    %v272 = vxor.u32 %v270, 2147483648
    %v273 = vxor.u32 %v271, 2147483648
    %v274 = vmul.f32 %v272, 1.442695
    %v275 = vpow.pop %v274
    %v276 = vmul.f32 %v273, 1.442695
    %v277 = vpow.pop %v276
    %v278 = vadd.f32 %v275, 1.0
    %v279 = vadd.f32 %v277, 1.0
    %v280 = vrcp.pop %v278
    %v281 = vmul.f32 1.0, %v280
    %v282 = vrcp.pop %v279
    %v283 = vmul.f32 1.0, %v282
    %v284 = vtanh.pop %v270
    %v285 = vtanh.pop %v271
    %v286 = vmul.f32 %v281, 0.0
    %v287 = vmul.f32 %v283, 0.0
    %290 = vrot.lane.b32.xlu0 %v284, 64
    %v291 = vpop.permute.xlu0 %290
    %292 = vrot.lane.b32.xlu0 %v285, 64
    %v293 = vpop.permute.xlu0 %292
    %v296 = vmul.f32 %v281, %v291
    %v297 = vmul.f32 %v283, %v293
    %300 = vrot.lane.b32.xlu0 %v296, 32
    %v301 = vpop.permute.xlu0 %300
    %302 = vrot.lane.b32.xlu0 %v297, 32
    %v303 = vpop.permute.xlu0 %302
    %v306 = vadd.f32 %v286, %v301
    %v307 = vadd.f32 %v287, %v303
    %v308 = vtanh.pop %v306
    %v309 = vtanh.pop %v307
    %312 = vrot.lane.b32.xlu0 %v308, 64
    %v313 = vpop.permute.xlu0 %312
    %314 = vrot.lane.b32.xlu0 %v309, 64
    %v315 = vpop.permute.xlu0 %314
    %v318 = vmul.f32 %v281, %v313
    %v319 = vmul.f32 %v283, %v315
    %320 = vmatprep.subr.mxu0 0.0
    %321 = vmatpush1.msra.mxu0 %v187
    %322 = vmatprep.subr.mxu0 0.0
    %323 = vmatpush1.msra.mxu0 %v188
    %324 = vmatprep.subr.mxu0 0.0
    %325 = vmatpush1.msra.mxu0 %v189
    %326 = vmatprep.subr.mxu0 0.0
    %327 = vmatpush1.msra.mxu0 %v190
    %328 = vmatprep.subr.mxu0 0.0
    %329 = vmatpush1.msra.mxu0 0.0
    %330 = vmatprep.subr.mxu0 0.0
    %331 = vmatpush1.msra.mxu0 0.0
    %332 = vmatprep.subr.mxu0 0.0
    %333 = vmatpush1.msra.mxu0 0.0
    %334 = vmatprep.subr.mxu0 0.0
    %335 = vmatpush1.msra.mxu0 0.0
    %336 = vmatprep.subr.mxu0 0.0
    %337 = vmatpush1.msra.mxu0 0.0
    %338 = vmatprep.subr.mxu0 0.0
    %339 = vmatpush1.msra.mxu0 0.0
    %340 = vmatprep.subr.mxu0 0.0
    %341 = vmatpush1.msra.mxu0 0.0
    %342 = vmatprep.subr.mxu0 0.0
    %343 = vmatpush1.msra.mxu0 0.0
    %344 = vmatprep.subr.mxu0 0.0
    %345 = vmatpush1.msra.mxu0 0.0
    %346 = vmatprep.subr.mxu0 0.0
    %347 = vmatpush1.msra.mxu0 0.0
    %348 = vmatprep.subr.mxu0 0.0
    %349 = vmatpush1.msra.mxu0 0.0
    %350 = vmatprep.subr.mxu0 0.0
    %351 = vmatpush1.msra.mxu0 0.0
    %352 = vmatprep.subr.mxu0 0.0
    %353 = vmatpush1.msra.mxu0 0.0
    %354 = vmatprep.subr.mxu0 0.0
    %355 = vmatpush1.msra.mxu0 0.0
    %356 = vmatprep.subr.mxu0 0.0
    %357 = vmatpush1.msra.mxu0 0.0
    %358 = vmatprep.subr.mxu0 0.0
    %359 = vmatpush1.msra.mxu0 0.0
    %360 = vmatprep.subr.mxu0 0.0
    %361 = vmatpush1.msra.mxu0 0.0
    %362 = vmatprep.subr.mxu0 0.0
    %363 = vmatpush1.msra.mxu0 0.0
    %364 = vmatprep.subr.mxu0 0.0
    %365 = vmatpush1.msra.mxu0 0.0
    %366 = vmatprep.subr.mxu0 0.0
    %367 = vmatpush1.msra.mxu0 0.0
    %368 = vmatprep.subr.mxu0 0.0
    %369 = vmatpush1.msra.mxu0 0.0
    %370 = vmatprep.subr.mxu0 0.0
    %371 = vmatpush1.msra.mxu0 0.0
    %372 = vmatprep.subr.mxu0 0.0
    %373 = vmatpush1.msra.mxu0 0.0
    %374 = vmatprep.subr.mxu0 0.0
    %375 = vmatpush1.msra.mxu0 0.0
    %376 = vmatprep.subr.mxu0 0.0
    %377 = vmatpush1.msra.mxu0 0.0
    %378 = vmatprep.subr.mxu0 0.0
    %379 = vmatpush1.msra.mxu0 0.0
    %380 = vmatprep.subr.mxu0 0.0
    %381 = vmatpush1.msra.mxu0 0.0
    %382 = vmatprep.subr.mxu0 0.0
    %383 = vmatpush1.msra.mxu0 0.0
    %384 = vmatprep.mubr.f32.mxu0 0.0
    %385 = vmatmul.mubr.f32.gmra.mrb[0].mxu0 %v194
    %v386 = vpop.f32.mrb[0].mxu0
    %v387 = vadd.f32 0.0, %v386
    %v388 = vpop.f32.mrb[0].mxu0
    %389 = vdwg.mxu0
    %v392 = vrot.slane %v319, 7
    %vm393 = vcmask 1041409
    %v394 = vsel %vm393, %v392, %v318
    %395 = vrot.lane.b32.xlu0 %v394, 32
    %v396 = vpop.permute.xlu0 %395
    %v397 = vsel %vm192, %v396, 0
    %399 = vmatprep.subr.mxu0 0.0
    %400 = vmatpush1.msra.mxu0 %v183
    %401 = vmatprep.subr.mxu0 0.0
    %402 = vmatpush1.msra.mxu0 %v184
    %403 = vmatprep.subr.mxu0 0.0
    %404 = vmatpush1.msra.mxu0 %v185
    %405 = vmatprep.subr.mxu0 0.0
    %406 = vmatpush1.msra.mxu0 %v186
    %407 = vmatprep.subr.mxu0 0.0
    %408 = vmatpush1.msra.mxu0 0.0
    %409 = vmatprep.subr.mxu0 0.0
    %410 = vmatpush1.msra.mxu0 0.0
    %411 = vmatprep.subr.mxu0 0.0
    %412 = vmatpush1.msra.mxu0 0.0
    %413 = vmatprep.subr.mxu0 0.0
    %414 = vmatpush1.msra.mxu0 0.0
    %415 = vmatprep.subr.mxu0 0.0
    %416 = vmatpush1.msra.mxu0 0.0
    %417 = vmatprep.subr.mxu0 0.0
    %418 = vmatpush1.msra.mxu0 0.0
    %419 = vmatprep.subr.mxu0 0.0
    %420 = vmatpush1.msra.mxu0 0.0
    %421 = vmatprep.subr.mxu0 0.0
    %422 = vmatpush1.msra.mxu0 0.0
    %423 = vmatprep.subr.mxu0 0.0
    %424 = vmatpush1.msra.mxu0 0.0
    %425 = vmatprep.subr.mxu0 0.0
    %426 = vmatpush1.msra.mxu0 0.0
    %427 = vmatprep.subr.mxu0 0.0
    %428 = vmatpush1.msra.mxu0 0.0
    %429 = vmatprep.subr.mxu0 0.0
    %430 = vmatpush1.msra.mxu0 0.0
    %431 = vmatprep.subr.mxu0 0.0
    %432 = vmatpush1.msra.mxu0 0.0
    %433 = vmatprep.subr.mxu0 0.0
    %434 = vmatpush1.msra.mxu0 0.0
    %435 = vmatprep.subr.mxu0 0.0
    %436 = vmatpush1.msra.mxu0 0.0
    %437 = vmatprep.subr.mxu0 0.0
    %438 = vmatpush1.msra.mxu0 0.0
    %439 = vmatprep.subr.mxu0 0.0
    %440 = vmatpush1.msra.mxu0 0.0
    %441 = vmatprep.subr.mxu0 0.0
    %442 = vmatpush1.msra.mxu0 0.0
    %443 = vmatprep.subr.mxu0 0.0
    %444 = vmatpush1.msra.mxu0 0.0
    %445 = vmatprep.subr.mxu0 0.0
    %446 = vmatpush1.msra.mxu0 0.0
    %447 = vmatprep.subr.mxu0 0.0
    %448 = vmatpush1.msra.mxu0 0.0
    %449 = vmatprep.subr.mxu0 0.0
    %450 = vmatpush1.msra.mxu0 0.0
    %451 = vmatprep.subr.mxu0 0.0
    %452 = vmatpush1.msra.mxu0 0.0
    %453 = vmatprep.subr.mxu0 0.0
    %454 = vmatpush1.msra.mxu0 0.0
    %455 = vmatprep.subr.mxu0 0.0
    %456 = vmatpush1.msra.mxu0 0.0
    %457 = vmatprep.subr.mxu0 0.0
    %458 = vmatpush1.msra.mxu0 0.0
    %459 = vmatprep.subr.mxu0 0.0
    %460 = vmatpush1.msra.mxu0 0.0
    %461 = vmatprep.subr.mxu0 0.0
    %462 = vmatpush1.msra.mxu0 0.0
    %463 = vmatprep.mubr.f32.mxu0 0.0
    %464 = vmatmul.mubr.f32.gmra.mrb[0].mxu0 %v397
    %v465 = vpop.f32.mrb[0].mxu0
    %v466 = vadd.f32 %v387, %v465
    %v467 = vpop.f32.mrb[0].mxu0
    %468 = vdwg.mxu0
    %v470 = vlaneseq
    %v471 = vshrl.u32 %v470, 7
    %v472 = vsub.s32 0, %v471
    %v473 = vrot.slane %v191, %v472
    %v475 = vadd.f32 %v466, %v473
    %v476 = vxor.u32 %v475, 2147483648
    %v477 = vmul.f32 %v476, 1.442695
    %v478 = vpow.pop %v477
    %v479 = vadd.f32 %v478, 1.0
    %v480 = vrcp.pop %v479
    %v481 = vmul.f32 1.0, %v480
    %v482 = vtanh.pop %v475
    %v483 = vmul.f32 %v481, 0.0
    %485 = vrot.lane.b32.xlu0 %v482, 64
    %v486 = vpop.permute.xlu0 %485
    %v488 = vmul.f32 %v481, %v486
    %490 = vrot.lane.b32.xlu0 %v488, 32
    %v491 = vpop.permute.xlu0 %490
    %v493 = vadd.f32 %v483, %v491
    %v494 = vtanh.pop %v493
    %496 = vrot.lane.b32.xlu0 %v494, 64
    %v497 = vpop.permute.xlu0 %496
    %v499 = vmul.f32 %v481, %v497
    %v502 = vunpack.c.l.s4 1966171168
    %v503 = vunpack.c.0.s8 %v502
    %v504 = vlaneseq
    %v505 = vshrl.u32 %v504, 7
    %v506 = vsub.s32 %v503, %v505
    %v507 = vrot.slane %v499, %v506
    %v508 = vcombine.high %v507, %v507
    %v510 = vunpack.c.l.s4 1966171168
    %v511 = vunpack.c.0.s8 %v510
    %v512 = vlaneseq
    %v513 = vshrl.u32 %v512, 7
    %v514 = vsub.s32 %v511, %v513
    %v515 = vrot.slane %v507, %v514
    %v517 = vunpack.c.l.s4 1966171168
    %v518 = vunpack.c.0.s8 %v517
    %v519 = vlaneseq
    %v520 = vshrl.u32 %v519, 7
    %v521 = vsub.s32 %v518, %v520
    %v522 = vrot.slane %v508, %v521
    %v523 = vlaneseq
    %v524 = vshrl.u32 %v523, 7
    %v525 = vsub.s32 0, %v524
    %v526 = vrot.slane %v515, %v525
    %v527 = vlaneseq
    %v528 = vshrl.u32 %v527, 7
    %v529 = vsub.s32 0, %v528
    %v530 = vrot.slane %v522, %v529
    %531 = vrot.lane.b32.xlu0 %v526, 32
    %v532 = vpop.permute.xlu0 %531
    %533 = vrot.lane.b32.xlu0 %v530, 32
    %v534 = vpop.permute.xlu0 %533
    %vm537 = vcmask 253952
    %538 = vst.msk [vmem:[#allocation2] sm:$0x1] %vm537, %v532
    %539 = vst.msk [vmem:[#allocation2 + $0x8] sm:$0x1] %vm537, %v534
    %540 = vmatprep.subr.mxu0 0.0
    %541 = vmatpush1.msra.mxu0 %v179
    %542 = vmatprep.subr.mxu0 0.0
    %543 = vmatpush1.msra.mxu0 %v180
    %544 = vmatprep.subr.mxu0 0.0
    %545 = vmatpush1.msra.mxu0 %v181
    %546 = vmatprep.subr.mxu0 0.0
    %547 = vmatpush1.msra.mxu0 %v182
    %548 = vmatprep.subr.mxu0 0.0
    %549 = vmatpush1.msra.mxu0 0.0
    %550 = vmatprep.subr.mxu0 0.0
    %551 = vmatpush1.msra.mxu0 0.0
    %552 = vmatprep.subr.mxu0 0.0
    %553 = vmatpush1.msra.mxu0 0.0
    %554 = vmatprep.subr.mxu0 0.0
    %555 = vmatpush1.msra.mxu0 0.0
    %556 = vmatprep.subr.mxu0 0.0
    %557 = vmatpush1.msra.mxu0 0.0
    %558 = vmatprep.subr.mxu0 0.0
    %559 = vmatpush1.msra.mxu0 0.0
    %560 = vmatprep.subr.mxu0 0.0
    %561 = vmatpush1.msra.mxu0 0.0
    %562 = vmatprep.subr.mxu0 0.0
    %563 = vmatpush1.msra.mxu0 0.0
    %564 = vmatprep.subr.mxu0 0.0
    %565 = vmatpush1.msra.mxu0 0.0
    %566 = vmatprep.subr.mxu0 0.0
    %567 = vmatpush1.msra.mxu0 0.0
    %568 = vmatprep.subr.mxu0 0.0
    %569 = vmatpush1.msra.mxu0 0.0
    %570 = vmatprep.subr.mxu0 0.0
    %571 = vmatpush1.msra.mxu0 0.0
    %572 = vmatprep.subr.mxu0 0.0
    %573 = vmatpush1.msra.mxu0 0.0
    %574 = vmatprep.subr.mxu0 0.0
    %575 = vmatpush1.msra.mxu0 0.0
    %576 = vmatprep.subr.mxu0 0.0
    %577 = vmatpush1.msra.mxu0 0.0
    %578 = vmatprep.subr.mxu0 0.0
    %579 = vmatpush1.msra.mxu0 0.0
    %580 = vmatprep.subr.mxu0 0.0
    %581 = vmatpush1.msra.mxu0 0.0
    %582 = vmatprep.subr.mxu0 0.0
    %583 = vmatpush1.msra.mxu0 0.0
    %584 = vmatprep.subr.mxu0 0.0
    %585 = vmatpush1.msra.mxu0 0.0
    %586 = vmatprep.subr.mxu0 0.0
    %587 = vmatpush1.msra.mxu0 0.0
    %588 = vmatprep.subr.mxu0 0.0
    %589 = vmatpush1.msra.mxu0 0.0
    %590 = vmatprep.subr.mxu0 0.0
    %591 = vmatpush1.msra.mxu0 0.0
    %592 = vmatprep.subr.mxu0 0.0
    %593 = vmatpush1.msra.mxu0 0.0
    %594 = vmatprep.subr.mxu0 0.0
    %595 = vmatpush1.msra.mxu0 0.0
    %596 = vmatprep.subr.mxu0 0.0
    %597 = vmatpush1.msra.mxu0 0.0
    %598 = vmatprep.subr.mxu0 0.0
    %599 = vmatpush1.msra.mxu0 0.0
    %600 = vmatprep.subr.mxu0 0.0
    %601 = vmatpush1.msra.mxu0 0.0
    %602 = vmatprep.subr.mxu0 0.0
    %603 = vmatpush1.msra.mxu0 0.0
    %604 = vmatprep.mubr.f32.mxu0 0.0
    %605 = vmatmul.mubr.f32.gmra.mrb[0].mxu0 %v397
    %v606 = vpop.f32.mrb[0].mxu0
    %v607 = vadd.f32 0.0, %v606
    %v608 = vpop.f32.mrb[0].mxu0
    %609 = vdwg.mxu0
    %v611 = vrot.slane %v607, 7
    %v614 = vadd.f32 %v171, %v611
    %v615 = vadd.f32 %v176, %v607
    %v616 = vxor.u32 %v614, 2147483648
    %v617 = vxor.u32 %v615, 2147483648
    %v618 = vmul.f32 %v616, 1.442695
    %v619 = vpow.pop %v618
    %v620 = vmul.f32 %v617, 1.442695
    %v621 = vpow.pop %v620
    %v622 = vadd.f32 %v619, 1.0
    %v623 = vadd.f32 %v621, 1.0
    %v624 = vrcp.pop %v622
    %v625 = vmul.f32 1.0, %v624
    %v626 = vrcp.pop %v623
    %v627 = vmul.f32 1.0, %v626
    %v628 = vtanh.pop %v614
    %v629 = vtanh.pop %v615
    %v632 = vrot.slane %v306, 7
    %v633 = vrot.slane %v307, 7
    %v636 = vmul.f32 %v625, %v632
    %v637 = vmul.f32 %v627, %v633
    %640 = vrot.lane.b32.xlu0 %v628, 64
    %v641 = vpop.permute.xlu0 %640
    %642 = vrot.lane.b32.xlu0 %v629, 64
    %v643 = vpop.permute.xlu0 %642
    %v646 = vmul.f32 %v625, %v641
    %v647 = vmul.f32 %v627, %v643
    %650 = vrot.lane.b32.xlu0 %v646, 32
    %v651 = vpop.permute.xlu0 %650
    %652 = vrot.lane.b32.xlu0 %v647, 32
    %v653 = vpop.permute.xlu0 %652
    %v656 = vadd.f32 %v636, %v651
    %v657 = vadd.f32 %v637, %v653
    %v658 = vtanh.pop %v656
    %v659 = vtanh.pop %v657
    %662 = vrot.lane.b32.xlu0 %v658, 64
    %v663 = vpop.permute.xlu0 %662
    %664 = vrot.lane.b32.xlu0 %v659, 64
    %v665 = vpop.permute.xlu0 %664
    %v668 = vmul.f32 %v625, %v663
    %v669 = vmul.f32 %v627, %v665
    %670 = vrot.lane.b32.xlu0 %v499, 32
    %v671 = vpop.permute.xlu0 %670
    %v672 = vsel %vm192, %v671, 0
    %674 = vmatprep.subr.mxu0 0.0
    %675 = vmatpush1.msra.mxu0 %v187
    %676 = vmatprep.subr.mxu0 0.0
    %677 = vmatpush1.msra.mxu0 %v188
    %678 = vmatprep.subr.mxu0 0.0
    %679 = vmatpush1.msra.mxu0 %v189
    %680 = vmatprep.subr.mxu0 0.0
    %681 = vmatpush1.msra.mxu0 %v190
    %682 = vmatprep.subr.mxu0 0.0
    %683 = vmatpush1.msra.mxu0 0.0
    %684 = vmatprep.subr.mxu0 0.0
    %685 = vmatpush1.msra.mxu0 0.0
    %686 = vmatprep.subr.mxu0 0.0
    %687 = vmatpush1.msra.mxu0 0.0
    %688 = vmatprep.subr.mxu0 0.0
    %689 = vmatpush1.msra.mxu0 0.0
    %690 = vmatprep.subr.mxu0 0.0
    %691 = vmatpush1.msra.mxu0 0.0
    %692 = vmatprep.subr.mxu0 0.0
    %693 = vmatpush1.msra.mxu0 0.0
    %694 = vmatprep.subr.mxu0 0.0
    %695 = vmatpush1.msra.mxu0 0.0
    %696 = vmatprep.subr.mxu0 0.0
    %697 = vmatpush1.msra.mxu0 0.0
    %698 = vmatprep.subr.mxu0 0.0
    %699 = vmatpush1.msra.mxu0 0.0
    %700 = vmatprep.subr.mxu0 0.0
    %701 = vmatpush1.msra.mxu0 0.0
    %702 = vmatprep.subr.mxu0 0.0
    %703 = vmatpush1.msra.mxu0 0.0
    %704 = vmatprep.subr.mxu0 0.0
    %705 = vmatpush1.msra.mxu0 0.0
    %706 = vmatprep.subr.mxu0 0.0
    %707 = vmatpush1.msra.mxu0 0.0
    %708 = vmatprep.subr.mxu0 0.0
    %709 = vmatpush1.msra.mxu0 0.0
    %710 = vmatprep.subr.mxu0 0.0
    %711 = vmatpush1.msra.mxu0 0.0
    %712 = vmatprep.subr.mxu0 0.0
    %713 = vmatpush1.msra.mxu0 0.0
    %714 = vmatprep.subr.mxu0 0.0
    %715 = vmatpush1.msra.mxu0 0.0
    %716 = vmatprep.subr.mxu0 0.0
    %717 = vmatpush1.msra.mxu0 0.0
    %718 = vmatprep.subr.mxu0 0.0
    %719 = vmatpush1.msra.mxu0 0.0
    %720 = vmatprep.subr.mxu0 0.0
    %721 = vmatpush1.msra.mxu0 0.0
    %722 = vmatprep.subr.mxu0 0.0
    %723 = vmatpush1.msra.mxu0 0.0
    %724 = vmatprep.subr.mxu0 0.0
    %725 = vmatpush1.msra.mxu0 0.0
    %726 = vmatprep.subr.mxu0 0.0
    %727 = vmatpush1.msra.mxu0 0.0
    %728 = vmatprep.subr.mxu0 0.0
    %729 = vmatpush1.msra.mxu0 0.0
    %730 = vmatprep.subr.mxu0 0.0
    %731 = vmatpush1.msra.mxu0 0.0
    %732 = vmatprep.subr.mxu0 0.0
    %733 = vmatpush1.msra.mxu0 0.0
    %734 = vmatprep.subr.mxu0 0.0
    %735 = vmatpush1.msra.mxu0 0.0
    %736 = vmatprep.subr.mxu0 0.0
    %737 = vmatpush1.msra.mxu0 0.0
    %738 = vmatprep.mubr.f32.mxu0 0.0
    %739 = vmatmul.mubr.f32.gmra.mrb[0].mxu0 %v672
    %v740 = vpop.f32.mrb[0].mxu0
    %v741 = vadd.f32 0.0, %v740
    %v742 = vpop.f32.mrb[0].mxu0
    %743 = vdwg.mxu0
    %v746 = vrot.slane %v668, 1
    %v747 = vsel %vm393, %v669, %v746
    %748 = vrot.lane.b32.xlu0 %v747, 32
    %v749 = vpop.permute.xlu0 %748
    %v750 = vsel %vm192, %v749, 0
    %752 = vmatprep.subr.mxu0 0.0
    %753 = vmatpush1.msra.mxu0 %v183
    %754 = vmatprep.subr.mxu0 0.0
    %755 = vmatpush1.msra.mxu0 %v184
    %756 = vmatprep.subr.mxu0 0.0
    %757 = vmatpush1.msra.mxu0 %v185
    %758 = vmatprep.subr.mxu0 0.0
    %759 = vmatpush1.msra.mxu0 %v186
    %760 = vmatprep.subr.mxu0 0.0
    %761 = vmatpush1.msra.mxu0 0.0
    %762 = vmatprep.subr.mxu0 0.0
    %763 = vmatpush1.msra.mxu0 0.0
    %764 = vmatprep.subr.mxu0 0.0
    %765 = vmatpush1.msra.mxu0 0.0
    %766 = vmatprep.subr.mxu0 0.0
    %767 = vmatpush1.msra.mxu0 0.0
    %768 = vmatprep.subr.mxu0 0.0
    %769 = vmatpush1.msra.mxu0 0.0
    %770 = vmatprep.subr.mxu0 0.0
    %771 = vmatpush1.msra.mxu0 0.0
    %772 = vmatprep.subr.mxu0 0.0
    %773 = vmatpush1.msra.mxu0 0.0
    %774 = vmatprep.subr.mxu0 0.0
    %775 = vmatpush1.msra.mxu0 0.0
    %776 = vmatprep.subr.mxu0 0.0
    %777 = vmatpush1.msra.mxu0 0.0
    %778 = vmatprep.subr.mxu0 0.0
    %779 = vmatpush1.msra.mxu0 0.0
    %780 = vmatprep.subr.mxu0 0.0
    %781 = vmatpush1.msra.mxu0 0.0
    %782 = vmatprep.subr.mxu0 0.0
    %783 = vmatpush1.msra.mxu0 0.0
    %784 = vmatprep.subr.mxu0 0.0
    %785 = vmatpush1.msra.mxu0 0.0
    %786 = vmatprep.subr.mxu0 0.0
    %787 = vmatpush1.msra.mxu0 0.0
    %788 = vmatprep.subr.mxu0 0.0
    %789 = vmatpush1.msra.mxu0 0.0
    %790 = vmatprep.subr.mxu0 0.0
    %791 = vmatpush1.msra.mxu0 0.0
    %792 = vmatprep.subr.mxu0 0.0
    %793 = vmatpush1.msra.mxu0 0.0
    %794 = vmatprep.subr.mxu0 0.0
    %795 = vmatpush1.msra.mxu0 0.0
    %796 = vmatprep.subr.mxu0 0.0
    %797 = vmatpush1.msra.mxu0 0.0
    %798 = vmatprep.subr.mxu0 0.0
    %799 = vmatpush1.msra.mxu0 0.0
    %800 = vmatprep.subr.mxu0 0.0
    %801 = vmatpush1.msra.mxu0 0.0
    %802 = vmatprep.subr.mxu0 0.0
    %803 = vmatpush1.msra.mxu0 0.0
    %804 = vmatprep.subr.mxu0 0.0
    %805 = vmatpush1.msra.mxu0 0.0
    %806 = vmatprep.subr.mxu0 0.0
    %807 = vmatpush1.msra.mxu0 0.0
    %808 = vmatprep.subr.mxu0 0.0
    %809 = vmatpush1.msra.mxu0 0.0
    %810 = vmatprep.subr.mxu0 0.0
    %811 = vmatpush1.msra.mxu0 0.0
    %812 = vmatprep.subr.mxu0 0.0
    %813 = vmatpush1.msra.mxu0 0.0
    %814 = vmatprep.subr.mxu0 0.0
    %815 = vmatpush1.msra.mxu0 0.0
    %816 = vmatprep.mubr.f32.mxu0 0.0
    %817 = vmatmul.mubr.f32.gmra.mrb[0].mxu0 %v750
    %v818 = vpop.f32.mrb[0].mxu0
    %v819 = vadd.f32 %v741, %v818
    %v820 = vpop.f32.mrb[0].mxu0
    %821 = vdwg.mxu0
    %v822 = vadd.f32 %v819, %v473
    %v823 = vxor.u32 %v822, 2147483648
    %v824 = vmul.f32 %v823, 1.442695
    %v825 = vpow.pop %v824
    %v826 = vadd.f32 %v825, 1.0
    %v827 = vrcp.pop %v826
    %v828 = vmul.f32 1.0, %v827
    %v829 = vtanh.pop %v822
    %v830 = vmul.f32 %v828, %v493
    %832 = vrot.lane.b32.xlu0 %v829, 64
    %v833 = vpop.permute.xlu0 %832
    %v835 = vmul.f32 %v828, %v833
    %837 = vrot.lane.b32.xlu0 %v835, 32
    %v838 = vpop.permute.xlu0 %837
    %v840 = vadd.f32 %v830, %v838
    %v841 = vtanh.pop %v840
    %843 = vrot.lane.b32.xlu0 %v841, 64
    %v844 = vpop.permute.xlu0 %843
    %v846 = vmul.f32 %v828, %v844
    %v849 = vunpack.c.l.s4 1966171168
    %v850 = vunpack.c.0.s8 %v849
    %v851 = vlaneseq
    %v852 = vshrl.u32 %v851, 7
    %v853 = vsub.s32 %v850, %v852
    %v854 = vrot.slane %v846, %v853
    %v855 = vcombine.high %v854, %v854
    %v857 = vunpack.c.l.s4 1966171168
    %v858 = vunpack.c.0.s8 %v857
    %v859 = vlaneseq
    %v860 = vshrl.u32 %v859, 7
    %v861 = vsub.s32 %v858, %v860
    %v862 = vrot.slane %v854, %v861
    %v864 = vunpack.c.l.s4 1966171168
    %v865 = vunpack.c.0.s8 %v864
    %v866 = vlaneseq
    %v867 = vshrl.u32 %v866, 7
    %v868 = vsub.s32 %v865, %v867
    %v869 = vrot.slane %v855, %v868
    %v870 = vlaneseq
    %v871 = vshrl.u32 %v870, 7
    %v872 = vsub.s32 0, %v871
    %v873 = vrot.slane %v862, %v872
    %v874 = vlaneseq
    %v875 = vshrl.u32 %v874, 7
    %v876 = vsub.s32 0, %v875
    %v877 = vrot.slane %v869, %v876
    %878 = vrot.lane.b32.xlu0 %v873, 32
    %v879 = vpop.permute.xlu0 %878
    %880 = vrot.lane.b32.xlu0 %v877, 32
    %v881 = vpop.permute.xlu0 %880
    %884 = vst.msk [vmem:[#allocation2 + $0x1] sm:$0x1] %vm537, %v879
    %885 = vst.msk [vmem:[#allocation2 + $0x9] sm:$0x1] %vm537, %v881
    %886 = vmatprep.subr.mxu0 0.0
    %887 = vmatpush1.msra.mxu0 %v179
    %888 = vmatprep.subr.mxu0 0.0
    %889 = vmatpush1.msra.mxu0 %v180
    %890 = vmatprep.subr.mxu0 0.0
    %891 = vmatpush1.msra.mxu0 %v181
    %892 = vmatprep.subr.mxu0 0.0
    %893 = vmatpush1.msra.mxu0 %v182
    %894 = vmatprep.subr.mxu0 0.0
    %895 = vmatpush1.msra.mxu0 0.0
    %896 = vmatprep.subr.mxu0 0.0
    %897 = vmatpush1.msra.mxu0 0.0
    %898 = vmatprep.subr.mxu0 0.0
    %899 = vmatpush1.msra.mxu0 0.0
    %900 = vmatprep.subr.mxu0 0.0
    %901 = vmatpush1.msra.mxu0 0.0
    %902 = vmatprep.subr.mxu0 0.0
    %903 = vmatpush1.msra.mxu0 0.0
    %904 = vmatprep.subr.mxu0 0.0
    %905 = vmatpush1.msra.mxu0 0.0
    %906 = vmatprep.subr.mxu0 0.0
    %907 = vmatpush1.msra.mxu0 0.0
    %908 = vmatprep.subr.mxu0 0.0
    %909 = vmatpush1.msra.mxu0 0.0
    %910 = vmatprep.subr.mxu0 0.0
    %911 = vmatpush1.msra.mxu0 0.0
    %912 = vmatprep.subr.mxu0 0.0
    %913 = vmatpush1.msra.mxu0 0.0
    %914 = vmatprep.subr.mxu0 0.0
    %915 = vmatpush1.msra.mxu0 0.0
    %916 = vmatprep.subr.mxu0 0.0
    %917 = vmatpush1.msra.mxu0 0.0
    %918 = vmatprep.subr.mxu0 0.0
    %919 = vmatpush1.msra.mxu0 0.0
    %920 = vmatprep.subr.mxu0 0.0
    %921 = vmatpush1.msra.mxu0 0.0
    %922 = vmatprep.subr.mxu0 0.0
    %923 = vmatpush1.msra.mxu0 0.0
    %924 = vmatprep.subr.mxu0 0.0
    %925 = vmatpush1.msra.mxu0 0.0
    %926 = vmatprep.subr.mxu0 0.0
    %927 = vmatpush1.msra.mxu0 0.0
    %928 = vmatprep.subr.mxu0 0.0
    %929 = vmatpush1.msra.mxu0 0.0
    %930 = vmatprep.subr.mxu0 0.0
    %931 = vmatpush1.msra.mxu0 0.0
    %932 = vmatprep.subr.mxu0 0.0
    %933 = vmatpush1.msra.mxu0 0.0
    %934 = vmatprep.subr.mxu0 0.0
    %935 = vmatpush1.msra.mxu0 0.0
    %936 = vmatprep.subr.mxu0 0.0
    %937 = vmatpush1.msra.mxu0 0.0
    %938 = vmatprep.subr.mxu0 0.0
    %939 = vmatpush1.msra.mxu0 0.0
    %940 = vmatprep.subr.mxu0 0.0
    %941 = vmatpush1.msra.mxu0 0.0
    %942 = vmatprep.subr.mxu0 0.0
    %943 = vmatpush1.msra.mxu0 0.0
    %944 = vmatprep.subr.mxu0 0.0
    %945 = vmatpush1.msra.mxu0 0.0
    %946 = vmatprep.subr.mxu0 0.0
    %947 = vmatpush1.msra.mxu0 0.0
    %948 = vmatprep.subr.mxu0 0.0
    %949 = vmatpush1.msra.mxu0 0.0
    %950 = vmatprep.mubr.f32.mxu0 0.0
    %951 = vmatmul.mubr.f32.gmra.mrb[0].mxu0 %v750
    %v952 = vpop.f32.mrb[0].mxu0
    %v953 = vadd.f32 0.0, %v952
    %v954 = vpop.f32.mrb[0].mxu0
    %955 = vdwg.mxu0
    %v957 = vrot.slane %v953, 6
    %v958 = vrot.slane %v953, 7
    %v961 = vadd.f32 %v171, %v957
    %v962 = vadd.f32 %v176, %v958
    %v963 = vxor.u32 %v961, 2147483648
    %v964 = vxor.u32 %v962, 2147483648
    %v965 = vmul.f32 %v963, 1.442695
    %v966 = vpow.pop %v965
    %v967 = vmul.f32 %v964, 1.442695
    %v968 = vpow.pop %v967
    %v969 = vadd.f32 %v966, 1.0
    %v970 = vadd.f32 %v968, 1.0
    %v971 = vrcp.pop %v969
    %v972 = vmul.f32 1.0, %v971
    %v973 = vrcp.pop %v970
    %v974 = vmul.f32 1.0, %v973
    %v975 = vtanh.pop %v961
    %v976 = vtanh.pop %v962
    %v979 = vrot.slane %v656, 7
    %v980 = vrot.slane %v657, 7
    %v983 = vmul.f32 %v972, %v979
    %v984 = vmul.f32 %v974, %v980
    %987 = vrot.lane.b32.xlu0 %v975, 64
    %v988 = vpop.permute.xlu0 %987
    %989 = vrot.lane.b32.xlu0 %v976, 64
    %v990 = vpop.permute.xlu0 %989
    %v993 = vmul.f32 %v972, %v988
    %v994 = vmul.f32 %v974, %v990
    %997 = vrot.lane.b32.xlu0 %v993, 32
    %v998 = vpop.permute.xlu0 %997
    %999 = vrot.lane.b32.xlu0 %v994, 32
    %v1000 = vpop.permute.xlu0 %999
    %v1003 = vadd.f32 %v983, %v998
    %v1004 = vadd.f32 %v984, %v1000
    %v1005 = vtanh.pop %v1003
    %v1006 = vtanh.pop %v1004
    %1009 = vrot.lane.b32.xlu0 %v1005, 64
    %v1010 = vpop.permute.xlu0 %1009
    %1011 = vrot.lane.b32.xlu0 %v1006, 64
    %v1012 = vpop.permute.xlu0 %1011
    %v1015 = vmul.f32 %v972, %v1010
    %v1016 = vmul.f32 %v974, %v1012
    %1017 = vrot.lane.b32.xlu0 %v846, 32
    %v1018 = vpop.permute.xlu0 %1017
    %v1019 = vsel %vm192, %v1018, 0
    %1021 = vmatprep.subr.mxu0 0.0
    %1022 = vmatpush1.msra.mxu0 %v187
    %1023 = vmatprep.subr.mxu0 0.0
    %1024 = vmatpush1.msra.mxu0 %v188
    %1025 = vmatprep.subr.mxu0 0.0
    %1026 = vmatpush1.msra.mxu0 %v189
    %1027 = vmatprep.subr.mxu0 0.0
    %1028 = vmatpush1.msra.mxu0 %v190
    %1029 = vmatprep.subr.mxu0 0.0
    %1030 = vmatpush1.msra.mxu0 0.0
    %1031 = vmatprep.subr.mxu0 0.0
    %1032 = vmatpush1.msra.mxu0 0.0
    %1033 = vmatprep.subr.mxu0 0.0
    %1034 = vmatpush1.msra.mxu0 0.0
    %1035 = vmatprep.subr.mxu0 0.0
    %1036 = vmatpush1.msra.mxu0 0.0
    %1037 = vmatprep.subr.mxu0 0.0
    %1038 = vmatpush1.msra.mxu0 0.0
    %1039 = vmatprep.subr.mxu0 0.0
    %1040 = vmatpush1.msra.mxu0 0.0
    %1041 = vmatprep.subr.mxu0 0.0
    %1042 = vmatpush1.msra.mxu0 0.0
    %1043 = vmatprep.subr.mxu0 0.0
    %1044 = vmatpush1.msra.mxu0 0.0
    %1045 = vmatprep.subr.mxu0 0.0
    %1046 = vmatpush1.msra.mxu0 0.0
    %1047 = vmatprep.subr.mxu0 0.0
    %1048 = vmatpush1.msra.mxu0 0.0
    %1049 = vmatprep.subr.mxu0 0.0
    %1050 = vmatpush1.msra.mxu0 0.0
    %1051 = vmatprep.subr.mxu0 0.0
    %1052 = vmatpush1.msra.mxu0 0.0
    %1053 = vmatprep.subr.mxu0 0.0
    %1054 = vmatpush1.msra.mxu0 0.0
    %1055 = vmatprep.subr.mxu0 0.0
    %1056 = vmatpush1.msra.mxu0 0.0
    %1057 = vmatprep.subr.mxu0 0.0
    %1058 = vmatpush1.msra.mxu0 0.0
    %1059 = vmatprep.subr.mxu0 0.0
    %1060 = vmatpush1.msra.mxu0 0.0
    %1061 = vmatprep.subr.mxu0 0.0
    %1062 = vmatpush1.msra.mxu0 0.0
    %1063 = vmatprep.subr.mxu0 0.0
    %1064 = vmatpush1.msra.mxu0 0.0
    %1065 = vmatprep.subr.mxu0 0.0
    %1066 = vmatpush1.msra.mxu0 0.0
    %1067 = vmatprep.subr.mxu0 0.0
    %1068 = vmatpush1.msra.mxu0 0.0
    %1069 = vmatprep.subr.mxu0 0.0
    %1070 = vmatpush1.msra.mxu0 0.0
    %1071 = vmatprep.subr.mxu0 0.0
    %1072 = vmatpush1.msra.mxu0 0.0
    %1073 = vmatprep.subr.mxu0 0.0
    %1074 = vmatpush1.msra.mxu0 0.0
    %1075 = vmatprep.subr.mxu0 0.0
    %1076 = vmatpush1.msra.mxu0 0.0
    %1077 = vmatprep.subr.mxu0 0.0
    %1078 = vmatpush1.msra.mxu0 0.0
    %1079 = vmatprep.subr.mxu0 0.0
    %1080 = vmatpush1.msra.mxu0 0.0
    %1081 = vmatprep.subr.mxu0 0.0
    %1082 = vmatpush1.msra.mxu0 0.0
    %1083 = vmatprep.subr.mxu0 0.0
    %1084 = vmatpush1.msra.mxu0 0.0
    %1085 = vmatprep.mubr.f32.mxu0 0.0
    %1086 = vmatmul.mubr.f32.gmra.mrb[0].mxu0 %v1019
    %v1087 = vpop.f32.mrb[0].mxu0
    %v1088 = vadd.f32 0.0, %v1087
    %v1089 = vpop.f32.mrb[0].mxu0
    %1090 = vdwg.mxu0
    %v1093 = vrot.slane %v1015, 2
    %v1094 = vrot.slane %v1016, 1
    %v1095 = vsel %vm393, %v1094, %v1093
    %1096 = vrot.lane.b32.xlu0 %v1095, 32
    %v1097 = vpop.permute.xlu0 %1096
    %v1098 = vsel %vm192, %v1097, 0
    %1100 = vmatprep.subr.mxu0 0.0
    %1101 = vmatpush1.msra.mxu0 %v183
    %1102 = vmatprep.subr.mxu0 0.0
    %1103 = vmatpush1.msra.mxu0 %v184
    %1104 = vmatprep.subr.mxu0 0.0
    %1105 = vmatpush1.msra.mxu0 %v185
    %1106 = vmatprep.subr.mxu0 0.0
    %1107 = vmatpush1.msra.mxu0 %v186
    %1108 = vmatprep.subr.mxu0 0.0
    %1109 = vmatpush1.msra.mxu0 0.0
    %1110 = vmatprep.subr.mxu0 0.0
    %1111 = vmatpush1.msra.mxu0 0.0
    %1112 = vmatprep.subr.mxu0 0.0
    %1113 = vmatpush1.msra.mxu0 0.0
    %1114 = vmatprep.subr.mxu0 0.0
    %1115 = vmatpush1.msra.mxu0 0.0
    %1116 = vmatprep.subr.mxu0 0.0
    %1117 = vmatpush1.msra.mxu0 0.0
    %1118 = vmatprep.subr.mxu0 0.0
    %1119 = vmatpush1.msra.mxu0 0.0
    %1120 = vmatprep.subr.mxu0 0.0
    %1121 = vmatpush1.msra.mxu0 0.0
    %1122 = vmatprep.subr.mxu0 0.0
    %1123 = vmatpush1.msra.mxu0 0.0
    %1124 = vmatprep.subr.mxu0 0.0
    %1125 = vmatpush1.msra.mxu0 0.0
    %1126 = vmatprep.subr.mxu0 0.0
    %1127 = vmatpush1.msra.mxu0 0.0
    %1128 = vmatprep.subr.mxu0 0.0
    %1129 = vmatpush1.msra.mxu0 0.0
    %1130 = vmatprep.subr.mxu0 0.0
    %1131 = vmatpush1.msra.mxu0 0.0
    %1132 = vmatprep.subr.mxu0 0.0
    %1133 = vmatpush1.msra.mxu0 0.0
    %1134 = vmatprep.subr.mxu0 0.0
    %1135 = vmatpush1.msra.mxu0 0.0
    %1136 = vmatprep.subr.mxu0 0.0
    %1137 = vmatpush1.msra.mxu0 0.0
    %1138 = vmatprep.subr.mxu0 0.0
    %1139 = vmatpush1.msra.mxu0 0.0
    %1140 = vmatprep.subr.mxu0 0.0
    %1141 = vmatpush1.msra.mxu0 0.0
    %1142 = vmatprep.subr.mxu0 0.0
    %1143 = vmatpush1.msra.mxu0 0.0
    %1144 = vmatprep.subr.mxu0 0.0
    %1145 = vmatpush1.msra.mxu0 0.0
    %1146 = vmatprep.subr.mxu0 0.0
    %1147 = vmatpush1.msra.mxu0 0.0
    %1148 = vmatprep.subr.mxu0 0.0
    %1149 = vmatpush1.msra.mxu0 0.0
    %1150 = vmatprep.subr.mxu0 0.0
    %1151 = vmatpush1.msra.mxu0 0.0
    %1152 = vmatprep.subr.mxu0 0.0
    %1153 = vmatpush1.msra.mxu0 0.0
    %1154 = vmatprep.subr.mxu0 0.0
    %1155 = vmatpush1.msra.mxu0 0.0
    %1156 = vmatprep.subr.mxu0 0.0
    %1157 = vmatpush1.msra.mxu0 0.0
    %1158 = vmatprep.subr.mxu0 0.0
    %1159 = vmatpush1.msra.mxu0 0.0
    %1160 = vmatprep.subr.mxu0 0.0
    %1161 = vmatpush1.msra.mxu0 0.0
    %1162 = vmatprep.subr.mxu0 0.0
    %1163 = vmatpush1.msra.mxu0 0.0
    %1164 = vmatprep.mubr.f32.mxu0 0.0
    %1165 = vmatmul.mubr.f32.gmra.mrb[0].mxu0 %v1098
    %v1166 = vpop.f32.mrb[0].mxu0
    %v1167 = vadd.f32 %v1088, %v1166
    %v1168 = vpop.f32.mrb[0].mxu0
    %1169 = vdwg.mxu0
    %v1170 = vadd.f32 %v1167, %v473
    %v1171 = vxor.u32 %v1170, 2147483648
    %v1172 = vmul.f32 %v1171, 1.442695
    %v1173 = vpow.pop %v1172
    %v1174 = vadd.f32 %v1173, 1.0
    %v1175 = vrcp.pop %v1174
    %v1176 = vmul.f32 1.0, %v1175
    %v1177 = vtanh.pop %v1170
    %v1178 = vmul.f32 %v1176, %v840
    %1180 = vrot.lane.b32.xlu0 %v1177, 64
    %v1181 = vpop.permute.xlu0 %1180
    %v1183 = vmul.f32 %v1176, %v1181
    %1185 = vrot.lane.b32.xlu0 %v1183, 32
    %v1186 = vpop.permute.xlu0 %1185
    %v1188 = vadd.f32 %v1178, %v1186
    %v1189 = vtanh.pop %v1188
    %1191 = vrot.lane.b32.xlu0 %v1189, 64
    %v1192 = vpop.permute.xlu0 %1191
    %v1194 = vmul.f32 %v1176, %v1192
    %v1197 = vunpack.c.l.s4 1966171168
    %v1198 = vunpack.c.0.s8 %v1197
    %v1199 = vlaneseq
    %v1200 = vshrl.u32 %v1199, 7
    %v1201 = vsub.s32 %v1198, %v1200
    %v1202 = vrot.slane %v1194, %v1201
    %v1203 = vcombine.high %v1202, %v1202
    %v1205 = vunpack.c.l.s4 1966171168
    %v1206 = vunpack.c.0.s8 %v1205
    %v1207 = vlaneseq
    %v1208 = vshrl.u32 %v1207, 7
    %v1209 = vsub.s32 %v1206, %v1208
    %v1210 = vrot.slane %v1202, %v1209
    %v1212 = vunpack.c.l.s4 1966171168
    %v1213 = vunpack.c.0.s8 %v1212
    %v1214 = vlaneseq
    %v1215 = vshrl.u32 %v1214, 7
    %v1216 = vsub.s32 %v1213, %v1215
    %v1217 = vrot.slane %v1203, %v1216
    %v1218 = vlaneseq
    %v1219 = vshrl.u32 %v1218, 7
    %v1220 = vsub.s32 0, %v1219
    %v1221 = vrot.slane %v1210, %v1220
    %v1222 = vlaneseq
    %v1223 = vshrl.u32 %v1222, 7
    %v1224 = vsub.s32 0, %v1223
    %v1225 = vrot.slane %v1217, %v1224
    %1226 = vrot.lane.b32.xlu0 %v1221, 32
    %v1227 = vpop.permute.xlu0 %1226
    %1228 = vrot.lane.b32.xlu0 %v1225, 32
    %v1229 = vpop.permute.xlu0 %1228
    %1232 = vst.msk [vmem:[#allocation2 + $0x2] sm:$0x1] %vm537, %v1227
    %1233 = vst.msk [vmem:[#allocation2 + $0xa] sm:$0x1] %vm537, %v1229
    %1234 = vmatprep.subr.mxu0 0.0
    %1235 = vmatpush1.msra.mxu0 %v179
    %1236 = vmatprep.subr.mxu0 0.0
    %1237 = vmatpush1.msra.mxu0 %v180
    %1238 = vmatprep.subr.mxu0 0.0
    %1239 = vmatpush1.msra.mxu0 %v181
    %1240 = vmatprep.subr.mxu0 0.0
    %1241 = vmatpush1.msra.mxu0 %v182
    %1242 = vmatprep.subr.mxu0 0.0
    %1243 = vmatpush1.msra.mxu0 0.0
    %1244 = vmatprep.subr.mxu0 0.0
    %1245 = vmatpush1.msra.mxu0 0.0
    %1246 = vmatprep.subr.mxu0 0.0
    %1247 = vmatpush1.msra.mxu0 0.0
    %1248 = vmatprep.subr.mxu0 0.0
    %1249 = vmatpush1.msra.mxu0 0.0
    %1250 = vmatprep.subr.mxu0 0.0
    %1251 = vmatpush1.msra.mxu0 0.0
    %1252 = vmatprep.subr.mxu0 0.0
    %1253 = vmatpush1.msra.mxu0 0.0
    %1254 = vmatprep.subr.mxu0 0.0
    %1255 = vmatpush1.msra.mxu0 0.0
    %1256 = vmatprep.subr.mxu0 0.0
    %1257 = vmatpush1.msra.mxu0 0.0
    %1258 = vmatprep.subr.mxu0 0.0
    %1259 = vmatpush1.msra.mxu0 0.0
    %1260 = vmatprep.subr.mxu0 0.0
    %1261 = vmatpush1.msra.mxu0 0.0
    %1262 = vmatprep.subr.mxu0 0.0
    %1263 = vmatpush1.msra.mxu0 0.0
    %1264 = vmatprep.subr.mxu0 0.0
    %1265 = vmatpush1.msra.mxu0 0.0
    %1266 = vmatprep.subr.mxu0 0.0
    %1267 = vmatpush1.msra.mxu0 0.0
    %1268 = vmatprep.subr.mxu0 0.0
    %1269 = vmatpush1.msra.mxu0 0.0
    %1270 = vmatprep.subr.mxu0 0.0
    %1271 = vmatpush1.msra.mxu0 0.0
    %1272 = vmatprep.subr.mxu0 0.0
    %1273 = vmatpush1.msra.mxu0 0.0
    %1274 = vmatprep.subr.mxu0 0.0
    %1275 = vmatpush1.msra.mxu0 0.0
    %1276 = vmatprep.subr.mxu0 0.0
    %1277 = vmatpush1.msra.mxu0 0.0
    %1278 = vmatprep.subr.mxu0 0.0
    %1279 = vmatpush1.msra.mxu0 0.0
    %1280 = vmatprep.subr.mxu0 0.0
    %1281 = vmatpush1.msra.mxu0 0.0
    %1282 = vmatprep.subr.mxu0 0.0
    %1283 = vmatpush1.msra.mxu0 0.0
    %1284 = vmatprep.subr.mxu0 0.0
    %1285 = vmatpush1.msra.mxu0 0.0
    %1286 = vmatprep.subr.mxu0 0.0
    %1287 = vmatpush1.msra.mxu0 0.0
    %1288 = vmatprep.subr.mxu0 0.0
    %1289 = vmatpush1.msra.mxu0 0.0
    %1290 = vmatprep.subr.mxu0 0.0
    %1291 = vmatpush1.msra.mxu0 0.0
    %1292 = vmatprep.subr.mxu0 0.0
    %1293 = vmatpush1.msra.mxu0 0.0
    %1294 = vmatprep.subr.mxu0 0.0
    %1295 = vmatpush1.msra.mxu0 0.0
    %1296 = vmatprep.subr.mxu0 0.0
    %1297 = vmatpush1.msra.mxu0 0.0
    %1298 = vmatprep.mubr.f32.mxu0 0.0
    %1299 = vmatmul.mubr.f32.gmra.mrb[0].mxu0 %v1098
    %v1300 = vpop.f32.mrb[0].mxu0
    %v1301 = vadd.f32 0.0, %v1300
    %v1302 = vpop.f32.mrb[0].mxu0
    %1303 = vdwg.mxu0
    %v1305 = vrot.slane %v1301, 5
    %v1306 = vrot.slane %v1301, 6
    %v1309 = vadd.f32 %v171, %v1305
    %v1310 = vadd.f32 %v176, %v1306
    %v1311 = vxor.u32 %v1309, 2147483648
    %v1312 = vxor.u32 %v1310, 2147483648
    %v1313 = vmul.f32 %v1311, 1.442695
    %v1314 = vpow.pop %v1313
    %v1315 = vmul.f32 %v1312, 1.442695
    %v1316 = vpow.pop %v1315
    %v1317 = vadd.f32 %v1314, 1.0
    %v1318 = vadd.f32 %v1316, 1.0
    %v1319 = vrcp.pop %v1317
    %v1320 = vmul.f32 1.0, %v1319
    %v1321 = vrcp.pop %v1318
    %v1322 = vmul.f32 1.0, %v1321
    %v1323 = vtanh.pop %v1309
    %v1324 = vtanh.pop %v1310
    %v1327 = vrot.slane %v1003, 7
    %v1328 = vrot.slane %v1004, 7
    %v1331 = vmul.f32 %v1320, %v1327
    %v1332 = vmul.f32 %v1322, %v1328
    %1335 = vrot.lane.b32.xlu0 %v1323, 64
    %v1336 = vpop.permute.xlu0 %1335
    %1337 = vrot.lane.b32.xlu0 %v1324, 64
    %v1338 = vpop.permute.xlu0 %1337
    %v1341 = vmul.f32 %v1320, %v1336
    %v1342 = vmul.f32 %v1322, %v1338
    %1345 = vrot.lane.b32.xlu0 %v1341, 32
    %v1346 = vpop.permute.xlu0 %1345
    %1347 = vrot.lane.b32.xlu0 %v1342, 32
    %v1348 = vpop.permute.xlu0 %1347
    %v1351 = vadd.f32 %v1331, %v1346
    %v1352 = vadd.f32 %v1332, %v1348
    %v1353 = vtanh.pop %v1351
    %v1354 = vtanh.pop %v1352
    %1357 = vrot.lane.b32.xlu0 %v1353, 64
    %v1358 = vpop.permute.xlu0 %1357
    %1359 = vrot.lane.b32.xlu0 %v1354, 64
    %v1360 = vpop.permute.xlu0 %1359
    %v1363 = vmul.f32 %v1320, %v1358
    %v1364 = vmul.f32 %v1322, %v1360
    %1365 = vrot.lane.b32.xlu0 %v1194, 32
    %v1366 = vpop.permute.xlu0 %1365
    %v1367 = vsel %vm192, %v1366, 0
    %1369 = vmatprep.subr.mxu0 0.0
    %1370 = vmatpush1.msra.mxu0 %v187
    %1371 = vmatprep.subr.mxu0 0.0
    %1372 = vmatpush1.msra.mxu0 %v188
    %1373 = vmatprep.subr.mxu0 0.0
    %1374 = vmatpush1.msra.mxu0 %v189
    %1375 = vmatprep.subr.mxu0 0.0
    %1376 = vmatpush1.msra.mxu0 %v190
    %1377 = vmatprep.subr.mxu0 0.0
    %1378 = vmatpush1.msra.mxu0 0.0
    %1379 = vmatprep.subr.mxu0 0.0
    %1380 = vmatpush1.msra.mxu0 0.0
    %1381 = vmatprep.subr.mxu0 0.0
    %1382 = vmatpush1.msra.mxu0 0.0
    %1383 = vmatprep.subr.mxu0 0.0
    %1384 = vmatpush1.msra.mxu0 0.0
    %1385 = vmatprep.subr.mxu0 0.0
    %1386 = vmatpush1.msra.mxu0 0.0
    %1387 = vmatprep.subr.mxu0 0.0
    %1388 = vmatpush1.msra.mxu0 0.0
    %1389 = vmatprep.subr.mxu0 0.0
    %1390 = vmatpush1.msra.mxu0 0.0
    %1391 = vmatprep.subr.mxu0 0.0
    %1392 = vmatpush1.msra.mxu0 0.0
    %1393 = vmatprep.subr.mxu0 0.0
    %1394 = vmatpush1.msra.mxu0 0.0
    %1395 = vmatprep.subr.mxu0 0.0
    %1396 = vmatpush1.msra.mxu0 0.0
    %1397 = vmatprep.subr.mxu0 0.0
    %1398 = vmatpush1.msra.mxu0 0.0
    %1399 = vmatprep.subr.mxu0 0.0
    %1400 = vmatpush1.msra.mxu0 0.0
    %1401 = vmatprep.subr.mxu0 0.0
    %1402 = vmatpush1.msra.mxu0 0.0
    %1403 = vmatprep.subr.mxu0 0.0
    %1404 = vmatpush1.msra.mxu0 0.0
    %1405 = vmatprep.subr.mxu0 0.0
    %1406 = vmatpush1.msra.mxu0 0.0
    %1407 = vmatprep.subr.mxu0 0.0
    %1408 = vmatpush1.msra.mxu0 0.0
    %1409 = vmatprep.subr.mxu0 0.0
    %1410 = vmatpush1.msra.mxu0 0.0
    %1411 = vmatprep.subr.mxu0 0.0
    %1412 = vmatpush1.msra.mxu0 0.0
    %1413 = vmatprep.subr.mxu0 0.0
    %1414 = vmatpush1.msra.mxu0 0.0
    %1415 = vmatprep.subr.mxu0 0.0
    %1416 = vmatpush1.msra.mxu0 0.0
    %1417 = vmatprep.subr.mxu0 0.0
    %1418 = vmatpush1.msra.mxu0 0.0
    %1419 = vmatprep.subr.mxu0 0.0
    %1420 = vmatpush1.msra.mxu0 0.0
    %1421 = vmatprep.subr.mxu0 0.0
    %1422 = vmatpush1.msra.mxu0 0.0
    %1423 = vmatprep.subr.mxu0 0.0
    %1424 = vmatpush1.msra.mxu0 0.0
    %1425 = vmatprep.subr.mxu0 0.0
    %1426 = vmatpush1.msra.mxu0 0.0
    %1427 = vmatprep.subr.mxu0 0.0
    %1428 = vmatpush1.msra.mxu0 0.0
    %1429 = vmatprep.subr.mxu0 0.0
    %1430 = vmatpush1.msra.mxu0 0.0
    %1431 = vmatprep.subr.mxu0 0.0
    %1432 = vmatpush1.msra.mxu0 0.0
    %1433 = vmatprep.mubr.f32.mxu0 0.0
    %1434 = vmatmul.mubr.f32.gmra.mrb[0].mxu0 %v1367
    %v1435 = vpop.f32.mrb[0].mxu0
    %v1436 = vadd.f32 0.0, %v1435
    %v1437 = vpop.f32.mrb[0].mxu0
    %1438 = vdwg.mxu0
    %v1441 = vrot.slane %v1363, 3
    %v1442 = vrot.slane %v1364, 2
    %v1443 = vsel %vm393, %v1442, %v1441
    %1444 = vrot.lane.b32.xlu0 %v1443, 32
    %v1445 = vpop.permute.xlu0 %1444
    %v1446 = vsel %vm192, %v1445, 0
    %1448 = vmatprep.subr.mxu0 0.0
    %1449 = vmatpush1.msra.mxu0 %v183
    %1450 = vmatprep.subr.mxu0 0.0
    %1451 = vmatpush1.msra.mxu0 %v184
    %1452 = vmatprep.subr.mxu0 0.0
    %1453 = vmatpush1.msra.mxu0 %v185
    %1454 = vmatprep.subr.mxu0 0.0
    %1455 = vmatpush1.msra.mxu0 %v186
    %1456 = vmatprep.subr.mxu0 0.0
    %1457 = vmatpush1.msra.mxu0 0.0
    %1458 = vmatprep.subr.mxu0 0.0
    %1459 = vmatpush1.msra.mxu0 0.0
    %1460 = vmatprep.subr.mxu0 0.0
    %1461 = vmatpush1.msra.mxu0 0.0
    %1462 = vmatprep.subr.mxu0 0.0
    %1463 = vmatpush1.msra.mxu0 0.0
    %1464 = vmatprep.subr.mxu0 0.0
    %1465 = vmatpush1.msra.mxu0 0.0
    %1466 = vmatprep.subr.mxu0 0.0
    %1467 = vmatpush1.msra.mxu0 0.0
    %1468 = vmatprep.subr.mxu0 0.0
    %1469 = vmatpush1.msra.mxu0 0.0
    %1470 = vmatprep.subr.mxu0 0.0
    %1471 = vmatpush1.msra.mxu0 0.0
    %1472 = vmatprep.subr.mxu0 0.0
    %1473 = vmatpush1.msra.mxu0 0.0
    %1474 = vmatprep.subr.mxu0 0.0
    %1475 = vmatpush1.msra.mxu0 0.0
    %1476 = vmatprep.subr.mxu0 0.0
    %1477 = vmatpush1.msra.mxu0 0.0
    %1478 = vmatprep.subr.mxu0 0.0
    %1479 = vmatpush1.msra.mxu0 0.0
    %1480 = vmatprep.subr.mxu0 0.0
    %1481 = vmatpush1.msra.mxu0 0.0
    %1482 = vmatprep.subr.mxu0 0.0
    %1483 = vmatpush1.msra.mxu0 0.0
    %1484 = vmatprep.subr.mxu0 0.0
    %1485 = vmatpush1.msra.mxu0 0.0
    %1486 = vmatprep.subr.mxu0 0.0
    %1487 = vmatpush1.msra.mxu0 0.0
    %1488 = vmatprep.subr.mxu0 0.0
    %1489 = vmatpush1.msra.mxu0 0.0
    %1490 = vmatprep.subr.mxu0 0.0
    %1491 = vmatpush1.msra.mxu0 0.0
    %1492 = vmatprep.subr.mxu0 0.0
    %1493 = vmatpush1.msra.mxu0 0.0
    %1494 = vmatprep.subr.mxu0 0.0
    %1495 = vmatpush1.msra.mxu0 0.0
    %1496 = vmatprep.subr.mxu0 0.0
    %1497 = vmatpush1.msra.mxu0 0.0
    %1498 = vmatprep.subr.mxu0 0.0
    %1499 = vmatpush1.msra.mxu0 0.0
    %1500 = vmatprep.subr.mxu0 0.0
    %1501 = vmatpush1.msra.mxu0 0.0
    %1502 = vmatprep.subr.mxu0 0.0
    %1503 = vmatpush1.msra.mxu0 0.0
    %1504 = vmatprep.subr.mxu0 0.0
    %1505 = vmatpush1.msra.mxu0 0.0
    %1506 = vmatprep.subr.mxu0 0.0
    %1507 = vmatpush1.msra.mxu0 0.0
    %1508 = vmatprep.subr.mxu0 0.0
    %1509 = vmatpush1.msra.mxu0 0.0
    %1510 = vmatprep.subr.mxu0 0.0
    %1511 = vmatpush1.msra.mxu0 0.0
    %1512 = vmatprep.mubr.f32.mxu0 0.0
    %1513 = vmatmul.mubr.f32.gmra.mrb[0].mxu0 %v1446
    %v1514 = vpop.f32.mrb[0].mxu0
    %v1515 = vadd.f32 %v1436, %v1514
    %v1516 = vpop.f32.mrb[0].mxu0
    %1517 = vdwg.mxu0
    %v1518 = vadd.f32 %v1515, %v473
    %v1519 = vxor.u32 %v1518, 2147483648
    %v1520 = vmul.f32 %v1519, 1.442695
    %v1521 = vpow.pop %v1520
    %v1522 = vadd.f32 %v1521, 1.0
    %v1523 = vrcp.pop %v1522
    %v1524 = vmul.f32 1.0, %v1523
    %v1525 = vtanh.pop %v1518
    %v1526 = vmul.f32 %v1524, %v1188
    %1528 = vrot.lane.b32.xlu0 %v1525, 64
    %v1529 = vpop.permute.xlu0 %1528
    %v1531 = vmul.f32 %v1524, %v1529
    %1533 = vrot.lane.b32.xlu0 %v1531, 32
    %v1534 = vpop.permute.xlu0 %1533
    %v1536 = vadd.f32 %v1526, %v1534
    %v1537 = vtanh.pop %v1536
    %1539 = vrot.lane.b32.xlu0 %v1537, 64
    %v1540 = vpop.permute.xlu0 %1539
    %v1542 = vmul.f32 %v1524, %v1540
    %v1545 = vunpack.c.l.s4 1966171168
    %v1546 = vunpack.c.0.s8 %v1545
    %v1547 = vlaneseq
    %v1548 = vshrl.u32 %v1547, 7
    %v1549 = vsub.s32 %v1546, %v1548
    %v1550 = vrot.slane %v1542, %v1549
    %v1551 = vcombine.high %v1550, %v1550
    %v1553 = vunpack.c.l.s4 1966171168
    %v1554 = vunpack.c.0.s8 %v1553
    %v1555 = vlaneseq
    %v1556 = vshrl.u32 %v1555, 7
    %v1557 = vsub.s32 %v1554, %v1556
    %v1558 = vrot.slane %v1550, %v1557
    %v1560 = vunpack.c.l.s4 1966171168
    %v1561 = vunpack.c.0.s8 %v1560
    %v1562 = vlaneseq
    %v1563 = vshrl.u32 %v1562, 7
    %v1564 = vsub.s32 %v1561, %v1563
    %v1565 = vrot.slane %v1551, %v1564
    %v1566 = vlaneseq
    %v1567 = vshrl.u32 %v1566, 7
    %v1568 = vsub.s32 0, %v1567
    %v1569 = vrot.slane %v1558, %v1568
    %v1570 = vlaneseq
    %v1571 = vshrl.u32 %v1570, 7
    %v1572 = vsub.s32 0, %v1571
    %v1573 = vrot.slane %v1565, %v1572
    %1574 = vrot.lane.b32.xlu0 %v1569, 32
    %v1575 = vpop.permute.xlu0 %1574
    %1576 = vrot.lane.b32.xlu0 %v1573, 32
    %v1577 = vpop.permute.xlu0 %1576
    %1580 = vst.msk [vmem:[#allocation2 + $0x3] sm:$0x1] %vm537, %v1575
    %1581 = vst.msk [vmem:[#allocation2 + $0xb] sm:$0x1] %vm537, %v1577
    %1582 = vmatprep.subr.mxu0 0.0
    %1583 = vmatpush1.msra.mxu0 %v179
    %1584 = vmatprep.subr.mxu0 0.0
    %1585 = vmatpush1.msra.mxu0 %v180
    %1586 = vmatprep.subr.mxu0 0.0
    %1587 = vmatpush1.msra.mxu0 %v181
    %1588 = vmatprep.subr.mxu0 0.0
    %1589 = vmatpush1.msra.mxu0 %v182
    %1590 = vmatprep.subr.mxu0 0.0
    %1591 = vmatpush1.msra.mxu0 0.0
    %1592 = vmatprep.subr.mxu0 0.0
    %1593 = vmatpush1.msra.mxu0 0.0
    %1594 = vmatprep.subr.mxu0 0.0
    %1595 = vmatpush1.msra.mxu0 0.0
    %1596 = vmatprep.subr.mxu0 0.0
    %1597 = vmatpush1.msra.mxu0 0.0
    %1598 = vmatprep.subr.mxu0 0.0
    %1599 = vmatpush1.msra.mxu0 0.0
    %1600 = vmatprep.subr.mxu0 0.0
    %1601 = vmatpush1.msra.mxu0 0.0
    %1602 = vmatprep.subr.mxu0 0.0
    %1603 = vmatpush1.msra.mxu0 0.0
    %1604 = vmatprep.subr.mxu0 0.0
    %1605 = vmatpush1.msra.mxu0 0.0
    %1606 = vmatprep.subr.mxu0 0.0
    %1607 = vmatpush1.msra.mxu0 0.0
    %1608 = vmatprep.subr.mxu0 0.0
    %1609 = vmatpush1.msra.mxu0 0.0
    %1610 = vmatprep.subr.mxu0 0.0
    %1611 = vmatpush1.msra.mxu0 0.0
    %1612 = vmatprep.subr.mxu0 0.0
    %1613 = vmatpush1.msra.mxu0 0.0
    %1614 = vmatprep.subr.mxu0 0.0
    %1615 = vmatpush1.msra.mxu0 0.0
    %1616 = vmatprep.subr.mxu0 0.0
    %1617 = vmatpush1.msra.mxu0 0.0
    %1618 = vmatprep.subr.mxu0 0.0
    %1619 = vmatpush1.msra.mxu0 0.0
    %1620 = vmatprep.subr.mxu0 0.0
    %1621 = vmatpush1.msra.mxu0 0.0
    %1622 = vmatprep.subr.mxu0 0.0
    %1623 = vmatpush1.msra.mxu0 0.0
    %1624 = vmatprep.subr.mxu0 0.0
    %1625 = vmatpush1.msra.mxu0 0.0
    %1626 = vmatprep.subr.mxu0 0.0
    %1627 = vmatpush1.msra.mxu0 0.0
    %1628 = vmatprep.subr.mxu0 0.0
    %1629 = vmatpush1.msra.mxu0 0.0
    %1630 = vmatprep.subr.mxu0 0.0
    %1631 = vmatpush1.msra.mxu0 0.0
    %1632 = vmatprep.subr.mxu0 0.0
    %1633 = vmatpush1.msra.mxu0 0.0
    %1634 = vmatprep.subr.mxu0 0.0
    %1635 = vmatpush1.msra.mxu0 0.0
    %1636 = vmatprep.subr.mxu0 0.0
    %1637 = vmatpush1.msra.mxu0 0.0
    %1638 = vmatprep.subr.mxu0 0.0
    %1639 = vmatpush1.msra.mxu0 0.0
    %1640 = vmatprep.subr.mxu0 0.0
    %1641 = vmatpush1.msra.mxu0 0.0
    %1642 = vmatprep.subr.mxu0 0.0
    %1643 = vmatpush1.msra.mxu0 0.0
    %1644 = vmatprep.subr.mxu0 0.0
    %1645 = vmatpush1.msra.mxu0 0.0
    %1646 = vmatprep.mubr.f32.mxu0 0.0
    %1647 = vmatmul.mubr.f32.gmra.mrb[0].mxu0 %v1446
    %v1648 = vpop.f32.mrb[0].mxu0
    %v1649 = vadd.f32 0.0, %v1648
    %v1650 = vpop.f32.mrb[0].mxu0
    %1651 = vdwg.mxu0
    %v1653 = vrot.slane %v1649, 4
    %v1654 = vrot.slane %v1649, 5
    %v1657 = vadd.f32 %v171, %v1653
    %v1658 = vadd.f32 %v176, %v1654
    %v1659 = vxor.u32 %v1657, 2147483648
    %v1660 = vxor.u32 %v1658, 2147483648
    %v1661 = vmul.f32 %v1659, 1.442695
    %v1662 = vpow.pop %v1661
    %v1663 = vmul.f32 %v1660, 1.442695
    %v1664 = vpow.pop %v1663
    %v1665 = vadd.f32 %v1662, 1.0
    %v1666 = vadd.f32 %v1664, 1.0
    %v1667 = vrcp.pop %v1665
    %v1668 = vmul.f32 1.0, %v1667
    %v1669 = vrcp.pop %v1666
    %v1670 = vmul.f32 1.0, %v1669
    %v1671 = vtanh.pop %v1657
    %v1672 = vtanh.pop %v1658
    %v1675 = vrot.slane %v1351, 7
    %v1676 = vrot.slane %v1352, 7
    %v1679 = vmul.f32 %v1668, %v1675
    %v1680 = vmul.f32 %v1670, %v1676
    %1683 = vrot.lane.b32.xlu0 %v1671, 64
    %v1684 = vpop.permute.xlu0 %1683
    %1685 = vrot.lane.b32.xlu0 %v1672, 64
    %v1686 = vpop.permute.xlu0 %1685
    %v1689 = vmul.f32 %v1668, %v1684
    %v1690 = vmul.f32 %v1670, %v1686
    %1693 = vrot.lane.b32.xlu0 %v1689, 32
    %v1694 = vpop.permute.xlu0 %1693
    %1695 = vrot.lane.b32.xlu0 %v1690, 32
    %v1696 = vpop.permute.xlu0 %1695
    %v1699 = vadd.f32 %v1679, %v1694
    %v1700 = vadd.f32 %v1680, %v1696
    %v1701 = vtanh.pop %v1699
    %v1702 = vtanh.pop %v1700
    %1705 = vrot.lane.b32.xlu0 %v1701, 64
    %v1706 = vpop.permute.xlu0 %1705
    %1707 = vrot.lane.b32.xlu0 %v1702, 64
    %v1708 = vpop.permute.xlu0 %1707
    %v1711 = vmul.f32 %v1668, %v1706
    %v1712 = vmul.f32 %v1670, %v1708
    %1713 = vrot.lane.b32.xlu0 %v1542, 32
    %v1714 = vpop.permute.xlu0 %1713
    %v1715 = vsel %vm192, %v1714, 0
    %1717 = vmatprep.subr.mxu0 0.0
    %1718 = vmatpush1.msra.mxu0 %v187
    %1719 = vmatprep.subr.mxu0 0.0
    %1720 = vmatpush1.msra.mxu0 %v188
    %1721 = vmatprep.subr.mxu0 0.0
    %1722 = vmatpush1.msra.mxu0 %v189
    %1723 = vmatprep.subr.mxu0 0.0
    %1724 = vmatpush1.msra.mxu0 %v190
    %1725 = vmatprep.subr.mxu0 0.0
    %1726 = vmatpush1.msra.mxu0 0.0
    %1727 = vmatprep.subr.mxu0 0.0
    %1728 = vmatpush1.msra.mxu0 0.0
    %1729 = vmatprep.subr.mxu0 0.0
    %1730 = vmatpush1.msra.mxu0 0.0
    %1731 = vmatprep.subr.mxu0 0.0
    %1732 = vmatpush1.msra.mxu0 0.0
    %1733 = vmatprep.subr.mxu0 0.0
    %1734 = vmatpush1.msra.mxu0 0.0
    %1735 = vmatprep.subr.mxu0 0.0
    %1736 = vmatpush1.msra.mxu0 0.0
    %1737 = vmatprep.subr.mxu0 0.0
    %1738 = vmatpush1.msra.mxu0 0.0
    %1739 = vmatprep.subr.mxu0 0.0
    %1740 = vmatpush1.msra.mxu0 0.0
    %1741 = vmatprep.subr.mxu0 0.0
    %1742 = vmatpush1.msra.mxu0 0.0
    %1743 = vmatprep.subr.mxu0 0.0
    %1744 = vmatpush1.msra.mxu0 0.0
    %1745 = vmatprep.subr.mxu0 0.0
    %1746 = vmatpush1.msra.mxu0 0.0
    %1747 = vmatprep.subr.mxu0 0.0
    %1748 = vmatpush1.msra.mxu0 0.0
    %1749 = vmatprep.subr.mxu0 0.0
    %1750 = vmatpush1.msra.mxu0 0.0
    %1751 = vmatprep.subr.mxu0 0.0
    %1752 = vmatpush1.msra.mxu0 0.0
    %1753 = vmatprep.subr.mxu0 0.0
    %1754 = vmatpush1.msra.mxu0 0.0
    %1755 = vmatprep.subr.mxu0 0.0
    %1756 = vmatpush1.msra.mxu0 0.0
    %1757 = vmatprep.subr.mxu0 0.0
    %1758 = vmatpush1.msra.mxu0 0.0
    %1759 = vmatprep.subr.mxu0 0.0
    %1760 = vmatpush1.msra.mxu0 0.0
    %1761 = vmatprep.subr.mxu0 0.0
    %1762 = vmatpush1.msra.mxu0 0.0
    %1763 = vmatprep.subr.mxu0 0.0
    %1764 = vmatpush1.msra.mxu0 0.0
    %1765 = vmatprep.subr.mxu0 0.0
    %1766 = vmatpush1.msra.mxu0 0.0
    %1767 = vmatprep.subr.mxu0 0.0
    %1768 = vmatpush1.msra.mxu0 0.0
    %1769 = vmatprep.subr.mxu0 0.0
    %1770 = vmatpush1.msra.mxu0 0.0
    %1771 = vmatprep.subr.mxu0 0.0
    %1772 = vmatpush1.msra.mxu0 0.0
    %1773 = vmatprep.subr.mxu0 0.0
    %1774 = vmatpush1.msra.mxu0 0.0
    %1775 = vmatprep.subr.mxu0 0.0
    %1776 = vmatpush1.msra.mxu0 0.0
    %1777 = vmatprep.subr.mxu0 0.0
    %1778 = vmatpush1.msra.mxu0 0.0
    %1779 = vmatprep.subr.mxu0 0.0
    %1780 = vmatpush1.msra.mxu0 0.0
    %1781 = vmatprep.mubr.f32.mxu0 0.0
    %1782 = vmatmul.mubr.f32.gmra.mrb[0].mxu0 %v1715
    %v1783 = vpop.f32.mrb[0].mxu0
    %v1784 = vadd.f32 0.0, %v1783
    %v1785 = vpop.f32.mrb[0].mxu0
    %1786 = vdwg.mxu0
    %v1789 = vrot.slane %v1711, 4
    %v1790 = vrot.slane %v1712, 3
    %v1791 = vsel %vm393, %v1790, %v1789
    %1792 = vrot.lane.b32.xlu0 %v1791, 32
    %v1793 = vpop.permute.xlu0 %1792
    %v1794 = vsel %vm192, %v1793, 0
    %1796 = vmatprep.subr.mxu0 0.0
    %1797 = vmatpush1.msra.mxu0 %v183
    %1798 = vmatprep.subr.mxu0 0.0
    %1799 = vmatpush1.msra.mxu0 %v184
    %1800 = vmatprep.subr.mxu0 0.0
    %1801 = vmatpush1.msra.mxu0 %v185
    %1802 = vmatprep.subr.mxu0 0.0
    %1803 = vmatpush1.msra.mxu0 %v186
    %1804 = vmatprep.subr.mxu0 0.0
    %1805 = vmatpush1.msra.mxu0 0.0
    %1806 = vmatprep.subr.mxu0 0.0
    %1807 = vmatpush1.msra.mxu0 0.0
    %1808 = vmatprep.subr.mxu0 0.0
    %1809 = vmatpush1.msra.mxu0 0.0
    %1810 = vmatprep.subr.mxu0 0.0
    %1811 = vmatpush1.msra.mxu0 0.0
    %1812 = vmatprep.subr.mxu0 0.0
    %1813 = vmatpush1.msra.mxu0 0.0
    %1814 = vmatprep.subr.mxu0 0.0
    %1815 = vmatpush1.msra.mxu0 0.0
    %1816 = vmatprep.subr.mxu0 0.0
    %1817 = vmatpush1.msra.mxu0 0.0
    %1818 = vmatprep.subr.mxu0 0.0
    %1819 = vmatpush1.msra.mxu0 0.0
    %1820 = vmatprep.subr.mxu0 0.0
    %1821 = vmatpush1.msra.mxu0 0.0
    %1822 = vmatprep.subr.mxu0 0.0
    %1823 = vmatpush1.msra.mxu0 0.0
    %1824 = vmatprep.subr.mxu0 0.0
    %1825 = vmatpush1.msra.mxu0 0.0
    %1826 = vmatprep.subr.mxu0 0.0
    %1827 = vmatpush1.msra.mxu0 0.0
    %1828 = vmatprep.subr.mxu0 0.0
    %1829 = vmatpush1.msra.mxu0 0.0
    %1830 = vmatprep.subr.mxu0 0.0
    %1831 = vmatpush1.msra.mxu0 0.0
    %1832 = vmatprep.subr.mxu0 0.0
    %1833 = vmatpush1.msra.mxu0 0.0
    %1834 = vmatprep.subr.mxu0 0.0
    %1835 = vmatpush1.msra.mxu0 0.0
    %1836 = vmatprep.subr.mxu0 0.0
    %1837 = vmatpush1.msra.mxu0 0.0
    %1838 = vmatprep.subr.mxu0 0.0
    %1839 = vmatpush1.msra.mxu0 0.0
    %1840 = vmatprep.subr.mxu0 0.0
    %1841 = vmatpush1.msra.mxu0 0.0
    %1842 = vmatprep.subr.mxu0 0.0
    %1843 = vmatpush1.msra.mxu0 0.0
    %1844 = vmatprep.subr.mxu0 0.0
    %1845 = vmatpush1.msra.mxu0 0.0
    %1846 = vmatprep.subr.mxu0 0.0
    %1847 = vmatpush1.msra.mxu0 0.0
    %1848 = vmatprep.subr.mxu0 0.0
    %1849 = vmatpush1.msra.mxu0 0.0
    %1850 = vmatprep.subr.mxu0 0.0
    %1851 = vmatpush1.msra.mxu0 0.0
    %1852 = vmatprep.subr.mxu0 0.0
    %1853 = vmatpush1.msra.mxu0 0.0
    %1854 = vmatprep.subr.mxu0 0.0
    %1855 = vmatpush1.msra.mxu0 0.0
    %1856 = vmatprep.subr.mxu0 0.0
    %1857 = vmatpush1.msra.mxu0 0.0
    %1858 = vmatprep.subr.mxu0 0.0
    %1859 = vmatpush1.msra.mxu0 0.0
    %1860 = vmatprep.mubr.f32.mxu0 0.0
    %1861 = vmatmul.mubr.f32.gmra.mrb[0].mxu0 %v1794
    %v1862 = vpop.f32.mrb[0].mxu0
    %v1863 = vadd.f32 %v1784, %v1862
    %v1864 = vpop.f32.mrb[0].mxu0
    %1865 = vdwg.mxu0
    %v1866 = vadd.f32 %v1863, %v473
    %v1867 = vxor.u32 %v1866, 2147483648
    %v1868 = vmul.f32 %v1867, 1.442695
    %v1869 = vpow.pop %v1868
    %v1870 = vadd.f32 %v1869, 1.0
    %v1871 = vrcp.pop %v1870
    %v1872 = vmul.f32 1.0, %v1871
    %v1873 = vtanh.pop %v1866
    %v1874 = vmul.f32 %v1872, %v1536
    %1876 = vrot.lane.b32.xlu0 %v1873, 64
    %v1877 = vpop.permute.xlu0 %1876
    %v1879 = vmul.f32 %v1872, %v1877
    %1881 = vrot.lane.b32.xlu0 %v1879, 32
    %v1882 = vpop.permute.xlu0 %1881
    %v1884 = vadd.f32 %v1874, %v1882
    %v1885 = vtanh.pop %v1884
    %1887 = vrot.lane.b32.xlu0 %v1885, 64
    %v1888 = vpop.permute.xlu0 %1887
    %v1890 = vmul.f32 %v1872, %v1888
    %v1893 = vunpack.c.l.s4 1966171168
    %v1894 = vunpack.c.0.s8 %v1893
    %v1895 = vlaneseq
    %v1896 = vshrl.u32 %v1895, 7
    %v1897 = vsub.s32 %v1894, %v1896
    %v1898 = vrot.slane %v1890, %v1897
    %v1899 = vcombine.high %v1898, %v1898
    %v1901 = vunpack.c.l.s4 1966171168
    %v1902 = vunpack.c.0.s8 %v1901
    %v1903 = vlaneseq
    %v1904 = vshrl.u32 %v1903, 7
    %v1905 = vsub.s32 %v1902, %v1904
    %v1906 = vrot.slane %v1898, %v1905
    %v1908 = vunpack.c.l.s4 1966171168
    %v1909 = vunpack.c.0.s8 %v1908
    %v1910 = vlaneseq
    %v1911 = vshrl.u32 %v1910, 7
    %v1912 = vsub.s32 %v1909, %v1911
    %v1913 = vrot.slane %v1899, %v1912
    %v1914 = vlaneseq
    %v1915 = vshrl.u32 %v1914, 7
    %v1916 = vsub.s32 0, %v1915
    %v1917 = vrot.slane %v1906, %v1916
    %v1918 = vlaneseq
    %v1919 = vshrl.u32 %v1918, 7
    %v1920 = vsub.s32 0, %v1919
    %v1921 = vrot.slane %v1913, %v1920
    %1922 = vrot.lane.b32.xlu0 %v1917, 32
    %v1923 = vpop.permute.xlu0 %1922
    %1924 = vrot.lane.b32.xlu0 %v1921, 32
    %v1925 = vpop.permute.xlu0 %1924
    %1928 = vst.msk [vmem:[#allocation2 + $0x4] sm:$0x1] %vm537, %v1923
    %1929 = vst.msk [vmem:[#allocation2 + $0xc] sm:$0x1] %vm537, %v1925
    %1930 = vmatprep.subr.mxu0 0.0
    %1931 = vmatpush1.msra.mxu0 %v179
    %1932 = vmatprep.subr.mxu0 0.0
    %1933 = vmatpush1.msra.mxu0 %v180
    %1934 = vmatprep.subr.mxu0 0.0
    %1935 = vmatpush1.msra.mxu0 %v181
    %1936 = vmatprep.subr.mxu0 0.0
    %1937 = vmatpush1.msra.mxu0 %v182
    %1938 = vmatprep.subr.mxu0 0.0
    %1939 = vmatpush1.msra.mxu0 0.0
    %1940 = vmatprep.subr.mxu0 0.0
    %1941 = vmatpush1.msra.mxu0 0.0
    %1942 = vmatprep.subr.mxu0 0.0
    %1943 = vmatpush1.msra.mxu0 0.0
    %1944 = vmatprep.subr.mxu0 0.0
    %1945 = vmatpush1.msra.mxu0 0.0
    %1946 = vmatprep.subr.mxu0 0.0
    %1947 = vmatpush1.msra.mxu0 0.0
    %1948 = vmatprep.subr.mxu0 0.0
    %1949 = vmatpush1.msra.mxu0 0.0
    %1950 = vmatprep.subr.mxu0 0.0
    %1951 = vmatpush1.msra.mxu0 0.0
    %1952 = vmatprep.subr.mxu0 0.0
    %1953 = vmatpush1.msra.mxu0 0.0
    %1954 = vmatprep.subr.mxu0 0.0
    %1955 = vmatpush1.msra.mxu0 0.0
    %1956 = vmatprep.subr.mxu0 0.0
    %1957 = vmatpush1.msra.mxu0 0.0
    %1958 = vmatprep.subr.mxu0 0.0
    %1959 = vmatpush1.msra.mxu0 0.0
    %1960 = vmatprep.subr.mxu0 0.0
    %1961 = vmatpush1.msra.mxu0 0.0
    %1962 = vmatprep.subr.mxu0 0.0
    %1963 = vmatpush1.msra.mxu0 0.0
    %1964 = vmatprep.subr.mxu0 0.0
    %1965 = vmatpush1.msra.mxu0 0.0
    %1966 = vmatprep.subr.mxu0 0.0
    %1967 = vmatpush1.msra.mxu0 0.0
    %1968 = vmatprep.subr.mxu0 0.0
    %1969 = vmatpush1.msra.mxu0 0.0
    %1970 = vmatprep.subr.mxu0 0.0
    %1971 = vmatpush1.msra.mxu0 0.0
    %1972 = vmatprep.subr.mxu0 0.0
    %1973 = vmatpush1.msra.mxu0 0.0
    %1974 = vmatprep.subr.mxu0 0.0
    %1975 = vmatpush1.msra.mxu0 0.0
    %1976 = vmatprep.subr.mxu0 0.0
    %1977 = vmatpush1.msra.mxu0 0.0
    %1978 = vmatprep.subr.mxu0 0.0
    %1979 = vmatpush1.msra.mxu0 0.0
    %1980 = vmatprep.subr.mxu0 0.0
    %1981 = vmatpush1.msra.mxu0 0.0
    %1982 = vmatprep.subr.mxu0 0.0
    %1983 = vmatpush1.msra.mxu0 0.0
    %1984 = vmatprep.subr.mxu0 0.0
    %1985 = vmatpush1.msra.mxu0 0.0
    %1986 = vmatprep.subr.mxu0 0.0
    %1987 = vmatpush1.msra.mxu0 0.0
    %1988 = vmatprep.subr.mxu0 0.0
    %1989 = vmatpush1.msra.mxu0 0.0
    %1990 = vmatprep.subr.mxu0 0.0
    %1991 = vmatpush1.msra.mxu0 0.0
    %1992 = vmatprep.subr.mxu0 0.0
    %1993 = vmatpush1.msra.mxu0 0.0
    %1994 = vmatprep.mubr.f32.mxu0 0.0
    %1995 = vmatmul.mubr.f32.gmra.mrb[0].mxu0 %v1794
    %v1996 = vpop.f32.mrb[0].mxu0
    %v1997 = vadd.f32 0.0, %v1996
    %v1998 = vpop.f32.mrb[0].mxu0
    %1999 = vdwg.mxu0
    %v2001 = vrot.slane %v1997, 3
    %v2002 = vrot.slane %v1997, 4
    %v2005 = vadd.f32 %v171, %v2001
    %v2006 = vadd.f32 %v176, %v2002
    %v2007 = vxor.u32 %v2005, 2147483648
    %v2008 = vxor.u32 %v2006, 2147483648
    %v2009 = vmul.f32 %v2007, 1.442695
    %v2010 = vpow.pop %v2009
    %v2011 = vmul.f32 %v2008, 1.442695
    %v2012 = vpow.pop %v2011
    %v2013 = vadd.f32 %v2010, 1.0
    %v2014 = vadd.f32 %v2012, 1.0
    %v2015 = vrcp.pop %v2013
    %v2016 = vmul.f32 1.0, %v2015
    %v2017 = vrcp.pop %v2014
    %v2018 = vmul.f32 1.0, %v2017
    %v2019 = vtanh.pop %v2005
    %v2020 = vtanh.pop %v2006
    %v2023 = vrot.slane %v1699, 7
    %v2024 = vrot.slane %v1700, 7
    %v2027 = vmul.f32 %v2016, %v2023
    %v2028 = vmul.f32 %v2018, %v2024
    %2031 = vrot.lane.b32.xlu0 %v2019, 64
    %v2032 = vpop.permute.xlu0 %2031
    %2033 = vrot.lane.b32.xlu0 %v2020, 64
    %v2034 = vpop.permute.xlu0 %2033
    %v2037 = vmul.f32 %v2016, %v2032
    %v2038 = vmul.f32 %v2018, %v2034
    %2041 = vrot.lane.b32.xlu0 %v2037, 32
    %v2042 = vpop.permute.xlu0 %2041
    %2043 = vrot.lane.b32.xlu0 %v2038, 32
    %v2044 = vpop.permute.xlu0 %2043
    %v2047 = vadd.f32 %v2027, %v2042
    %v2048 = vadd.f32 %v2028, %v2044
    %v2049 = vtanh.pop %v2047
    %v2050 = vtanh.pop %v2048
    %2053 = vrot.lane.b32.xlu0 %v2049, 64
    %v2054 = vpop.permute.xlu0 %2053
    %2055 = vrot.lane.b32.xlu0 %v2050, 64
    %v2056 = vpop.permute.xlu0 %2055
    %v2059 = vmul.f32 %v2016, %v2054
    %v2060 = vmul.f32 %v2018, %v2056
    %2061 = vrot.lane.b32.xlu0 %v1890, 32
    %v2062 = vpop.permute.xlu0 %2061
    %v2063 = vsel %vm192, %v2062, 0
    %2065 = vmatprep.subr.mxu0 0.0
    %2066 = vmatpush1.msra.mxu0 %v187
    %2067 = vmatprep.subr.mxu0 0.0
    %2068 = vmatpush1.msra.mxu0 %v188
    %2069 = vmatprep.subr.mxu0 0.0
    %2070 = vmatpush1.msra.mxu0 %v189
    %2071 = vmatprep.subr.mxu0 0.0
    %2072 = vmatpush1.msra.mxu0 %v190
    %2073 = vmatprep.subr.mxu0 0.0
    %2074 = vmatpush1.msra.mxu0 0.0
    %2075 = vmatprep.subr.mxu0 0.0
    %2076 = vmatpush1.msra.mxu0 0.0
    %2077 = vmatprep.subr.mxu0 0.0
    %2078 = vmatpush1.msra.mxu0 0.0
    %2079 = vmatprep.subr.mxu0 0.0
    %2080 = vmatpush1.msra.mxu0 0.0
    %2081 = vmatprep.subr.mxu0 0.0
    %2082 = vmatpush1.msra.mxu0 0.0
    %2083 = vmatprep.subr.mxu0 0.0
    %2084 = vmatpush1.msra.mxu0 0.0
    %2085 = vmatprep.subr.mxu0 0.0
    %2086 = vmatpush1.msra.mxu0 0.0
    %2087 = vmatprep.subr.mxu0 0.0
    %2088 = vmatpush1.msra.mxu0 0.0
    %2089 = vmatprep.subr.mxu0 0.0
    %2090 = vmatpush1.msra.mxu0 0.0
    %2091 = vmatprep.subr.mxu0 0.0
    %2092 = vmatpush1.msra.mxu0 0.0
    %2093 = vmatprep.subr.mxu0 0.0
    %2094 = vmatpush1.msra.mxu0 0.0
    %2095 = vmatprep.subr.mxu0 0.0
    %2096 = vmatpush1.msra.mxu0 0.0
    %2097 = vmatprep.subr.mxu0 0.0
    %2098 = vmatpush1.msra.mxu0 0.0
    %2099 = vmatprep.subr.mxu0 0.0
    %2100 = vmatpush1.msra.mxu0 0.0
    %2101 = vmatprep.subr.mxu0 0.0
    %2102 = vmatpush1.msra.mxu0 0.0
    %2103 = vmatprep.subr.mxu0 0.0
    %2104 = vmatpush1.msra.mxu0 0.0
    %2105 = vmatprep.subr.mxu0 0.0
    %2106 = vmatpush1.msra.mxu0 0.0
    %2107 = vmatprep.subr.mxu0 0.0
    %2108 = vmatpush1.msra.mxu0 0.0
    %2109 = vmatprep.subr.mxu0 0.0
    %2110 = vmatpush1.msra.mxu0 0.0
    %2111 = vmatprep.subr.mxu0 0.0
    %2112 = vmatpush1.msra.mxu0 0.0
    %2113 = vmatprep.subr.mxu0 0.0
    %2114 = vmatpush1.msra.mxu0 0.0
    %2115 = vmatprep.subr.mxu0 0.0
    %2116 = vmatpush1.msra.mxu0 0.0
    %2117 = vmatprep.subr.mxu0 0.0
    %2118 = vmatpush1.msra.mxu0 0.0
    %2119 = vmatprep.subr.mxu0 0.0
    %2120 = vmatpush1.msra.mxu0 0.0
    %2121 = vmatprep.subr.mxu0 0.0
    %2122 = vmatpush1.msra.mxu0 0.0
    %2123 = vmatprep.subr.mxu0 0.0
    %2124 = vmatpush1.msra.mxu0 0.0
    %2125 = vmatprep.subr.mxu0 0.0
    %2126 = vmatpush1.msra.mxu0 0.0
    %2127 = vmatprep.subr.mxu0 0.0
    %2128 = vmatpush1.msra.mxu0 0.0
    %2129 = vmatprep.mubr.f32.mxu0 0.0
    %2130 = vmatmul.mubr.f32.gmra.mrb[0].mxu0 %v2063
    %v2131 = vpop.f32.mrb[0].mxu0
    %v2132 = vadd.f32 0.0, %v2131
    %v2133 = vpop.f32.mrb[0].mxu0
    %2134 = vdwg.mxu0
    %v2137 = vrot.slane %v2059, 5
    %v2138 = vrot.slane %v2060, 4
    %v2139 = vsel %vm393, %v2138, %v2137
    %2140 = vrot.lane.b32.xlu0 %v2139, 32
    %v2141 = vpop.permute.xlu0 %2140
    %v2142 = vsel %vm192, %v2141, 0
    %2144 = vmatprep.subr.mxu0 0.0
    %2145 = vmatpush1.msra.mxu0 %v183
    %2146 = vmatprep.subr.mxu0 0.0
    %2147 = vmatpush1.msra.mxu0 %v184
    %2148 = vmatprep.subr.mxu0 0.0
    %2149 = vmatpush1.msra.mxu0 %v185
    %2150 = vmatprep.subr.mxu0 0.0
    %2151 = vmatpush1.msra.mxu0 %v186
    %2152 = vmatprep.subr.mxu0 0.0
    %2153 = vmatpush1.msra.mxu0 0.0
    %2154 = vmatprep.subr.mxu0 0.0
    %2155 = vmatpush1.msra.mxu0 0.0
    %2156 = vmatprep.subr.mxu0 0.0
    %2157 = vmatpush1.msra.mxu0 0.0
    %2158 = vmatprep.subr.mxu0 0.0
    %2159 = vmatpush1.msra.mxu0 0.0
    %2160 = vmatprep.subr.mxu0 0.0
    %2161 = vmatpush1.msra.mxu0 0.0
    %2162 = vmatprep.subr.mxu0 0.0
    %2163 = vmatpush1.msra.mxu0 0.0
    %2164 = vmatprep.subr.mxu0 0.0
    %2165 = vmatpush1.msra.mxu0 0.0
    %2166 = vmatprep.subr.mxu0 0.0
    %2167 = vmatpush1.msra.mxu0 0.0
    %2168 = vmatprep.subr.mxu0 0.0
    %2169 = vmatpush1.msra.mxu0 0.0
    %2170 = vmatprep.subr.mxu0 0.0
    %2171 = vmatpush1.msra.mxu0 0.0
    %2172 = vmatprep.subr.mxu0 0.0
    %2173 = vmatpush1.msra.mxu0 0.0
    %2174 = vmatprep.subr.mxu0 0.0
    %2175 = vmatpush1.msra.mxu0 0.0
    %2176 = vmatprep.subr.mxu0 0.0
    %2177 = vmatpush1.msra.mxu0 0.0
    %2178 = vmatprep.subr.mxu0 0.0
    %2179 = vmatpush1.msra.mxu0 0.0
    %2180 = vmatprep.subr.mxu0 0.0
    %2181 = vmatpush1.msra.mxu0 0.0
    %2182 = vmatprep.subr.mxu0 0.0
    %2183 = vmatpush1.msra.mxu0 0.0
    %2184 = vmatprep.subr.mxu0 0.0
    %2185 = vmatpush1.msra.mxu0 0.0
    %2186 = vmatprep.subr.mxu0 0.0
    %2187 = vmatpush1.msra.mxu0 0.0
    %2188 = vmatprep.subr.mxu0 0.0
    %2189 = vmatpush1.msra.mxu0 0.0
    %2190 = vmatprep.subr.mxu0 0.0
    %2191 = vmatpush1.msra.mxu0 0.0
    %2192 = vmatprep.subr.mxu0 0.0
    %2193 = vmatpush1.msra.mxu0 0.0
    %2194 = vmatprep.subr.mxu0 0.0
    %2195 = vmatpush1.msra.mxu0 0.0
    %2196 = vmatprep.subr.mxu0 0.0
    %2197 = vmatpush1.msra.mxu0 0.0
    %2198 = vmatprep.subr.mxu0 0.0
    %2199 = vmatpush1.msra.mxu0 0.0
    %2200 = vmatprep.subr.mxu0 0.0
    %2201 = vmatpush1.msra.mxu0 0.0
    %2202 = vmatprep.subr.mxu0 0.0
    %2203 = vmatpush1.msra.mxu0 0.0
    %2204 = vmatprep.subr.mxu0 0.0
    %2205 = vmatpush1.msra.mxu0 0.0
    %2206 = vmatprep.subr.mxu0 0.0
    %2207 = vmatpush1.msra.mxu0 0.0
    %2208 = vmatprep.mubr.f32.mxu0 0.0
    %2209 = vmatmul.mubr.f32.gmra.mrb[0].mxu0 %v2142
    %v2210 = vpop.f32.mrb[0].mxu0
    %v2211 = vadd.f32 %v2132, %v2210
    %v2212 = vpop.f32.mrb[0].mxu0
    %2213 = vdwg.mxu0
    %v2214 = vadd.f32 %v2211, %v473
    %v2215 = vxor.u32 %v2214, 2147483648
    %v2216 = vmul.f32 %v2215, 1.442695
    %v2217 = vpow.pop %v2216
    %v2218 = vadd.f32 %v2217, 1.0
    %v2219 = vrcp.pop %v2218
    %v2220 = vmul.f32 1.0, %v2219
    %v2221 = vtanh.pop %v2214
    %v2222 = vmul.f32 %v2220, %v1884
    %2224 = vrot.lane.b32.xlu0 %v2221, 64
    %v2225 = vpop.permute.xlu0 %2224
    %v2227 = vmul.f32 %v2220, %v2225
    %2229 = vrot.lane.b32.xlu0 %v2227, 32
    %v2230 = vpop.permute.xlu0 %2229
    %v2232 = vadd.f32 %v2222, %v2230
    %v2233 = vtanh.pop %v2232
    %2235 = vrot.lane.b32.xlu0 %v2233, 64
    %v2236 = vpop.permute.xlu0 %2235
    %v2238 = vmul.f32 %v2220, %v2236
    %v2241 = vunpack.c.l.s4 1966171168
    %v2242 = vunpack.c.0.s8 %v2241
    %v2243 = vlaneseq
    %v2244 = vshrl.u32 %v2243, 7
    %v2245 = vsub.s32 %v2242, %v2244
    %v2246 = vrot.slane %v2238, %v2245
    %v2247 = vcombine.high %v2246, %v2246
    %v2249 = vunpack.c.l.s4 1966171168
    %v2250 = vunpack.c.0.s8 %v2249
    %v2251 = vlaneseq
    %v2252 = vshrl.u32 %v2251, 7
    %v2253 = vsub.s32 %v2250, %v2252
    %v2254 = vrot.slane %v2246, %v2253
    %v2256 = vunpack.c.l.s4 1966171168
    %v2257 = vunpack.c.0.s8 %v2256
    %v2258 = vlaneseq
    %v2259 = vshrl.u32 %v2258, 7
    %v2260 = vsub.s32 %v2257, %v2259
    %v2261 = vrot.slane %v2247, %v2260
    %v2262 = vlaneseq
    %v2263 = vshrl.u32 %v2262, 7
    %v2264 = vsub.s32 0, %v2263
    %v2265 = vrot.slane %v2254, %v2264
    %v2266 = vlaneseq
    %v2267 = vshrl.u32 %v2266, 7
    %v2268 = vsub.s32 0, %v2267
    %v2269 = vrot.slane %v2261, %v2268
    %2270 = vrot.lane.b32.xlu0 %v2265, 32
    %v2271 = vpop.permute.xlu0 %2270
    %2272 = vrot.lane.b32.xlu0 %v2269, 32
    %v2273 = vpop.permute.xlu0 %2272
    %2276 = vst.msk [vmem:[#allocation2 + $0x5] sm:$0x1] %vm537, %v2271
    %2277 = vst.msk [vmem:[#allocation2 + $0xd] sm:$0x1] %vm537, %v2273
    %2278 = vmatprep.subr.mxu0 0.0
    %2279 = vmatpush1.msra.mxu0 %v179
    %2280 = vmatprep.subr.mxu0 0.0
    %2281 = vmatpush1.msra.mxu0 %v180
    %2282 = vmatprep.subr.mxu0 0.0
    %2283 = vmatpush1.msra.mxu0 %v181
    %2284 = vmatprep.subr.mxu0 0.0
    %2285 = vmatpush1.msra.mxu0 %v182
    %2286 = vmatprep.subr.mxu0 0.0
    %2287 = vmatpush1.msra.mxu0 0.0
    %2288 = vmatprep.subr.mxu0 0.0
    %2289 = vmatpush1.msra.mxu0 0.0
    %2290 = vmatprep.subr.mxu0 0.0
    %2291 = vmatpush1.msra.mxu0 0.0
    %2292 = vmatprep.subr.mxu0 0.0
    %2293 = vmatpush1.msra.mxu0 0.0
    %2294 = vmatprep.subr.mxu0 0.0
    %2295 = vmatpush1.msra.mxu0 0.0
    %2296 = vmatprep.subr.mxu0 0.0
    %2297 = vmatpush1.msra.mxu0 0.0
    %2298 = vmatprep.subr.mxu0 0.0
    %2299 = vmatpush1.msra.mxu0 0.0
    %2300 = vmatprep.subr.mxu0 0.0
    %2301 = vmatpush1.msra.mxu0 0.0
    %2302 = vmatprep.subr.mxu0 0.0
    %2303 = vmatpush1.msra.mxu0 0.0
    %2304 = vmatprep.subr.mxu0 0.0
    %2305 = vmatpush1.msra.mxu0 0.0
    %2306 = vmatprep.subr.mxu0 0.0
    %2307 = vmatpush1.msra.mxu0 0.0
    %2308 = vmatprep.subr.mxu0 0.0
    %2309 = vmatpush1.msra.mxu0 0.0
    %2310 = vmatprep.subr.mxu0 0.0
    %2311 = vmatpush1.msra.mxu0 0.0
    %2312 = vmatprep.subr.mxu0 0.0
    %2313 = vmatpush1.msra.mxu0 0.0
    %2314 = vmatprep.subr.mxu0 0.0
    %2315 = vmatpush1.msra.mxu0 0.0
    %2316 = vmatprep.subr.mxu0 0.0
    %2317 = vmatpush1.msra.mxu0 0.0
    %2318 = vmatprep.subr.mxu0 0.0
    %2319 = vmatpush1.msra.mxu0 0.0
    %2320 = vmatprep.subr.mxu0 0.0
    %2321 = vmatpush1.msra.mxu0 0.0
    %2322 = vmatprep.subr.mxu0 0.0
    %2323 = vmatpush1.msra.mxu0 0.0
    %2324 = vmatprep.subr.mxu0 0.0
    %2325 = vmatpush1.msra.mxu0 0.0
    %2326 = vmatprep.subr.mxu0 0.0
    %2327 = vmatpush1.msra.mxu0 0.0
    %2328 = vmatprep.subr.mxu0 0.0
    %2329 = vmatpush1.msra.mxu0 0.0
    %2330 = vmatprep.subr.mxu0 0.0
    %2331 = vmatpush1.msra.mxu0 0.0
    %2332 = vmatprep.subr.mxu0 0.0
    %2333 = vmatpush1.msra.mxu0 0.0
    %2334 = vmatprep.subr.mxu0 0.0
    %2335 = vmatpush1.msra.mxu0 0.0
    %2336 = vmatprep.subr.mxu0 0.0
    %2337 = vmatpush1.msra.mxu0 0.0
    %2338 = vmatprep.subr.mxu0 0.0
    %2339 = vmatpush1.msra.mxu0 0.0
    %2340 = vmatprep.subr.mxu0 0.0
    %2341 = vmatpush1.msra.mxu0 0.0
    %2342 = vmatprep.mubr.f32.mxu0 0.0
    %2343 = vmatmul.mubr.f32.gmra.mrb[0].mxu0 %v2142
    %v2344 = vpop.f32.mrb[0].mxu0
    %v2345 = vadd.f32 0.0, %v2344
    %v2346 = vpop.f32.mrb[0].mxu0
    %2347 = vdwg.mxu0
    %v2349 = vrot.slane %v2345, 2
    %v2350 = vrot.slane %v2345, 3
    %v2353 = vadd.f32 %v171, %v2349
    %v2354 = vadd.f32 %v176, %v2350
    %v2355 = vxor.u32 %v2353, 2147483648
    %v2356 = vxor.u32 %v2354, 2147483648
    %v2357 = vmul.f32 %v2355, 1.442695
    %v2358 = vpow.pop %v2357
    %v2359 = vmul.f32 %v2356, 1.442695
    %v2360 = vpow.pop %v2359
    %v2361 = vadd.f32 %v2358, 1.0
    %v2362 = vadd.f32 %v2360, 1.0
    %v2363 = vrcp.pop %v2361
    %v2364 = vmul.f32 1.0, %v2363
    %v2365 = vrcp.pop %v2362
    %v2366 = vmul.f32 1.0, %v2365
    %v2367 = vtanh.pop %v2353
    %v2368 = vtanh.pop %v2354
    %v2371 = vrot.slane %v2047, 7
    %v2372 = vrot.slane %v2048, 7
    %v2375 = vmul.f32 %v2364, %v2371
    %v2376 = vmul.f32 %v2366, %v2372
    %2379 = vrot.lane.b32.xlu0 %v2367, 64
    %v2380 = vpop.permute.xlu0 %2379
    %2381 = vrot.lane.b32.xlu0 %v2368, 64
    %v2382 = vpop.permute.xlu0 %2381
    %v2385 = vmul.f32 %v2364, %v2380
    %v2386 = vmul.f32 %v2366, %v2382
    %2389 = vrot.lane.b32.xlu0 %v2385, 32
    %v2390 = vpop.permute.xlu0 %2389
    %2391 = vrot.lane.b32.xlu0 %v2386, 32
    %v2392 = vpop.permute.xlu0 %2391
    %v2395 = vadd.f32 %v2375, %v2390
    %v2396 = vadd.f32 %v2376, %v2392
    %v2397 = vtanh.pop %v2395
    %v2398 = vtanh.pop %v2396
    %2401 = vrot.lane.b32.xlu0 %v2397, 64
    %v2402 = vpop.permute.xlu0 %2401
    %2403 = vrot.lane.b32.xlu0 %v2398, 64
    %v2404 = vpop.permute.xlu0 %2403
    %v2407 = vmul.f32 %v2364, %v2402
    %v2408 = vmul.f32 %v2366, %v2404
    %2409 = vrot.lane.b32.xlu0 %v2238, 32
    %v2410 = vpop.permute.xlu0 %2409
    %v2411 = vsel %vm192, %v2410, 0
    %2413 = vmatprep.subr.mxu0 0.0
    %2414 = vmatpush1.msra.mxu0 %v187
    %2415 = vmatprep.subr.mxu0 0.0
    %2416 = vmatpush1.msra.mxu0 %v188
    %2417 = vmatprep.subr.mxu0 0.0
    %2418 = vmatpush1.msra.mxu0 %v189
    %2419 = vmatprep.subr.mxu0 0.0
    %2420 = vmatpush1.msra.mxu0 %v190
    %2421 = vmatprep.subr.mxu0 0.0
    %2422 = vmatpush1.msra.mxu0 0.0
    %2423 = vmatprep.subr.mxu0 0.0
    %2424 = vmatpush1.msra.mxu0 0.0
    %2425 = vmatprep.subr.mxu0 0.0
    %2426 = vmatpush1.msra.mxu0 0.0
    %2427 = vmatprep.subr.mxu0 0.0
    %2428 = vmatpush1.msra.mxu0 0.0
    %2429 = vmatprep.subr.mxu0 0.0
    %2430 = vmatpush1.msra.mxu0 0.0
    %2431 = vmatprep.subr.mxu0 0.0
    %2432 = vmatpush1.msra.mxu0 0.0
    %2433 = vmatprep.subr.mxu0 0.0
    %2434 = vmatpush1.msra.mxu0 0.0
    %2435 = vmatprep.subr.mxu0 0.0
    %2436 = vmatpush1.msra.mxu0 0.0
    %2437 = vmatprep.subr.mxu0 0.0
    %2438 = vmatpush1.msra.mxu0 0.0
    %2439 = vmatprep.subr.mxu0 0.0
    %2440 = vmatpush1.msra.mxu0 0.0
    %2441 = vmatprep.subr.mxu0 0.0
    %2442 = vmatpush1.msra.mxu0 0.0
    %2443 = vmatprep.subr.mxu0 0.0
    %2444 = vmatpush1.msra.mxu0 0.0
    %2445 = vmatprep.subr.mxu0 0.0
    %2446 = vmatpush1.msra.mxu0 0.0
    %2447 = vmatprep.subr.mxu0 0.0
    %2448 = vmatpush1.msra.mxu0 0.0
    %2449 = vmatprep.subr.mxu0 0.0
    %2450 = vmatpush1.msra.mxu0 0.0
    %2451 = vmatprep.subr.mxu0 0.0
    %2452 = vmatpush1.msra.mxu0 0.0
    %2453 = vmatprep.subr.mxu0 0.0
    %2454 = vmatpush1.msra.mxu0 0.0
    %2455 = vmatprep.subr.mxu0 0.0
    %2456 = vmatpush1.msra.mxu0 0.0
    %2457 = vmatprep.subr.mxu0 0.0
    %2458 = vmatpush1.msra.mxu0 0.0
    %2459 = vmatprep.subr.mxu0 0.0
    %2460 = vmatpush1.msra.mxu0 0.0
    %2461 = vmatprep.subr.mxu0 0.0
    %2462 = vmatpush1.msra.mxu0 0.0
    %2463 = vmatprep.subr.mxu0 0.0
    %2464 = vmatpush1.msra.mxu0 0.0
    %2465 = vmatprep.subr.mxu0 0.0
    %2466 = vmatpush1.msra.mxu0 0.0
    %2467 = vmatprep.subr.mxu0 0.0
    %2468 = vmatpush1.msra.mxu0 0.0
    %2469 = vmatprep.subr.mxu0 0.0
    %2470 = vmatpush1.msra.mxu0 0.0
    %2471 = vmatprep.subr.mxu0 0.0
    %2472 = vmatpush1.msra.mxu0 0.0
    %2473 = vmatprep.subr.mxu0 0.0
    %2474 = vmatpush1.msra.mxu0 0.0
    %2475 = vmatprep.subr.mxu0 0.0
    %2476 = vmatpush1.msra.mxu0 0.0
    %2477 = vmatprep.mubr.f32.mxu0 0.0
    %2478 = vmatmul.mubr.f32.gmra.mrb[0].mxu0 %v2411
    %v2479 = vpop.f32.mrb[0].mxu0
    %v2480 = vadd.f32 0.0, %v2479
    %v2481 = vpop.f32.mrb[0].mxu0
    %2482 = vdwg.mxu0
    %v2485 = vrot.slane %v2407, 6
    %v2486 = vrot.slane %v2408, 5
    %v2487 = vsel %vm393, %v2486, %v2485
    %2488 = vrot.lane.b32.xlu0 %v2487, 32
    %v2489 = vpop.permute.xlu0 %2488
    %v2490 = vsel %vm192, %v2489, 0
    %2492 = vmatprep.subr.mxu0 0.0
    %2493 = vmatpush1.msra.mxu0 %v183
    %2494 = vmatprep.subr.mxu0 0.0
    %2495 = vmatpush1.msra.mxu0 %v184
    %2496 = vmatprep.subr.mxu0 0.0
    %2497 = vmatpush1.msra.mxu0 %v185
    %2498 = vmatprep.subr.mxu0 0.0
    %2499 = vmatpush1.msra.mxu0 %v186
    %2500 = vmatprep.subr.mxu0 0.0
    %2501 = vmatpush1.msra.mxu0 0.0
    %2502 = vmatprep.subr.mxu0 0.0
    %2503 = vmatpush1.msra.mxu0 0.0
    %2504 = vmatprep.subr.mxu0 0.0
    %2505 = vmatpush1.msra.mxu0 0.0
    %2506 = vmatprep.subr.mxu0 0.0
    %2507 = vmatpush1.msra.mxu0 0.0
    %2508 = vmatprep.subr.mxu0 0.0
    %2509 = vmatpush1.msra.mxu0 0.0
    %2510 = vmatprep.subr.mxu0 0.0
    %2511 = vmatpush1.msra.mxu0 0.0
    %2512 = vmatprep.subr.mxu0 0.0
    %2513 = vmatpush1.msra.mxu0 0.0
    %2514 = vmatprep.subr.mxu0 0.0
    %2515 = vmatpush1.msra.mxu0 0.0
    %2516 = vmatprep.subr.mxu0 0.0
    %2517 = vmatpush1.msra.mxu0 0.0
    %2518 = vmatprep.subr.mxu0 0.0
    %2519 = vmatpush1.msra.mxu0 0.0
    %2520 = vmatprep.subr.mxu0 0.0
    %2521 = vmatpush1.msra.mxu0 0.0
    %2522 = vmatprep.subr.mxu0 0.0
    %2523 = vmatpush1.msra.mxu0 0.0
    %2524 = vmatprep.subr.mxu0 0.0
    %2525 = vmatpush1.msra.mxu0 0.0
    %2526 = vmatprep.subr.mxu0 0.0
    %2527 = vmatpush1.msra.mxu0 0.0
    %2528 = vmatprep.subr.mxu0 0.0
    %2529 = vmatpush1.msra.mxu0 0.0
    %2530 = vmatprep.subr.mxu0 0.0
    %2531 = vmatpush1.msra.mxu0 0.0
    %2532 = vmatprep.subr.mxu0 0.0
    %2533 = vmatpush1.msra.mxu0 0.0
    %2534 = vmatprep.subr.mxu0 0.0
    %2535 = vmatpush1.msra.mxu0 0.0
    %2536 = vmatprep.subr.mxu0 0.0
    %2537 = vmatpush1.msra.mxu0 0.0
    %2538 = vmatprep.subr.mxu0 0.0
    %2539 = vmatpush1.msra.mxu0 0.0
    %2540 = vmatprep.subr.mxu0 0.0
    %2541 = vmatpush1.msra.mxu0 0.0
    %2542 = vmatprep.subr.mxu0 0.0
    %2543 = vmatpush1.msra.mxu0 0.0
    %2544 = vmatprep.subr.mxu0 0.0
    %2545 = vmatpush1.msra.mxu0 0.0
    %2546 = vmatprep.subr.mxu0 0.0
    %2547 = vmatpush1.msra.mxu0 0.0
    %2548 = vmatprep.subr.mxu0 0.0
    %2549 = vmatpush1.msra.mxu0 0.0
    %2550 = vmatprep.subr.mxu0 0.0
    %2551 = vmatpush1.msra.mxu0 0.0
    %2552 = vmatprep.subr.mxu0 0.0
    %2553 = vmatpush1.msra.mxu0 0.0
    %2554 = vmatprep.subr.mxu0 0.0
    %2555 = vmatpush1.msra.mxu0 0.0
    %2556 = vmatprep.mubr.f32.mxu0 0.0
    %2557 = vmatmul.mubr.f32.gmra.mrb[0].mxu0 %v2490
    %v2558 = vpop.f32.mrb[0].mxu0
    %v2559 = vadd.f32 %v2480, %v2558
    %v2560 = vpop.f32.mrb[0].mxu0
    %2561 = vdwg.mxu0
    %v2562 = vadd.f32 %v2559, %v473
    %v2563 = vxor.u32 %v2562, 2147483648
    %v2564 = vmul.f32 %v2563, 1.442695
    %v2565 = vpow.pop %v2564
    %v2566 = vadd.f32 %v2565, 1.0
    %v2567 = vrcp.pop %v2566
    %v2568 = vmul.f32 1.0, %v2567
    %v2569 = vtanh.pop %v2562
    %v2570 = vmul.f32 %v2568, %v2232
    %2572 = vrot.lane.b32.xlu0 %v2569, 64
    %v2573 = vpop.permute.xlu0 %2572
    %v2575 = vmul.f32 %v2568, %v2573
    %2577 = vrot.lane.b32.xlu0 %v2575, 32
    %v2578 = vpop.permute.xlu0 %2577
    %v2580 = vadd.f32 %v2570, %v2578
    %v2581 = vtanh.pop %v2580
    %2583 = vrot.lane.b32.xlu0 %v2581, 64
    %v2584 = vpop.permute.xlu0 %2583
    %v2586 = vmul.f32 %v2568, %v2584
    %v2589 = vunpack.c.l.s4 1966171168
    %v2590 = vunpack.c.0.s8 %v2589
    %v2591 = vlaneseq
    %v2592 = vshrl.u32 %v2591, 7
    %v2593 = vsub.s32 %v2590, %v2592
    %v2594 = vrot.slane %v2586, %v2593
    %v2595 = vcombine.high %v2594, %v2594
    %v2597 = vunpack.c.l.s4 1966171168
    %v2598 = vunpack.c.0.s8 %v2597
    %v2599 = vlaneseq
    %v2600 = vshrl.u32 %v2599, 7
    %v2601 = vsub.s32 %v2598, %v2600
    %v2602 = vrot.slane %v2594, %v2601
    %v2604 = vunpack.c.l.s4 1966171168
    %v2605 = vunpack.c.0.s8 %v2604
    %v2606 = vlaneseq
    %v2607 = vshrl.u32 %v2606, 7
    %v2608 = vsub.s32 %v2605, %v2607
    %v2609 = vrot.slane %v2595, %v2608
    %v2610 = vlaneseq
    %v2611 = vshrl.u32 %v2610, 7
    %v2612 = vsub.s32 0, %v2611
    %v2613 = vrot.slane %v2602, %v2612
    %v2614 = vlaneseq
    %v2615 = vshrl.u32 %v2614, 7
    %v2616 = vsub.s32 0, %v2615
    %v2617 = vrot.slane %v2609, %v2616
    %2618 = vrot.lane.b32.xlu0 %v2613, 32
    %v2619 = vpop.permute.xlu0 %2618
    %2620 = vrot.lane.b32.xlu0 %v2617, 32
    %v2621 = vpop.permute.xlu0 %2620
    %2624 = vst.msk [vmem:[#allocation2 + $0x6] sm:$0x1] %vm537, %v2619
    %2625 = vst.msk [vmem:[#allocation2 + $0xe] sm:$0x1] %vm537, %v2621
    %2626 = vmatprep.subr.mxu0 0.0
    %2627 = vmatpush1.msra.mxu0 %v179
    %2628 = vmatprep.subr.mxu0 0.0
    %2629 = vmatpush1.msra.mxu0 %v180
    %2630 = vmatprep.subr.mxu0 0.0
    %2631 = vmatpush1.msra.mxu0 %v181
    %2632 = vmatprep.subr.mxu0 0.0
    %2633 = vmatpush1.msra.mxu0 %v182
    %2634 = vmatprep.subr.mxu0 0.0
    %2635 = vmatpush1.msra.mxu0 0.0
    %2636 = vmatprep.subr.mxu0 0.0
    %2637 = vmatpush1.msra.mxu0 0.0
    %2638 = vmatprep.subr.mxu0 0.0
    %2639 = vmatpush1.msra.mxu0 0.0
    %2640 = vmatprep.subr.mxu0 0.0
    %2641 = vmatpush1.msra.mxu0 0.0
    %2642 = vmatprep.subr.mxu0 0.0
    %2643 = vmatpush1.msra.mxu0 0.0
    %2644 = vmatprep.subr.mxu0 0.0
    %2645 = vmatpush1.msra.mxu0 0.0
    %2646 = vmatprep.subr.mxu0 0.0
    %2647 = vmatpush1.msra.mxu0 0.0
    %2648 = vmatprep.subr.mxu0 0.0
    %2649 = vmatpush1.msra.mxu0 0.0
    %2650 = vmatprep.subr.mxu0 0.0
    %2651 = vmatpush1.msra.mxu0 0.0
    %2652 = vmatprep.subr.mxu0 0.0
    %2653 = vmatpush1.msra.mxu0 0.0
    %2654 = vmatprep.subr.mxu0 0.0
    %2655 = vmatpush1.msra.mxu0 0.0
    %2656 = vmatprep.subr.mxu0 0.0
    %2657 = vmatpush1.msra.mxu0 0.0
    %2658 = vmatprep.subr.mxu0 0.0
    %2659 = vmatpush1.msra.mxu0 0.0
    %2660 = vmatprep.subr.mxu0 0.0
    %2661 = vmatpush1.msra.mxu0 0.0
    %2662 = vmatprep.subr.mxu0 0.0
    %2663 = vmatpush1.msra.mxu0 0.0
    %2664 = vmatprep.subr.mxu0 0.0
    %2665 = vmatpush1.msra.mxu0 0.0
    %2666 = vmatprep.subr.mxu0 0.0
    %2667 = vmatpush1.msra.mxu0 0.0
    %2668 = vmatprep.subr.mxu0 0.0
    %2669 = vmatpush1.msra.mxu0 0.0
    %2670 = vmatprep.subr.mxu0 0.0
    %2671 = vmatpush1.msra.mxu0 0.0
    %2672 = vmatprep.subr.mxu0 0.0
    %2673 = vmatpush1.msra.mxu0 0.0
    %2674 = vmatprep.subr.mxu0 0.0
    %2675 = vmatpush1.msra.mxu0 0.0
    %2676 = vmatprep.subr.mxu0 0.0
    %2677 = vmatpush1.msra.mxu0 0.0
    %2678 = vmatprep.subr.mxu0 0.0
    %2679 = vmatpush1.msra.mxu0 0.0
    %2680 = vmatprep.subr.mxu0 0.0
    %2681 = vmatpush1.msra.mxu0 0.0
    %2682 = vmatprep.subr.mxu0 0.0
    %2683 = vmatpush1.msra.mxu0 0.0
    %2684 = vmatprep.subr.mxu0 0.0
    %2685 = vmatpush1.msra.mxu0 0.0
    %2686 = vmatprep.subr.mxu0 0.0
    %2687 = vmatpush1.msra.mxu0 0.0
    %2688 = vmatprep.subr.mxu0 0.0
    %2689 = vmatpush1.msra.mxu0 0.0
    %2690 = vmatprep.mubr.f32.mxu0 0.0
    %2691 = vmatmul.mubr.f32.gmra.mrb[0].mxu0 %v2490
    %v2692 = vpop.f32.mrb[0].mxu0
    %v2693 = vadd.f32 0.0, %v2692
    %v2694 = vpop.f32.mrb[0].mxu0
    %2695 = vdwg.mxu0
    %v2697 = vrot.slane %v2693, 1
    %v2698 = vrot.slane %v2693, 2
    %v2701 = vadd.f32 %v171, %v2697
    %v2702 = vadd.f32 %v176, %v2698
    %v2703 = vxor.u32 %v2701, 2147483648
    %v2704 = vxor.u32 %v2702, 2147483648
    %v2705 = vmul.f32 %v2703, 1.442695
    %v2706 = vpow.pop %v2705
    %v2707 = vmul.f32 %v2704, 1.442695
    %v2708 = vpow.pop %v2707
    %v2709 = vadd.f32 %v2706, 1.0
    %v2710 = vadd.f32 %v2708, 1.0
    %v2711 = vrcp.pop %v2709
    %v2712 = vmul.f32 1.0, %v2711
    %v2713 = vrcp.pop %v2710
    %v2714 = vmul.f32 1.0, %v2713
    %v2715 = vtanh.pop %v2701
    %v2716 = vtanh.pop %v2702
    %v2719 = vrot.slane %v2395, 7
    %v2720 = vrot.slane %v2396, 7
    %v2723 = vmul.f32 %v2712, %v2719
    %v2724 = vmul.f32 %v2714, %v2720
    %2727 = vrot.lane.b32.xlu0 %v2715, 64
    %v2728 = vpop.permute.xlu0 %2727
    %2729 = vrot.lane.b32.xlu0 %v2716, 64
    %v2730 = vpop.permute.xlu0 %2729
    %v2733 = vmul.f32 %v2712, %v2728
    %v2734 = vmul.f32 %v2714, %v2730
    %2737 = vrot.lane.b32.xlu0 %v2733, 32
    %v2738 = vpop.permute.xlu0 %2737
    %2739 = vrot.lane.b32.xlu0 %v2734, 32
    %v2740 = vpop.permute.xlu0 %2739
    %v2743 = vadd.f32 %v2723, %v2738
    %v2744 = vadd.f32 %v2724, %v2740
    %v2745 = vtanh.pop %v2743
    %v2746 = vtanh.pop %v2744
    %2749 = vrot.lane.b32.xlu0 %v2745, 64
    %v2750 = vpop.permute.xlu0 %2749
    %2751 = vrot.lane.b32.xlu0 %v2746, 64
    %v2752 = vpop.permute.xlu0 %2751
    %v2755 = vmul.f32 %v2712, %v2750
    %v2756 = vmul.f32 %v2714, %v2752
    %2757 = vrot.lane.b32.xlu0 %v2586, 32
    %v2758 = vpop.permute.xlu0 %2757
    %v2759 = vsel %vm192, %v2758, 0
    %2761 = vmatprep.subr.mxu0 0.0
    %2762 = vmatpush1.msra.mxu0 %v187
    %2763 = vmatprep.subr.mxu0 0.0
    %2764 = vmatpush1.msra.mxu0 %v188
    %2765 = vmatprep.subr.mxu0 0.0
    %2766 = vmatpush1.msra.mxu0 %v189
    %2767 = vmatprep.subr.mxu0 0.0
    %2768 = vmatpush1.msra.mxu0 %v190
    %2769 = vmatprep.subr.mxu0 0.0
    %2770 = vmatpush1.msra.mxu0 0.0
    %2771 = vmatprep.subr.mxu0 0.0
    %2772 = vmatpush1.msra.mxu0 0.0
    %2773 = vmatprep.subr.mxu0 0.0
    %2774 = vmatpush1.msra.mxu0 0.0
    %2775 = vmatprep.subr.mxu0 0.0
    %2776 = vmatpush1.msra.mxu0 0.0
    %2777 = vmatprep.subr.mxu0 0.0
    %2778 = vmatpush1.msra.mxu0 0.0
    %2779 = vmatprep.subr.mxu0 0.0
    %2780 = vmatpush1.msra.mxu0 0.0
    %2781 = vmatprep.subr.mxu0 0.0
    %2782 = vmatpush1.msra.mxu0 0.0
    %2783 = vmatprep.subr.mxu0 0.0
    %2784 = vmatpush1.msra.mxu0 0.0
    %2785 = vmatprep.subr.mxu0 0.0
    %2786 = vmatpush1.msra.mxu0 0.0
    %2787 = vmatprep.subr.mxu0 0.0
    %2788 = vmatpush1.msra.mxu0 0.0
    %2789 = vmatprep.subr.mxu0 0.0
    %2790 = vmatpush1.msra.mxu0 0.0
    %2791 = vmatprep.subr.mxu0 0.0
    %2792 = vmatpush1.msra.mxu0 0.0
    %2793 = vmatprep.subr.mxu0 0.0
    %2794 = vmatpush1.msra.mxu0 0.0
    %2795 = vmatprep.subr.mxu0 0.0
    %2796 = vmatpush1.msra.mxu0 0.0
    %2797 = vmatprep.subr.mxu0 0.0
    %2798 = vmatpush1.msra.mxu0 0.0
    %2799 = vmatprep.subr.mxu0 0.0
    %2800 = vmatpush1.msra.mxu0 0.0
    %2801 = vmatprep.subr.mxu0 0.0
    %2802 = vmatpush1.msra.mxu0 0.0
    %2803 = vmatprep.subr.mxu0 0.0
    %2804 = vmatpush1.msra.mxu0 0.0
    %2805 = vmatprep.subr.mxu0 0.0
    %2806 = vmatpush1.msra.mxu0 0.0
    %2807 = vmatprep.subr.mxu0 0.0
    %2808 = vmatpush1.msra.mxu0 0.0
    %2809 = vmatprep.subr.mxu0 0.0
    %2810 = vmatpush1.msra.mxu0 0.0
    %2811 = vmatprep.subr.mxu0 0.0
    %2812 = vmatpush1.msra.mxu0 0.0
    %2813 = vmatprep.subr.mxu0 0.0
    %2814 = vmatpush1.msra.mxu0 0.0
    %2815 = vmatprep.subr.mxu0 0.0
    %2816 = vmatpush1.msra.mxu0 0.0
    %2817 = vmatprep.subr.mxu0 0.0
    %2818 = vmatpush1.msra.mxu0 0.0
    %2819 = vmatprep.subr.mxu0 0.0
    %2820 = vmatpush1.msra.mxu0 0.0
    %2821 = vmatprep.subr.mxu0 0.0
    %2822 = vmatpush1.msra.mxu0 0.0
    %2823 = vmatprep.subr.mxu0 0.0
    %2824 = vmatpush1.msra.mxu0 0.0
    %2825 = vmatprep.mubr.f32.mxu0 0.0
    %2826 = vmatmul.mubr.f32.gmra.mrb[0].mxu0 %v2759
    %v2827 = vpop.f32.mrb[0].mxu0
    %v2828 = vadd.f32 0.0, %v2827
    %v2829 = vpop.f32.mrb[0].mxu0
    %2830 = vdwg.mxu0
    %v2833 = vrot.slane %v2755, 7
    %v2834 = vrot.slane %v2756, 6
    %v2835 = vsel %vm393, %v2834, %v2833
    %2836 = vrot.lane.b32.xlu0 %v2835, 32
    %v2837 = vpop.permute.xlu0 %2836
    %v2838 = vsel %vm192, %v2837, 0
    %2840 = vmatprep.subr.mxu0 0.0
    %2841 = vmatpush1.msra.mxu0 %v183
    %2842 = vmatprep.subr.mxu0 0.0
    %2843 = vmatpush1.msra.mxu0 %v184
    %2844 = vmatprep.subr.mxu0 0.0
    %2845 = vmatpush1.msra.mxu0 %v185
    %2846 = vmatprep.subr.mxu0 0.0
    %2847 = vmatpush1.msra.mxu0 %v186
    %2848 = vmatprep.subr.mxu0 0.0
    %2849 = vmatpush1.msra.mxu0 0.0
    %2850 = vmatprep.subr.mxu0 0.0
    %2851 = vmatpush1.msra.mxu0 0.0
    %2852 = vmatprep.subr.mxu0 0.0
    %2853 = vmatpush1.msra.mxu0 0.0
    %2854 = vmatprep.subr.mxu0 0.0
    %2855 = vmatpush1.msra.mxu0 0.0
    %2856 = vmatprep.subr.mxu0 0.0
    %2857 = vmatpush1.msra.mxu0 0.0
    %2858 = vmatprep.subr.mxu0 0.0
    %2859 = vmatpush1.msra.mxu0 0.0
    %2860 = vmatprep.subr.mxu0 0.0
    %2861 = vmatpush1.msra.mxu0 0.0
    %2862 = vmatprep.subr.mxu0 0.0
    %2863 = vmatpush1.msra.mxu0 0.0
    %2864 = vmatprep.subr.mxu0 0.0
    %2865 = vmatpush1.msra.mxu0 0.0
    %2866 = vmatprep.subr.mxu0 0.0
    %2867 = vmatpush1.msra.mxu0 0.0
    %2868 = vmatprep.subr.mxu0 0.0
    %2869 = vmatpush1.msra.mxu0 0.0
    %2870 = vmatprep.subr.mxu0 0.0
    %2871 = vmatpush1.msra.mxu0 0.0
    %2872 = vmatprep.subr.mxu0 0.0
    %2873 = vmatpush1.msra.mxu0 0.0
    %2874 = vmatprep.subr.mxu0 0.0
    %2875 = vmatpush1.msra.mxu0 0.0
    %2876 = vmatprep.subr.mxu0 0.0
    %2877 = vmatpush1.msra.mxu0 0.0
    %2878 = vmatprep.subr.mxu0 0.0
    %2879 = vmatpush1.msra.mxu0 0.0
    %2880 = vmatprep.subr.mxu0 0.0
    %2881 = vmatpush1.msra.mxu0 0.0
    %2882 = vmatprep.subr.mxu0 0.0
    %2883 = vmatpush1.msra.mxu0 0.0
    %2884 = vmatprep.subr.mxu0 0.0
    %2885 = vmatpush1.msra.mxu0 0.0
    %2886 = vmatprep.subr.mxu0 0.0
    %2887 = vmatpush1.msra.mxu0 0.0
    %2888 = vmatprep.subr.mxu0 0.0
    %2889 = vmatpush1.msra.mxu0 0.0
    %2890 = vmatprep.subr.mxu0 0.0
    %2891 = vmatpush1.msra.mxu0 0.0
    %2892 = vmatprep.subr.mxu0 0.0
    %2893 = vmatpush1.msra.mxu0 0.0
    %2894 = vmatprep.subr.mxu0 0.0
    %2895 = vmatpush1.msra.mxu0 0.0
    %2896 = vmatprep.subr.mxu0 0.0
    %2897 = vmatpush1.msra.mxu0 0.0
    %2898 = vmatprep.subr.mxu0 0.0
    %2899 = vmatpush1.msra.mxu0 0.0
    %2900 = vmatprep.subr.mxu0 0.0
    %2901 = vmatpush1.msra.mxu0 0.0
    %2902 = vmatprep.subr.mxu0 0.0
    %2903 = vmatpush1.msra.mxu0 0.0
    %2904 = vmatprep.mubr.f32.mxu0 0.0
    %2905 = vmatmul.mubr.f32.gmra.mrb[0].mxu0 %v2838
    %v2906 = vpop.f32.mrb[0].mxu0
    %v2907 = vadd.f32 %v2828, %v2906
    %v2908 = vpop.f32.mrb[0].mxu0
    %2909 = vdwg.mxu0
    %v2910 = vadd.f32 %v2907, %v473
    %v2911 = vxor.u32 %v2910, 2147483648
    %v2912 = vmul.f32 %v2911, 1.442695
    %v2913 = vpow.pop %v2912
    %v2914 = vadd.f32 %v2913, 1.0
    %v2915 = vrcp.pop %v2914
    %v2916 = vmul.f32 1.0, %v2915
    %v2917 = vtanh.pop %v2910
    %v2918 = vmul.f32 %v2916, %v2580
    %2920 = vrot.lane.b32.xlu0 %v2917, 64
    %v2921 = vpop.permute.xlu0 %2920
    %v2923 = vmul.f32 %v2916, %v2921
    %2925 = vrot.lane.b32.xlu0 %v2923, 32
    %v2926 = vpop.permute.xlu0 %2925
    %v2928 = vadd.f32 %v2918, %v2926
    %v2929 = vtanh.pop %v2928
    %2931 = vrot.lane.b32.xlu0 %v2929, 64
    %v2932 = vpop.permute.xlu0 %2931
    %v2934 = vmul.f32 %v2916, %v2932
    %v2937 = vunpack.c.l.s4 1966171168
    %v2938 = vunpack.c.0.s8 %v2937
    %v2939 = vlaneseq
    %v2940 = vshrl.u32 %v2939, 7
    %v2941 = vsub.s32 %v2938, %v2940
    %v2942 = vrot.slane %v2934, %v2941
    %v2943 = vcombine.high %v2942, %v2942
    %v2945 = vunpack.c.l.s4 1966171168
    %v2946 = vunpack.c.0.s8 %v2945
    %v2947 = vlaneseq
    %v2948 = vshrl.u32 %v2947, 7
    %v2949 = vsub.s32 %v2946, %v2948
    %v2950 = vrot.slane %v2942, %v2949
    %v2952 = vunpack.c.l.s4 1966171168
    %v2953 = vunpack.c.0.s8 %v2952
    %v2954 = vlaneseq
    %v2955 = vshrl.u32 %v2954, 7
    %v2956 = vsub.s32 %v2953, %v2955
    %v2957 = vrot.slane %v2943, %v2956
    %v2958 = vlaneseq
    %v2959 = vshrl.u32 %v2958, 7
    %v2960 = vsub.s32 0, %v2959
    %v2961 = vrot.slane %v2950, %v2960
    %v2962 = vlaneseq
    %v2963 = vshrl.u32 %v2962, 7
    %v2964 = vsub.s32 0, %v2963
    %v2965 = vrot.slane %v2957, %v2964
    %2966 = vrot.lane.b32.xlu0 %v2961, 32
    %v2967 = vpop.permute.xlu0 %2966
    %2968 = vrot.lane.b32.xlu0 %v2965, 32
    %v2969 = vpop.permute.xlu0 %2968
    %2972 = vst.msk [vmem:[#allocation2 + $0x7] sm:$0x1] %vm537, %v2967
    %2973 = vst.msk [vmem:[#allocation2 + $0xf] sm:$0x1] %vm537, %v2969
    %v2974 = vld [vmem:[#allocation2] sm:$0xff]
    %v2975 = vld [vmem:[#allocation2 + $0x8] sm:$0xff]
    %v2976 = vld [vmem:[%s7] sm:$0xff]
    %v2977 = vld [vmem:[%s7 + $0x8] sm:$0xff]
    %v2978 = vld [vmem:[%s7 + $0x10] sm:$0xff]
    %v2979 = vld [vmem:[%s7 + $0x18] sm:$0xff]
    %v2980 = vld [vmem:[#allocation9] sm:$0x1]
    %v2982 = vlaneseq
    %v2983 = vshrl.u32 %v2982, 7
    %v2984 = vsub.s32 0, %v2983
    %v2985 = vrot.slane %v2980, %v2984
    %v2988 = vsel %vm192, %v2974, 0
    %v2991 = vsel %vm192, %v2975, 0
    %2993 = vmatprep.subr.mxu0 0.0
    %2994 = vmatpush1.msra.mxu0 %v2976
    %2995 = vmatprep.subr.mxu0 0.0
    %2996 = vmatpush1.msra.mxu0 %v2977
    %2997 = vmatprep.subr.mxu0 0.0
    %2998 = vmatpush1.msra.mxu0 %v2978
    %2999 = vmatprep.subr.mxu0 0.0
    %3000 = vmatpush1.msra.mxu0 %v2979
    %3001 = vmatprep.subr.mxu0 0.0
    %3002 = vmatpush1.msra.mxu0 0.0
    %3003 = vmatprep.subr.mxu0 0.0
    %3004 = vmatpush1.msra.mxu0 0.0
    %3005 = vmatprep.subr.mxu0 0.0
    %3006 = vmatpush1.msra.mxu0 0.0
    %3007 = vmatprep.subr.mxu0 0.0
    %3008 = vmatpush1.msra.mxu0 0.0
    %3009 = vmatprep.subr.mxu0 0.0
    %3010 = vmatpush1.msra.mxu0 0.0
    %3011 = vmatprep.subr.mxu0 0.0
    %3012 = vmatpush1.msra.mxu0 0.0
    %3013 = vmatprep.subr.mxu0 0.0
    %3014 = vmatpush1.msra.mxu0 0.0
    %3015 = vmatprep.subr.mxu0 0.0
    %3016 = vmatpush1.msra.mxu0 0.0
    %3017 = vmatprep.subr.mxu0 0.0
    %3018 = vmatpush1.msra.mxu0 0.0
    %3019 = vmatprep.subr.mxu0 0.0
    %3020 = vmatpush1.msra.mxu0 0.0
    %3021 = vmatprep.subr.mxu0 0.0
    %3022 = vmatpush1.msra.mxu0 0.0
    %3023 = vmatprep.subr.mxu0 0.0
    %3024 = vmatpush1.msra.mxu0 0.0
    %3025 = vmatprep.subr.mxu0 0.0
    %3026 = vmatpush1.msra.mxu0 0.0
    %3027 = vmatprep.subr.mxu0 0.0
    %3028 = vmatpush1.msra.mxu0 0.0
    %3029 = vmatprep.subr.mxu0 0.0
    %3030 = vmatpush1.msra.mxu0 0.0
    %3031 = vmatprep.subr.mxu0 0.0
    %3032 = vmatpush1.msra.mxu0 0.0
    %3033 = vmatprep.subr.mxu0 0.0
    %3034 = vmatpush1.msra.mxu0 0.0
    %3035 = vmatprep.subr.mxu0 0.0
    %3036 = vmatpush1.msra.mxu0 0.0
    %3037 = vmatprep.subr.mxu0 0.0
    %3038 = vmatpush1.msra.mxu0 0.0
    %3039 = vmatprep.subr.mxu0 0.0
    %3040 = vmatpush1.msra.mxu0 0.0
    %3041 = vmatprep.subr.mxu0 0.0
    %3042 = vmatpush1.msra.mxu0 0.0
    %3043 = vmatprep.subr.mxu0 0.0
    %3044 = vmatpush1.msra.mxu0 0.0
    %3045 = vmatprep.subr.mxu0 0.0
    %3046 = vmatpush1.msra.mxu0 0.0
    %3047 = vmatprep.subr.mxu0 0.0
    %3048 = vmatpush1.msra.mxu0 0.0
    %3049 = vmatprep.subr.mxu0 0.0
    %3050 = vmatpush1.msra.mxu0 0.0
    %3051 = vmatprep.subr.mxu0 0.0
    %3052 = vmatpush1.msra.mxu0 0.0
    %3053 = vmatprep.subr.mxu0 0.0
    %3054 = vmatpush1.msra.mxu0 0.0
    %3055 = vmatprep.subr.mxu0 0.0
    %3056 = vmatpush1.msra.mxu0 0.0
    %3057 = vmatprep.mubr.f32.mxu0 0.0
    %3058 = vmatmul.mubr.f32.gmra.mrb[0].mxu0 %v2988
    %v3059 = vpop.f32.mrb[0].mxu0
    %v3060 = vadd.f32 %v2985, %v3059
    %v3061 = vpop.f32.mrb[0].mxu0
    %3062 = vmatprep.mubr.f32.mxu0 0.0
    %3063 = vmatmul.mubr.f32.gmra.mrb[0].mxu0 %v2991
    %v3064 = vpop.f32.mrb[0].mxu0
    %v3065 = vadd.f32 %v2985, %v3064
    %v3066 = vpop.f32.mrb[0].mxu0
    %3067 = vdwg.mxu0
    %v3068 = vxor.u32 %v3060, 2147483648
    %v3069 = vxor.u32 %v3065, 2147483648
    %v3070 = vmul.f32 %v3068, 1.442695
    %v3071 = vpow.pop %v3070
    %v3072 = vmul.f32 %v3069, 1.442695
    %v3073 = vpow.pop %v3072
    %v3074 = vadd.f32 %v3071, 1.0
    %v3075 = vadd.f32 %v3073, 1.0
    %v3076 = vrcp.pop %v3074
    %v3077 = vmul.f32 1.0, %v3076
    %v3078 = vrcp.pop %v3075
    %v3079 = vmul.f32 1.0, %v3078
    %3080 = vst.msk [vmem:[#allocation11] sm:$0xff] %vm97, %v3077
    %3081 = vst.msk [vmem:[#allocation11 + $0x8] sm:$0xff] %vm97, %v3079
    // Predicated region
    $region54: #{generator_forward.1} parent=1 // pred_check
      _
    $region55: #{generator_forward.1} parent=1 // pred_check_branch
      %3083 = sbr.rel (0) target = $region57
    $region56: #{generator_forward.1} parent=1 // pred_region
      %s3085 = ssub.s32 256, 256
      %3086 = vsyncadd [#allocation5], %s3085
      %s3087 = sshll.u32 [#allocation11], 4
      %s3088 = int_to_ptr.vmem [resolvable:$true] %s3087
      %3093 = dma.vmem_to_hbm [thread:$0]  %s3088, 256, %s9, [#allocation5], 128, 128, 8
    $region57: #{generator_forward.1} parent=1 // pred_fallthru
      _
    // Predicated region
    $region58: #{generator_forward.1} parent=1 // pred_check
      _
    $region59: #{generator_forward.1} parent=1 // pred_check_branch
      %3095 = sbr.rel (0) target = $region61
    $region60: #{generator_forward.1} parent=1 // pred_region
      %3096 = dma.done [#allocation5], 256
    $region61: #{generator_forward.1} parent=1 // pred_fallthru
      _
    %3097 = vsyncpa [#allocation4], 1
    %3098 = vsyncpa [#allocation7], 1
    %3099 = vsyncpa [#allocation10], 1
    %3100 = vsyncpa [#allocation5], 1

</llo_original>
